<compile_context>
chip_gen: v6e
topology: v6e:2x2x1
jax: 0.10.0
libtpu: 0.0.40
codegen_flags: <defaults>
</compile_context>

<pallas_src>
import functools

import jax
import jax.numpy as jnp
from jax.experimental import pallas as pl
from jax.experimental.pallas import tpu as pltpu

DIM_H = 128
HID = DIM_H * 4      # 512
N_Z = 1
KSI = 0.1
MAX_TILE_N = 1024    # cap on the batch (lane) tile


def _round_up(n, m):
    return ((n + m - 1) // m) * m


def _tpu_flavor():
    """Python-side hardware sniff: (bf16-epilogue OK, 2 TensorCores per chip, lane multiple)."""
    try:
        kind = jax.devices()[0].device_kind.lower()
    except Exception:
        kind = ""
    has_bf16_vpu = any(t in kind for t in ("v6", "v7", "7x"))   # v6e / v7x have bf16 VPU
    two_cores = any(t in kind for t in ("v7", "7x"))            # v7x: 2 TCs per chip
    lane_mult = 256 if has_bf16_vpu else 128                    # fill 2x256^2 vs 4x128^2 MXU
    return has_bf16_vpu, two_cores, lane_mult


def _select_tile_n(n, *, two_cores, lane_mult):
    """Batch tile: big enough to amortize per-step overhead, small enough not to pad
    tiny batches, and >= 2 tiles on v7x so both TensorCores get work."""
    n_round = _round_up(max(n, 1), lane_mult)
    tile = min(n_round, MAX_TILE_N)
    if two_cores and n_round > lane_mult:
        half = _round_up(max(n_round // 2, lane_mult), lane_mult)
        tile = min(tile, half)
    return tile


def _ranker_kernel(rank_ref, out_ref):
    # rank is laid out lane-dense as (1, M): ranker = clamp(mean(-log(rank)), 0, 10).
    # TODO(synk): tile over M with a grid + accumulator if M can get large (>~1M).
    neg_log = -jnp.log(rank_ref[...])                                     # (1, M)
    mean = jnp.sum(neg_log, axis=1, keepdims=True) * (1.0 / rank_ref.shape[1])
    out_ref[...] = jnp.clip(mean, 0.0, 10.0)                              # (1, 1)


def _mlp_kernel(x_ref,
                w1_ref, b1_ref,
                w2_ref, b2_ref,
                w3_ref, b3_ref,
                w4_ref, b4_ref,
                w5_ref, b5_ref,
                out_ref, *, bf16_epilogue):
    # Layout: batch on lanes. x tile (1, T); activations (HID, T);
    # weights in PyTorch (out, in) orientation so each 512x512 layer is h' = W @ h.
    x = x_ref[...]                                                        # (1, T) f32

    # Layer 1: Linear(1 -> 512) as a rank-1 broadcast multiply (K = 1, keep off the MXU).
    h = jnp.maximum(w1_ref[...] * x + b1_ref[...], 0.0)                   # (HID, T) f32

    if bf16_epilogue:
        # v6e/v7x: bf16 bias-add / ReLU epilogue (half the VALU vreg ops); MXU keeps
        # f32 accumulation via preferred_element_type. Single cast after layer 1.
        h = h.astype(jnp.bfloat16)
        for w_ref, b_ref in ((w2_ref, b2_ref), (w3_ref, b3_ref), (w4_ref, b4_ref)):
            acc = jnp.dot(w_ref[...], h, preferred_element_type=jnp.float32)
            h = jnp.maximum(acc.astype(jnp.bfloat16) + b_ref[...], 0)     # (HID, T) bf16
        # Layer 5 on the MXU: (1, HID) @ (HID, T) -> (1, T), f32 accumulate.
        logits = jnp.dot(w5_ref[...], h,
                         preferred_element_type=jnp.float32) + b5_ref[...]
    else:
        # v5e: f32 epilogue (no bf16 VPU/EUP); cast to bf16 only to feed the MXU.
        for w_ref, b_ref in ((w2_ref, b2_ref), (w3_ref, b3_ref), (w4_ref, b4_ref)):
            acc = jnp.dot(w_ref[...], h.astype(jnp.bfloat16),
                          preferred_element_type=jnp.float32)
            h = jnp.maximum(acc + b_ref[...], 0.0)                        # (HID, T) f32
        # Layer 5: Linear(512 -> 1) as an f32 reduction over the feature (sublane) axis.
        logits = jnp.sum(h * w5_ref[...], axis=0, keepdims=True) + b5_ref[...]

    # Lane-dense (1, T) store; ksi * ranker is added outside the kernel.
    out_ref[...] = jax.nn.sigmoid(logits)


def prepare_params(torch_params, *, bf16_epilogue):
    """PyTorch nn.Linear layout (weight (out,in), bias (out,)) -> kernel-ready arrays."""
    w1, b1, w2, b2, w3, b3, w4, b4, w5, b5 = torch_params
    bias_dt = jnp.bfloat16 if bf16_epilogue else jnp.float32
    if bf16_epilogue:
        w5k = w5.reshape(1, HID).astype(jnp.bfloat16)     # (1, HID) bf16 MXU row
    else:
        w5k = w5.reshape(HID, 1).astype(jnp.float32)      # (HID, 1) f32 reduction column
    return (
        w1.astype(jnp.float32),                           # (HID, 1)
        b1.reshape(HID, 1).astype(jnp.float32),           # (HID, 1)
        w2.astype(jnp.bfloat16),                          # (HID, HID)  MXU operand
        b2.reshape(HID, 1).astype(bias_dt),
        w3.astype(jnp.bfloat16),
        b3.reshape(HID, 1).astype(bias_dt),
        w4.astype(jnp.bfloat16),
        b4.reshape(HID, 1).astype(bias_dt),
        w5k,
        b5.reshape(1, 1).astype(jnp.float32),             # (1, 1)
    )


@functools.partial(jax.jit, static_argnames=("tile_n", "bf16_epilogue"))
def _discriminator_pallas(rank, x, kernel_params, *, tile_n, bf16_epilogue):
    (w1, b1, w2, b2, w3, b3, w4, b4, w5, b5) = kernel_params
    n = x.shape[0]

    # Ranker scalar: lane-dense (1, M) input, tiny independent kernel. Its result
    # is NOT an input to the MLP kernel, so the two calls have no serial dependency.
    ranker = pl.pallas_call(
        _ranker_kernel,
        out_shape=jax.ShapeDtypeStruct((1, 1), jnp.float32),
    )(rank.reshape(1, -1).astype(jnp.float32))

    # Batch mapped onto the lane axis, padded to a whole number of tiles.
    num_tiles = pl.cdiv(n, tile_n)
    n_pad = num_tiles * tile_n
    x_row = jnp.pad(x.reshape(1, n).astype(jnp.float32), ((0, 0), (0, n_pad - n)))

    const = lambda i: (0, 0)
    in_specs = [
        pl.BlockSpec((1, tile_n), lambda i: (0, i)),      # x tile (pipelined)
        pl.BlockSpec((HID, 1), const),                    # w1 (VMEM-resident)
        pl.BlockSpec((HID, 1), const),                    # b1
        pl.BlockSpec((HID, HID), const),                  # w2 (bf16, resident)
        pl.BlockSpec((HID, 1), const),                    # b2
        pl.BlockSpec((HID, HID), const),                  # w3
        pl.BlockSpec((HID, 1), const),                    # b3
        pl.BlockSpec((HID, HID), const),                  # w4
        pl.BlockSpec((HID, 1), const),                    # b4
        pl.BlockSpec(w5.shape, const),                    # w5 ((1,HID) or (HID,1))
        pl.BlockSpec((1, 1), const),                      # b5
    ]

    flops = n_pad * (2 * HID + 3 * 2 * HID * HID + 2 * HID)
    bytes_accessed = (3 * HID * HID * 2          # bf16 512x512 weights
                      + 6 * HID * 4 + 4          # small params
                      + n_pad * 4 * 2)           # x in + out

    out_row = pl.pallas_call(
        functools.partial(_mlp_kernel, bf16_epilogue=bf16_epilogue),
        out_shape=jax.ShapeDtypeStruct((1, n_pad), jnp.float32),
        grid=(num_tiles,),
        in_specs=in_specs,
        out_specs=pl.BlockSpec((1, tile_n), lambda i: (0, i)),
        compiler_params=pltpu.CompilerParams(
            dimension_semantics=("parallel",),
            vmem_limit_bytes=32 * 1024 * 1024,
        ),
        cost_estimate=pl.CostEstimate(
            flops=flops,
            transcendentals=n_pad,
            bytes_accessed=bytes_accessed,
        ),
    )(x_row, w1, b1, w2, b2, w3, b3, w4, b4, w5, b5)

    # Drop batch padding, add ksi * ranker outside the kernel, restore (N, 1) shape.
    return (out_row[0, :n] + KSI * ranker[0, 0]).reshape(n, 1)


def discriminator_forward(rank, x, kernel_params, *, bf16_epilogue, tile_n=None):
    if tile_n is None:
        _, two_cores, lane_mult = _tpu_flavor()
        tile_n = _select_tile_n(x.shape[0], two_cores=two_cores, lane_mult=lane_mult)
    return _discriminator_pallas(rank, x, kernel_params,
                                 tile_n=tile_n, bf16_epilogue=bf16_epilogue)


def _reference_forward(rank, x, torch_params):
    w1, b1, w2, b2, w3, b3, w4, b4, w5, b5 = torch_params
    h = jnp.maximum(x @ w1.T + b1, 0.0)
    h = jnp.maximum(h @ w2.T + b2, 0.0)
    h = jnp.maximum(h @ w3.T + b3, 0.0)
    h = jnp.maximum(h @ w4.T + b4, 0.0)
    y = jax.nn.sigmoid(h @ w5.T + b5)
    ranker = jnp.clip(jnp.mean(-jnp.log(rank)), 0.0, 10.0)
    return y + KSI * ranker


if __name__ == "__main__":
    key = jax.random.PRNGKey(0)
    keys = jax.random.split(key, 12)

    def u(k, shape, scale=0.05):
        return jax.random.uniform(k, shape, jnp.float32, -scale, scale)

    # Deterministic synthetic parameters in PyTorch nn.Linear layout (out, in) / (out,).
    torch_params = (
        u(keys[0], (HID, N_Z)),   # Linear(1, 512).weight
        u(keys[1], (HID,)),       # Linear(1, 512).bias
        u(keys[2], (HID, HID)),   # Linear(512, 512).weight
        u(keys[3], (HID,)),
        u(keys[4], (HID, HID)),
        u(keys[5], (HID,)),
        u(keys[6], (HID, HID)),
        u(keys[7], (HID,)),
        u(keys[8], (1, HID)),     # Linear(512, 1).weight
        u(keys[9], (1,)),         # Linear(512, 1).bias
    )

    bf16_epi, _, _ = _tpu_flavor()           # bf16 epilogue on v6e/v7x, f32 on v5e
    kernel_params = prepare_params(torch_params, bf16_epilogue=bf16_epi)

    N = 8   # batch for x
    M = 8   # number of rank scores
    x = jax.random.normal(keys[10], (N, N_Z), dtype=jnp.float32)
    # rank must be positive (it goes through log), like probabilities in the original.
    rank = jax.random.uniform(keys[11], (M, 1), jnp.float32, 0.05, 1.0)

    out = discriminator_forward(rank, x, kernel_params, bf16_epilogue=bf16_epi)
    jax.block_until_ready(out)

    ref = _reference_forward(rank, x, torch_params)
    assert out.shape == (N, 1)
    err = jnp.max(jnp.abs(out - ref))
    assert jnp.allclose(out, ref, atol=2e-2, rtol=2e-2), f"max abs err {err}"
    print("KERNEL_OK")
</pallas_src>

<mosaic_0001>
module attributes {stable_mosaic.version = 11 : i64} {
  func.func @_ranker_kernel(%arg0: memref<1x8xf32, #tpu.memory_space<vmem>>, %arg1: memref<1x1xf32, #tpu.memory_space<vmem>>) attributes {dimension_semantics = [], scalar_prefetch = 0 : i64, scratch_operands = 0 : i64, tpu.core_type = #tpu.core_type<tc>} {
    %c0 = arith.constant 0 : index
    %c0_0 = arith.constant 0 : index
    %0 = vector.load %arg0[%c0, %c0_0] : memref<1x8xf32, #tpu.memory_space<vmem>>, vector<1x8xf32>
    %1 = math.log %0 : vector<1x8xf32>
    %cst = arith.constant 0.000000e+00 : f32
    %2 = vector.broadcast %cst : f32 to vector<1x8xf32>
    %3 = arith.subf %2, %1 : vector<1x8xf32>
    %cst_1 = arith.constant dense<0.000000e+00> : vector<1xf32>
    %4 = vector.multi_reduction <add>, %3, %cst_1 [1] : vector<1x8xf32> to vector<1xf32>
    %5 = vector.shape_cast %4 : vector<1xf32> to vector<1x1xf32>
    %cst_2 = arith.constant 1.250000e-01 : f32
    %6 = vector.broadcast %cst_2 : f32 to vector<1x1xf32>
    %7 = arith.mulf %5, %6 : vector<1x1xf32>
    %cst_3 = arith.constant 0.000000e+00 : f32
    %cst_4 = arith.constant 1.000000e+01 : f32
    %8 = vector.broadcast %cst_3 : f32 to vector<1x1xf32>
    %9 = arith.maximumf %8, %7 : vector<1x1xf32>
    %10 = vector.broadcast %cst_4 : f32 to vector<1x1xf32>
    %11 = arith.minimumf %10, %9 : vector<1x1xf32>
    %c0_5 = arith.constant 0 : index
    %c0_6 = arith.constant 0 : index
    %12 = vector.load %arg1[%c0_5, %c0_6] : memref<1x1xf32, #tpu.memory_space<vmem>>, vector<1x1xf32>
    tpu.vector_store %arg1[%c0_5, %c0_6], %11 {strides = array<i32>} : memref<1x1xf32, #tpu.memory_space<vmem>>, vector<1x1xf32>,
    return
  }
}

module attributes {stable_mosaic.version = 11 : i64} {
  func.func @_mlp_kernel(%arg0: i32, %arg1: memref<1x128xf32, #tpu.memory_space<vmem>>, %arg2: memref<512x1xf32, #tpu.memory_space<vmem>>, %arg3: memref<512x1xf32, #tpu.memory_space<vmem>>, %arg4: memref<512x512xbf16, #tpu.memory_space<vmem>>, %arg5: memref<512x1xf32, #tpu.memory_space<vmem>>, %arg6: memref<512x512xbf16, #tpu.memory_space<vmem>>, %arg7: memref<512x1xf32, #tpu.memory_space<vmem>>, %arg8: memref<512x512xbf16, #tpu.memory_space<vmem>>, %arg9: memref<512x1xf32, #tpu.memory_space<vmem>>, %arg10: memref<512x1xf32, #tpu.memory_space<vmem>>, %arg11: memref<1x1xf32, #tpu.memory_space<vmem>>, %arg12: memref<1x128xf32, #tpu.memory_space<vmem>>) attributes {dimension_semantics = [#tpu.dimension_semantics<parallel>], iteration_bounds = array<i64: 1>, scalar_prefetch = 0 : i64, scratch_operands = 0 : i64, tpu.core_type = #tpu.core_type<tc>, window_params = [{transform_indices = @transform_0, window_bounds = array<i64: 1, 128>}, {pipeline_mode = #tpu.pipeline_mode<synchronous>, transform_indices = @transform_1, window_bounds = array<i64: 512, 1>}, {pipeline_mode = #tpu.pipeline_mode<synchronous>, transform_indices = @transform_2, window_bounds = array<i64: 512, 1>}, {pipeline_mode = #tpu.pipeline_mode<synchronous>, transform_indices = @transform_3, window_bounds = array<i64: 512, 512>}, {pipeline_mode = #tpu.pipeline_mode<synchronous>, transform_indices = @transform_4, window_bounds = array<i64: 512, 1>}, {pipeline_mode = #tpu.pipeline_mode<synchronous>, transform_indices = @transform_5, window_bounds = array<i64: 512, 512>}, {pipeline_mode = #tpu.pipeline_mode<synchronous>, transform_indices = @transform_6, window_bounds = array<i64: 512, 1>}, {pipeline_mode = #tpu.pipeline_mode<synchronous>, transform_indices = @transform_7, window_bounds = array<i64: 512, 512>}, {pipeline_mode = #tpu.pipeline_mode<synchronous>, transform_indices = @transform_8, window_bounds = array<i64: 512, 1>}, {pipeline_mode = #tpu.pipeline_mode<synchronous>, transform_indices = @transform_9, window_bounds = array<i64: 512, 1>}, {pipeline_mode = #tpu.pipeline_mode<synchronous>, transform_indices = @transform_10, window_bounds = array<i64: 1, 1>}, {transform_indices = @transform_11, window_bounds = array<i64: 1, 128>}]} {
    %c0 = arith.constant 0 : index
    %c0_0 = arith.constant 0 : index
    %0 = vector.load %arg1[%c0, %c0_0] : memref<1x128xf32, #tpu.memory_space<vmem>>, vector<1x128xf32>
    %c0_1 = arith.constant 0 : index
    %c0_2 = arith.constant 0 : index
    %1 = vector.load %arg2[%c0_1, %c0_2] : memref<512x1xf32, #tpu.memory_space<vmem>>, vector<512x1xf32>
    %2 = vector.broadcast %1 : vector<512x1xf32> to vector<512x128xf32>
    %3 = vector.broadcast %0 : vector<1x128xf32> to vector<512x128xf32>
    %4 = arith.mulf %2, %3 : vector<512x128xf32>
    %c0_3 = arith.constant 0 : index
    %c0_4 = arith.constant 0 : index
    %5 = vector.load %arg3[%c0_3, %c0_4] : memref<512x1xf32, #tpu.memory_space<vmem>>, vector<512x1xf32>
    %6 = vector.broadcast %5 : vector<512x1xf32> to vector<512x128xf32>
    %7 = arith.addf %4, %6 : vector<512x128xf32>
    %cst = arith.constant 0.000000e+00 : f32
    %8 = vector.broadcast %cst : f32 to vector<512x128xf32>
    %9 = arith.maximumf %7, %8 : vector<512x128xf32>
    %c0_5 = arith.constant 0 : index
    %c0_6 = arith.constant 0 : index
    %10 = vector.load %arg4[%c0_5, %c0_6] : memref<512x512xbf16, #tpu.memory_space<vmem>>, vector<512x512xbf16>
    %11 = arith.truncf %9 : vector<512x128xf32> to vector<512x128xbf16>
    %cst_7 = arith.constant dense<0.000000e+00> : vector<512x128xf32>
    %12 = tpu.matmul %10, %11, %cst_7 {dimension_numbers = #tpu.dot_dimension_numbers<[1], [0], [0], [1], [0, 0, 1, 1], [], []>} : vector<512x512xbf16>, vector<512x128xbf16>, vector<512x128xf32> -> vector<512x128xf32>
    %c0_8 = arith.constant 0 : index
    %c0_9 = arith.constant 0 : index
    %13 = vector.load %arg5[%c0_8, %c0_9] : memref<512x1xf32, #tpu.memory_space<vmem>>, vector<512x1xf32>
    %14 = vector.broadcast %13 : vector<512x1xf32> to vector<512x128xf32>
    %15 = arith.addf %12, %14 : vector<512x128xf32>
    %cst_10 = arith.constant 0.000000e+00 : f32
    %16 = vector.broadcast %cst_10 : f32 to vector<512x128xf32>
    %17 = arith.maximumf %15, %16 : vector<512x128xf32>
    %c0_11 = arith.constant 0 : index
    %c0_12 = arith.constant 0 : index
    %18 = vector.load %arg6[%c0_11, %c0_12] : memref<512x512xbf16, #tpu.memory_space<vmem>>, vector<512x512xbf16>
    %19 = arith.truncf %17 : vector<512x128xf32> to vector<512x128xbf16>
    %cst_13 = arith.constant dense<0.000000e+00> : vector<512x128xf32>
    %20 = tpu.matmul %18, %19, %cst_13 {dimension_numbers = #tpu.dot_dimension_numbers<[1], [0], [0], [1], [0, 0, 1, 1], [], []>} : vector<512x512xbf16>, vector<512x128xbf16>, vector<512x128xf32> -> vector<512x128xf32>
    %c0_14 = arith.constant 0 : index
    %c0_15 = arith.constant 0 : index
    %21 = vector.load %arg7[%c0_14, %c0_15] : memref<512x1xf32, #tpu.memory_space<vmem>>, vector<512x1xf32>
    %22 = vector.broadcast %21 : vector<512x1xf32> to vector<512x128xf32>
    %23 = arith.addf %20, %22 : vector<512x128xf32>
    %cst_16 = arith.constant 0.000000e+00 : f32
    %24 = vector.broadcast %cst_16 : f32 to vector<512x128xf32>
    %25 = arith.maximumf %23, %24 : vector<512x128xf32>
    %c0_17 = arith.constant 0 : index
    %c0_18 = arith.constant 0 : index
    %26 = vector.load %arg8[%c0_17, %c0_18] : memref<512x512xbf16, #tpu.memory_space<vmem>>, vector<512x512xbf16>
    %27 = arith.truncf %25 : vector<512x128xf32> to vector<512x128xbf16>
    %cst_19 = arith.constant dense<0.000000e+00> : vector<512x128xf32>
    %28 = tpu.matmul %26, %27, %cst_19 {dimension_numbers = #tpu.dot_dimension_numbers<[1], [0], [0], [1], [0, 0, 1, 1], [], []>} : vector<512x512xbf16>, vector<512x128xbf16>, vector<512x128xf32> -> vector<512x128xf32>
    %c0_20 = arith.constant 0 : index
    %c0_21 = arith.constant 0 : index
    %29 = vector.load %arg9[%c0_20, %c0_21] : memref<512x1xf32, #tpu.memory_space<vmem>>, vector<512x1xf32>
    %30 = vector.broadcast %29 : vector<512x1xf32> to vector<512x128xf32>
    %31 = arith.addf %28, %30 : vector<512x128xf32>
    %cst_22 = arith.constant 0.000000e+00 : f32
    %32 = vector.broadcast %cst_22 : f32 to vector<512x128xf32>
    %33 = arith.maximumf %31, %32 : vector<512x128xf32>
    %c0_23 = arith.constant 0 : index
    %c0_24 = arith.constant 0 : index
    %34 = vector.load %arg10[%c0_23, %c0_24] : memref<512x1xf32, #tpu.memory_space<vmem>>, vector<512x1xf32>
    %35 = vector.broadcast %34 : vector<512x1xf32> to vector<512x128xf32>
    %36 = arith.mulf %33, %35 : vector<512x128xf32>
    %cst_25 = arith.constant dense<0.000000e+00> : vector<128xf32>
    %37 = vector.multi_reduction <add>, %36, %cst_25 [0] : vector<512x128xf32> to vector<128xf32>
    %38 = vector.shape_cast %37 : vector<128xf32> to vector<1x128xf32>
    %c0_26 = arith.constant 0 : index
    %c0_27 = arith.constant 0 : index
    %39 = vector.load %arg11[%c0_26, %c0_27] : memref<1x1xf32, #tpu.memory_space<vmem>>, vector<1x1xf32>
    %40 = vector.broadcast %39 : vector<1x1xf32> to vector<1x128xf32>
    %41 = arith.addf %38, %40 : vector<1x128xf32>
    %42 = arith.negf %41 : vector<1x128xf32>
    %43 = math.exp %42 : vector<1x128xf32>
    %cst_28 = arith.constant 1.000000e+00 : f32
    %44 = vector.broadcast %cst_28 : f32 to vector<1x128xf32>
    %45 = arith.addf %44, %43 : vector<1x128xf32>
    %46 = arith.divf %44, %45 : vector<1x128xf32>
    %c0_29 = arith.constant 0 : index
    %c0_30 = arith.constant 0 : index
    %47 = vector.load %arg12[%c0_29, %c0_30] : memref<1x128xf32, #tpu.memory_space<vmem>>, vector<1x128xf32>
    tpu.vector_store %arg12[%c0_29, %c0_30], %46 {strides = array<i32>} : memref<1x128xf32, #tpu.memory_space<vmem>>, vector<1x128xf32>,
    return
  }
  func.func @transform_0(%arg0: i32) -> (i32, i32) {
    %c0_i32 = arith.constant 0 : i32
    %c0_i32_0 = arith.constant 0 : i32
    return %c0_i32, %arg0 : i32, i32
  }
  func.func @transform_1(%arg0: i32) -> (i32, i32) {
    %c0_i32 = arith.constant 0 : i32
    %c0_i32_0 = arith.constant 0 : i32
    %c0_i32_1 = arith.constant 0 : i32
    return %c0_i32, %c0_i32_0 : i32, i32
  }
  func.func @transform_2(%arg0: i32) -> (i32, i32) {
    %c0_i32 = arith.constant 0 : i32
    %c0_i32_0 = arith.constant 0 : i32
    %c0_i32_1 = arith.constant 0 : i32
    return %c0_i32, %c0_i32_0 : i32, i32
  }
  func.func @transform_3(%arg0: i32) -> (i32, i32) {
    %c0_i32 = arith.constant 0 : i32
    %c0_i32_0 = arith.constant 0 : i32
    %c0_i32_1 = arith.constant 0 : i32
    return %c0_i32, %c0_i32_0 : i32, i32
  }
  func.func @transform_4(%arg0: i32) -> (i32, i32) {
    %c0_i32 = arith.constant 0 : i32
    %c0_i32_0 = arith.constant 0 : i32
    %c0_i32_1 = arith.constant 0 : i32
    return %c0_i32, %c0_i32_0 : i32, i32
  }
  func.func @transform_5(%arg0: i32) -> (i32, i32) {
    %c0_i32 = arith.constant 0 : i32
    %c0_i32_0 = arith.constant 0 : i32
    %c0_i32_1 = arith.constant 0 : i32
    return %c0_i32, %c0_i32_0 : i32, i32
  }
  func.func @transform_6(%arg0: i32) -> (i32, i32) {
    %c0_i32 = arith.constant 0 : i32
    %c0_i32_0 = arith.constant 0 : i32
    %c0_i32_1 = arith.constant 0 : i32
    return %c0_i32, %c0_i32_0 : i32, i32
  }
  func.func @transform_7(%arg0: i32) -> (i32, i32) {
    %c0_i32 = arith.constant 0 : i32
    %c0_i32_0 = arith.constant 0 : i32
    %c0_i32_1 = arith.constant 0 : i32
    return %c0_i32, %c0_i32_0 : i32, i32
  }
  func.func @transform_8(%arg0: i32) -> (i32, i32) {
    %c0_i32 = arith.constant 0 : i32
    %c0_i32_0 = arith.constant 0 : i32
    %c0_i32_1 = arith.constant 0 : i32
    return %c0_i32, %c0_i32_0 : i32, i32
  }
  func.func @transform_9(%arg0: i32) -> (i32, i32) {
    %c0_i32 = arith.constant 0 : i32
    %c0_i32_0 = arith.constant 0 : i32
    %c0_i32_1 = arith.constant 0 : i32
    return %c0_i32, %c0_i32_0 : i32, i32
  }
  func.func @transform_10(%arg0: i32) -> (i32, i32) {
    %c0_i32 = arith.constant 0 : i32
    %c0_i32_0 = arith.constant 0 : i32
    %c0_i32_1 = arith.constant 0 : i32
    return %c0_i32, %c0_i32_0 : i32, i32
  }
  func.func @transform_11(%arg0: i32) -> (i32, i32) {
    %c0_i32 = arith.constant 0 : i32
    %c0_i32_0 = arith.constant 0 : i32
    return %c0_i32, %arg0 : i32, i32
  }
}

</mosaic_0001>

<llo_original>
// kernel: _discriminator_pallas.2
$region0: #{_discriminator_pallas.2}
  #allocation0 [shape = 'u32[]', space=smem, size = 0x4, offset = 0x4, fixed_abs, tag = 'smem constant byte address 0x4 - core index']
  #allocation1 [shape = 'u32[144,128]{1,0:T(1,128)}', space=vmem, size = 0x12000, scoped, tag = 'internal scratch']
  %s0 = inlined_call_operand.vmem [shape: f32[1,8], index: 0, kind: input, shape index: {}]
  %s1 = inlined_call_operand.hbm [shape: f32[1,1], index: 1, kind: output, shape index: {}]
  %s2 = sld [smem:[#allocation0]]
  $region14: #{_discriminator_pallas.2} parent=0
    _
  %s4 = ssub.s32 1, %s2
  %s5 = scalar_select 0, %s4, %s2
  $region1: #{_discriminator_pallas.2} parent=0
    #allocation2 [shape = 'u8[512]{0}', space=vmem, size = 0x400, scoped, tag = 'output window, operand 0, single buffered']
    #allocation3 [shape = 's32[1]{0}', space=sflag, size = 0x4, scoped, tag = 'scoped memory for _discriminator_pallas.2']
    %6 = vsyncpa [#allocation3], 0
    // Predicated region
    $region2: #{_discriminator_pallas.2} parent=1 // pred_check
      _
    $region3: #{_discriminator_pallas.2} parent=1 // pred_check_branch
      %8 = sbr.rel (0) target = $region5
    $region4: #{_discriminator_pallas.2} parent=1 // pred_region
      _
    $region5: #{_discriminator_pallas.2} parent=1 // pred_fallthru
      _
    %v9 = vld [vmem:[%s0] sm:$0x1]
    %v10 = vlog2.pop %v9
    %v11 = vmul.f32 %v10, 0.6931472
    %v12 = vsub.f32 0.0, %v11
    %vm13 = vcmask 57344
    %v14 = vsel %vm13, %v12, 0.0
    %15 = vadd.xlane.f32.xlu0 %v14
    %v16 = vpop.xlane.xlu0 %15
    %v17 = vmul.f32 %v16, 0.125
    %v18 = vmax.f32 %v17, 0.0
    %v19 = vmin.f32 %v18, 10.0
    %vm20 = vcmask 0
    %21 = vst.msk [vmem:[#allocation2] sm:$0x1] %vm20, %v19
    // Predicated region
    $region6: #{_discriminator_pallas.2} parent=1 // pred_check
      _
    $region7: #{_discriminator_pallas.2} parent=1 // pred_check_branch
      %23 = sbr.rel (0) target = $region9
    $region8: #{_discriminator_pallas.2} parent=1 // pred_region
      %s25 = ssub.s32 16, 16
      %26 = vsyncadd [#allocation3], %s25
      %s28 = sshll.u32 [#allocation2], 4
      %s29 = int_to_ptr.vmem [resolvable:$true] %s28
      %31 = dma.vmem_to_hbm [thread:$0]  %s29, 16, %s1, [#allocation3]
    $region9: #{_discriminator_pallas.2} parent=1 // pred_fallthru
      _
    // Predicated region
    $region10: #{_discriminator_pallas.2} parent=1 // pred_check
      _
    $region11: #{_discriminator_pallas.2} parent=1 // pred_check_branch
      %33 = sbr.rel (0) target = $region13
    $region12: #{_discriminator_pallas.2} parent=1 // pred_region
      %34 = dma.done [#allocation3], 16
    $region13: #{_discriminator_pallas.2} parent=1 // pred_fallthru
      _
    %35 = vsyncpa [#allocation3], 1

// kernel: _discriminator_pallas.3
$region0: #{_discriminator_pallas.3}
  #allocation0 [shape = 'u32[]', space=smem, size = 0x4, offset = 0x4, fixed_abs, tag = 'smem constant byte address 0x4 - core index']
  #allocation1 [shape = 'u32[144,128]{1,0:T(1,128)}', space=vmem, size = 0x12000, scoped, tag = 'internal scratch']
  #allocation2 [shape = 'f32[1,1]{1,0:T(1,128)S(1)}', space=vmem, size = 0x200, scoped, tag = 'scoped memory for _discriminator_pallas.3']
  %s0 = inlined_call_operand.vmem [shape: f32[1,128], index: 0, kind: input, shape index: {}]
  %s1 = inlined_call_operand.vmem [shape: f32[512,1], index: 1, kind: input, shape index: {}]
  %s2 = inlined_call_operand.vmem [shape: f32[512,1], index: 2, kind: input, shape index: {}]
  %s3 = inlined_call_operand.vmem [shape: bf16[512,512], index: 3, kind: input, shape index: {}]
  %s4 = inlined_call_operand.vmem [shape: f32[512,1], index: 4, kind: input, shape index: {}]
  %s5 = inlined_call_operand.vmem [shape: bf16[512,512], index: 5, kind: input, shape index: {}]
  %s6 = inlined_call_operand.vmem [shape: f32[512,1], index: 6, kind: input, shape index: {}]
  %s7 = inlined_call_operand.vmem [shape: bf16[512,512], index: 7, kind: input, shape index: {}]
  %s8 = inlined_call_operand.vmem [shape: f32[512,1], index: 8, kind: input, shape index: {}]
  %s9 = inlined_call_operand.vmem [shape: f32[512,1], index: 9, kind: input, shape index: {}]
  %s10 = inlined_call_operand.<no memory space> [shape: f32[1,1], index: 10, kind: input, shape index: {}]
  %s11 = inlined_call_operand.vmem [shape: f32[1,128], index: 11, kind: output, shape index: {}]
  %s12 = sld [smem:[#allocation0]]
  $region54: #{_discriminator_pallas.3} parent=0
    _
  %s14 = ssub.s32 1, %s12
  %s15 = scalar_select 0, %s14, %s12
  %v16 = vstv %s10
  %17 = vst [vmem:[#allocation2] sm:$0x1] %v16
  // Predicated region
  $region2: #{_discriminator_pallas.3} parent=0 // pred_check
    _
  $region3: #{_discriminator_pallas.3} parent=0 // pred_check_branch
    %19 = sbr.rel (0) target = $region5
  $region4: #{_discriminator_pallas.3} parent=0 // pred_region
    _
  $region5: #{_discriminator_pallas.3} parent=0 // pred_fallthru
    _
  // Predicated region
  $region6: #{_discriminator_pallas.3} parent=0 // pred_check
    _
  $region7: #{_discriminator_pallas.3} parent=0 // pred_check_branch
    %21 = sbr.rel (0) target = $region9
  $region8: #{_discriminator_pallas.3} parent=0 // pred_region
    _
  $region9: #{_discriminator_pallas.3} parent=0 // pred_fallthru
    _
  // Predicated region
  $region10: #{_discriminator_pallas.3} parent=0 // pred_check
    _
  $region11: #{_discriminator_pallas.3} parent=0 // pred_check_branch
    %23 = sbr.rel (0) target = $region13
  $region12: #{_discriminator_pallas.3} parent=0 // pred_region
    _
  $region13: #{_discriminator_pallas.3} parent=0 // pred_fallthru
    _
  // Predicated region
  $region14: #{_discriminator_pallas.3} parent=0 // pred_check
    _
  $region15: #{_discriminator_pallas.3} parent=0 // pred_check_branch
    %25 = sbr.rel (0) target = $region17
  $region16: #{_discriminator_pallas.3} parent=0 // pred_region
    _
  $region17: #{_discriminator_pallas.3} parent=0 // pred_fallthru
    _
  // Predicated region
  $region18: #{_discriminator_pallas.3} parent=0 // pred_check
    _
  $region19: #{_discriminator_pallas.3} parent=0 // pred_check_branch
    %27 = sbr.rel (0) target = $region21
  $region20: #{_discriminator_pallas.3} parent=0 // pred_region
    _
  $region21: #{_discriminator_pallas.3} parent=0 // pred_fallthru
    _
  // Predicated region
  $region22: #{_discriminator_pallas.3} parent=0 // pred_check
    _
  $region23: #{_discriminator_pallas.3} parent=0 // pred_check_branch
    %29 = sbr.rel (0) target = $region25
  $region24: #{_discriminator_pallas.3} parent=0 // pred_region
    _
  $region25: #{_discriminator_pallas.3} parent=0 // pred_fallthru
    _
  // Predicated region
  $region26: #{_discriminator_pallas.3} parent=0 // pred_check
    _
  $region27: #{_discriminator_pallas.3} parent=0 // pred_check_branch
    %31 = sbr.rel (0) target = $region29
  $region28: #{_discriminator_pallas.3} parent=0 // pred_region
    _
  $region29: #{_discriminator_pallas.3} parent=0 // pred_fallthru
    _
  // Predicated region
  $region30: #{_discriminator_pallas.3} parent=0 // pred_check
    _
  $region31: #{_discriminator_pallas.3} parent=0 // pred_check_branch
    %33 = sbr.rel (0) target = $region33
  $region32: #{_discriminator_pallas.3} parent=0 // pred_region
    _
  $region33: #{_discriminator_pallas.3} parent=0 // pred_fallthru
    _
  // Predicated region
  $region34: #{_discriminator_pallas.3} parent=0 // pred_check
    _
  $region35: #{_discriminator_pallas.3} parent=0 // pred_check_branch
    %35 = sbr.rel (0) target = $region37
  $region36: #{_discriminator_pallas.3} parent=0 // pred_region
    _
  $region37: #{_discriminator_pallas.3} parent=0 // pred_fallthru
    _
  // Predicated region
  $region38: #{_discriminator_pallas.3} parent=0 // pred_check
    _
  $region39: #{_discriminator_pallas.3} parent=0 // pred_check_branch
    %37 = sbr.rel (0) target = $region41
  $region40: #{_discriminator_pallas.3} parent=0 // pred_region
    _
  $region41: #{_discriminator_pallas.3} parent=0 // pred_fallthru
    _
  // Predicated region
  $region42: #{_discriminator_pallas.3} parent=0 // pred_check
    _
  $region43: #{_discriminator_pallas.3} parent=0 // pred_check_branch
    %39 = sbr.rel (0) target = $region45
  $region44: #{_discriminator_pallas.3} parent=0 // pred_region
    _
  $region45: #{_discriminator_pallas.3} parent=0 // pred_fallthru
    _
  %v41 = vld [vmem:[%s0] sm:$0x1]
  %v42 = vld [vmem:[%s1] sm:$0xff]
  %v43 = vld [vmem:[%s1 + $0x8] sm:$0xff]
  %v44 = vld [vmem:[%s1 + $0x10] sm:$0xff]
  %v45 = vld [vmem:[%s1 + $0x18] sm:$0xff]
  %v46 = vld [vmem:[%s1 + $0x20] sm:$0xff]
  %v47 = vld [vmem:[%s1 + $0x28] sm:$0xff]
  %v48 = vld [vmem:[%s1 + $0x30] sm:$0xff]
  %v49 = vld [vmem:[%s1 + $0x38] sm:$0xff]
  %v50 = vld [vmem:[%s1 + $0x40] sm:$0xff]
  %v51 = vld [vmem:[%s1 + $0x48] sm:$0xff]
  %v52 = vld [vmem:[%s1 + $0x50] sm:$0xff]
  %v53 = vld [vmem:[%s1 + $0x58] sm:$0xff]
  %v54 = vld [vmem:[%s1 + $0x60] sm:$0xff]
  %v55 = vld [vmem:[%s1 + $0x68] sm:$0xff]
  %v56 = vld [vmem:[%s1 + $0x70] sm:$0xff]
  %v57 = vld [vmem:[%s1 + $0x78] sm:$0xff]
  %v58 = vld [vmem:[%s1 + $0x80] sm:$0xff]
  %v59 = vld [vmem:[%s1 + $0x88] sm:$0xff]
  %v60 = vld [vmem:[%s1 + $0x90] sm:$0xff]
  %v61 = vld [vmem:[%s1 + $0x98] sm:$0xff]
  %v62 = vld [vmem:[%s1 + $0xa0] sm:$0xff]
  %v63 = vld [vmem:[%s1 + $0xa8] sm:$0xff]
  %v64 = vld [vmem:[%s1 + $0xb0] sm:$0xff]
  %v65 = vld [vmem:[%s1 + $0xb8] sm:$0xff]
  %v66 = vld [vmem:[%s1 + $0xc0] sm:$0xff]
  %v67 = vld [vmem:[%s1 + $0xc8] sm:$0xff]
  %v68 = vld [vmem:[%s1 + $0xd0] sm:$0xff]
  %v69 = vld [vmem:[%s1 + $0xd8] sm:$0xff]
  %v70 = vld [vmem:[%s1 + $0xe0] sm:$0xff]
  %v71 = vld [vmem:[%s1 + $0xe8] sm:$0xff]
  %v72 = vld [vmem:[%s1 + $0xf0] sm:$0xff]
  %v73 = vld [vmem:[%s1 + $0xf8] sm:$0xff]
  %v74 = vld [vmem:[%s1 + $0x100] sm:$0xff]
  %v75 = vld [vmem:[%s1 + $0x108] sm:$0xff]
  %v76 = vld [vmem:[%s1 + $0x110] sm:$0xff]
  %v77 = vld [vmem:[%s1 + $0x118] sm:$0xff]
  %v78 = vld [vmem:[%s1 + $0x120] sm:$0xff]
  %v79 = vld [vmem:[%s1 + $0x128] sm:$0xff]
  %v80 = vld [vmem:[%s1 + $0x130] sm:$0xff]
  %v81 = vld [vmem:[%s1 + $0x138] sm:$0xff]
  %v82 = vld [vmem:[%s1 + $0x140] sm:$0xff]
  %v83 = vld [vmem:[%s1 + $0x148] sm:$0xff]
  %v84 = vld [vmem:[%s1 + $0x150] sm:$0xff]
  %v85 = vld [vmem:[%s1 + $0x158] sm:$0xff]
  %v86 = vld [vmem:[%s1 + $0x160] sm:$0xff]
  %v87 = vld [vmem:[%s1 + $0x168] sm:$0xff]
  %v88 = vld [vmem:[%s1 + $0x170] sm:$0xff]
  %v89 = vld [vmem:[%s1 + $0x178] sm:$0xff]
  %v90 = vld [vmem:[%s1 + $0x180] sm:$0xff]
  %v91 = vld [vmem:[%s1 + $0x188] sm:$0xff]
  %v92 = vld [vmem:[%s1 + $0x190] sm:$0xff]
  %v93 = vld [vmem:[%s1 + $0x198] sm:$0xff]
  %v94 = vld [vmem:[%s1 + $0x1a0] sm:$0xff]
  %v95 = vld [vmem:[%s1 + $0x1a8] sm:$0xff]
  %v96 = vld [vmem:[%s1 + $0x1b0] sm:$0xff]
  %v97 = vld [vmem:[%s1 + $0x1b8] sm:$0xff]
  %v98 = vld [vmem:[%s1 + $0x1c0] sm:$0xff]
  %v99 = vld [vmem:[%s1 + $0x1c8] sm:$0xff]
  %v100 = vld [vmem:[%s1 + $0x1d0] sm:$0xff]
  %v101 = vld [vmem:[%s1 + $0x1d8] sm:$0xff]
  %v102 = vld [vmem:[%s1 + $0x1e0] sm:$0xff]
  %v103 = vld [vmem:[%s1 + $0x1e8] sm:$0xff]
  %v104 = vld [vmem:[%s1 + $0x1f0] sm:$0xff]
  %v105 = vld [vmem:[%s1 + $0x1f8] sm:$0xff]
  %107 = vset.pattern.permute.xlu0 0
  %108 = vperm.xlu0 %107, %v42
  %v109 = vpop.permute.xlu0 %108
  %112 = vset.pattern.permute.xlu0 0
  %113 = vperm.xlu0 %112, %v43
  %v114 = vpop.permute.xlu0 %113
  %117 = vset.pattern.permute.xlu0 0
  %118 = vperm.xlu0 %117, %v44
  %v119 = vpop.permute.xlu0 %118
  %122 = vset.pattern.permute.xlu0 0
  %123 = vperm.xlu0 %122, %v45
  %v124 = vpop.permute.xlu0 %123
  %127 = vset.pattern.permute.xlu0 0
  %128 = vperm.xlu0 %127, %v46
  %v129 = vpop.permute.xlu0 %128
  %132 = vset.pattern.permute.xlu0 0
  %133 = vperm.xlu0 %132, %v47
  %v134 = vpop.permute.xlu0 %133
  %137 = vset.pattern.permute.xlu0 0
  %138 = vperm.xlu0 %137, %v48
  %v139 = vpop.permute.xlu0 %138
  %142 = vset.pattern.permute.xlu0 0
  %143 = vperm.xlu0 %142, %v49
  %v144 = vpop.permute.xlu0 %143
  %147 = vset.pattern.permute.xlu0 0
  %148 = vperm.xlu0 %147, %v50
  %v149 = vpop.permute.xlu0 %148
  %152 = vset.pattern.permute.xlu0 0
  %153 = vperm.xlu0 %152, %v51
  %v154 = vpop.permute.xlu0 %153
  %157 = vset.pattern.permute.xlu0 0
  %158 = vperm.xlu0 %157, %v52
  %v159 = vpop.permute.xlu0 %158
  %162 = vset.pattern.permute.xlu0 0
  %163 = vperm.xlu0 %162, %v53
  %v164 = vpop.permute.xlu0 %163
  %167 = vset.pattern.permute.xlu0 0
  %168 = vperm.xlu0 %167, %v54
  %v169 = vpop.permute.xlu0 %168
  %172 = vset.pattern.permute.xlu0 0
  %173 = vperm.xlu0 %172, %v55
  %v174 = vpop.permute.xlu0 %173
  %177 = vset.pattern.permute.xlu0 0
  %178 = vperm.xlu0 %177, %v56
  %v179 = vpop.permute.xlu0 %178
  %182 = vset.pattern.permute.xlu0 0
  %183 = vperm.xlu0 %182, %v57
  %v184 = vpop.permute.xlu0 %183
  %187 = vset.pattern.permute.xlu0 0
  %188 = vperm.xlu0 %187, %v58
  %v189 = vpop.permute.xlu0 %188
  %192 = vset.pattern.permute.xlu0 0
  %193 = vperm.xlu0 %192, %v59
  %v194 = vpop.permute.xlu0 %193
  %197 = vset.pattern.permute.xlu0 0
  %198 = vperm.xlu0 %197, %v60
  %v199 = vpop.permute.xlu0 %198
  %202 = vset.pattern.permute.xlu0 0
  %203 = vperm.xlu0 %202, %v61
  %v204 = vpop.permute.xlu0 %203
  %207 = vset.pattern.permute.xlu0 0
  %208 = vperm.xlu0 %207, %v62
  %v209 = vpop.permute.xlu0 %208
  %212 = vset.pattern.permute.xlu0 0
  %213 = vperm.xlu0 %212, %v63
  %v214 = vpop.permute.xlu0 %213
  %217 = vset.pattern.permute.xlu0 0
  %218 = vperm.xlu0 %217, %v64
  %v219 = vpop.permute.xlu0 %218
  %222 = vset.pattern.permute.xlu0 0
  %223 = vperm.xlu0 %222, %v65
  %v224 = vpop.permute.xlu0 %223
  %227 = vset.pattern.permute.xlu0 0
  %228 = vperm.xlu0 %227, %v66
  %v229 = vpop.permute.xlu0 %228
  %232 = vset.pattern.permute.xlu0 0
  %233 = vperm.xlu0 %232, %v67
  %v234 = vpop.permute.xlu0 %233
  %237 = vset.pattern.permute.xlu0 0
  %238 = vperm.xlu0 %237, %v68
  %v239 = vpop.permute.xlu0 %238
  %242 = vset.pattern.permute.xlu0 0
  %243 = vperm.xlu0 %242, %v69
  %v244 = vpop.permute.xlu0 %243
  %247 = vset.pattern.permute.xlu0 0
  %248 = vperm.xlu0 %247, %v70
  %v249 = vpop.permute.xlu0 %248
  %252 = vset.pattern.permute.xlu0 0
  %253 = vperm.xlu0 %252, %v71
  %v254 = vpop.permute.xlu0 %253
  %257 = vset.pattern.permute.xlu0 0
  %258 = vperm.xlu0 %257, %v72
  %v259 = vpop.permute.xlu0 %258
  %262 = vset.pattern.permute.xlu0 0
  %263 = vperm.xlu0 %262, %v73
  %v264 = vpop.permute.xlu0 %263
  %267 = vset.pattern.permute.xlu0 0
  %268 = vperm.xlu0 %267, %v74
  %v269 = vpop.permute.xlu0 %268
  %272 = vset.pattern.permute.xlu0 0
  %273 = vperm.xlu0 %272, %v75
  %v274 = vpop.permute.xlu0 %273
  %277 = vset.pattern.permute.xlu0 0
  %278 = vperm.xlu0 %277, %v76
  %v279 = vpop.permute.xlu0 %278
  %282 = vset.pattern.permute.xlu0 0
  %283 = vperm.xlu0 %282, %v77
  %v284 = vpop.permute.xlu0 %283
  %287 = vset.pattern.permute.xlu0 0
  %288 = vperm.xlu0 %287, %v78
  %v289 = vpop.permute.xlu0 %288
  %292 = vset.pattern.permute.xlu0 0
  %293 = vperm.xlu0 %292, %v79
  %v294 = vpop.permute.xlu0 %293
  %297 = vset.pattern.permute.xlu0 0
  %298 = vperm.xlu0 %297, %v80
  %v299 = vpop.permute.xlu0 %298
  %302 = vset.pattern.permute.xlu0 0
  %303 = vperm.xlu0 %302, %v81
  %v304 = vpop.permute.xlu0 %303
  %307 = vset.pattern.permute.xlu0 0
  %308 = vperm.xlu0 %307, %v82
  %v309 = vpop.permute.xlu0 %308
  %312 = vset.pattern.permute.xlu0 0
  %313 = vperm.xlu0 %312, %v83
  %v314 = vpop.permute.xlu0 %313
  %317 = vset.pattern.permute.xlu0 0
  %318 = vperm.xlu0 %317, %v84
  %v319 = vpop.permute.xlu0 %318
  %322 = vset.pattern.permute.xlu0 0
  %323 = vperm.xlu0 %322, %v85
  %v324 = vpop.permute.xlu0 %323
  %327 = vset.pattern.permute.xlu0 0
  %328 = vperm.xlu0 %327, %v86
  %v329 = vpop.permute.xlu0 %328
  %332 = vset.pattern.permute.xlu0 0
  %333 = vperm.xlu0 %332, %v87
  %v334 = vpop.permute.xlu0 %333
  %337 = vset.pattern.permute.xlu0 0
  %338 = vperm.xlu0 %337, %v88
  %v339 = vpop.permute.xlu0 %338
  %342 = vset.pattern.permute.xlu0 0
  %343 = vperm.xlu0 %342, %v89
  %v344 = vpop.permute.xlu0 %343
  %347 = vset.pattern.permute.xlu0 0
  %348 = vperm.xlu0 %347, %v90
  %v349 = vpop.permute.xlu0 %348
  %352 = vset.pattern.permute.xlu0 0
  %353 = vperm.xlu0 %352, %v91
  %v354 = vpop.permute.xlu0 %353
  %357 = vset.pattern.permute.xlu0 0
  %358 = vperm.xlu0 %357, %v92
  %v359 = vpop.permute.xlu0 %358
  %362 = vset.pattern.permute.xlu0 0
  %363 = vperm.xlu0 %362, %v93
  %v364 = vpop.permute.xlu0 %363
  %367 = vset.pattern.permute.xlu0 0
  %368 = vperm.xlu0 %367, %v94
  %v369 = vpop.permute.xlu0 %368
  %372 = vset.pattern.permute.xlu0 0
  %373 = vperm.xlu0 %372, %v95
  %v374 = vpop.permute.xlu0 %373
  %377 = vset.pattern.permute.xlu0 0
  %378 = vperm.xlu0 %377, %v96
  %v379 = vpop.permute.xlu0 %378
  %382 = vset.pattern.permute.xlu0 0
  %383 = vperm.xlu0 %382, %v97
  %v384 = vpop.permute.xlu0 %383
  %387 = vset.pattern.permute.xlu0 0
  %388 = vperm.xlu0 %387, %v98
  %v389 = vpop.permute.xlu0 %388
  %392 = vset.pattern.permute.xlu0 0
  %393 = vperm.xlu0 %392, %v99
  %v394 = vpop.permute.xlu0 %393
  %397 = vset.pattern.permute.xlu0 0
  %398 = vperm.xlu0 %397, %v100
  %v399 = vpop.permute.xlu0 %398
  %402 = vset.pattern.permute.xlu0 0
  %403 = vperm.xlu0 %402, %v101
  %v404 = vpop.permute.xlu0 %403
  %407 = vset.pattern.permute.xlu0 0
  %408 = vperm.xlu0 %407, %v102
  %v409 = vpop.permute.xlu0 %408
  %412 = vset.pattern.permute.xlu0 0
  %413 = vperm.xlu0 %412, %v103
  %v414 = vpop.permute.xlu0 %413
  %417 = vset.pattern.permute.xlu0 0
  %418 = vperm.xlu0 %417, %v104
  %v419 = vpop.permute.xlu0 %418
  %422 = vset.pattern.permute.xlu0 0
  %423 = vperm.xlu0 %422, %v105
  %v424 = vpop.permute.xlu0 %423
  %v427 = vlaneseq
  %v428 = vshrl.u32 %v427, 7
  %v429 = vsub.s32 0, %v428
  %v430 = vrot.slane %v41, %v429
  %v432 = vmul.f32 %v109, %v430
  %v433 = vmul.f32 %v114, %v430
  %v434 = vmul.f32 %v119, %v430
  %v435 = vmul.f32 %v124, %v430
  %v436 = vmul.f32 %v129, %v430
  %v437 = vmul.f32 %v134, %v430
  %v438 = vmul.f32 %v139, %v430
  %v439 = vmul.f32 %v144, %v430
  %v440 = vmul.f32 %v149, %v430
  %v441 = vmul.f32 %v154, %v430
  %v442 = vmul.f32 %v159, %v430
  %v443 = vmul.f32 %v164, %v430
  %v444 = vmul.f32 %v169, %v430
  %v445 = vmul.f32 %v174, %v430
  %v446 = vmul.f32 %v179, %v430
  %v447 = vmul.f32 %v184, %v430
  %v448 = vmul.f32 %v189, %v430
  %v449 = vmul.f32 %v194, %v430
  %v450 = vmul.f32 %v199, %v430
  %v451 = vmul.f32 %v204, %v430
  %v452 = vmul.f32 %v209, %v430
  %v453 = vmul.f32 %v214, %v430
  %v454 = vmul.f32 %v219, %v430
  %v455 = vmul.f32 %v224, %v430
  %v456 = vmul.f32 %v229, %v430
  %v457 = vmul.f32 %v234, %v430
  %v458 = vmul.f32 %v239, %v430
  %v459 = vmul.f32 %v244, %v430
  %v460 = vmul.f32 %v249, %v430
  %v461 = vmul.f32 %v254, %v430
  %v462 = vmul.f32 %v259, %v430
  %v463 = vmul.f32 %v264, %v430
  %v464 = vmul.f32 %v269, %v430
  %v465 = vmul.f32 %v274, %v430
  %v466 = vmul.f32 %v279, %v430
  %v467 = vmul.f32 %v284, %v430
  %v468 = vmul.f32 %v289, %v430
  %v469 = vmul.f32 %v294, %v430
  %v470 = vmul.f32 %v299, %v430
  %v471 = vmul.f32 %v304, %v430
  %v472 = vmul.f32 %v309, %v430
  %v473 = vmul.f32 %v314, %v430
  %v474 = vmul.f32 %v319, %v430
  %v475 = vmul.f32 %v324, %v430
  %v476 = vmul.f32 %v329, %v430
  %v477 = vmul.f32 %v334, %v430
  %v478 = vmul.f32 %v339, %v430
  %v479 = vmul.f32 %v344, %v430
  %v480 = vmul.f32 %v349, %v430
  %v481 = vmul.f32 %v354, %v430
  %v482 = vmul.f32 %v359, %v430
  %v483 = vmul.f32 %v364, %v430
  %v484 = vmul.f32 %v369, %v430
  %v485 = vmul.f32 %v374, %v430
  %v486 = vmul.f32 %v379, %v430
  %v487 = vmul.f32 %v384, %v430
  %v488 = vmul.f32 %v389, %v430
  %v489 = vmul.f32 %v394, %v430
  %v490 = vmul.f32 %v399, %v430
  %v491 = vmul.f32 %v404, %v430
  %v492 = vmul.f32 %v409, %v430
  %v493 = vmul.f32 %v414, %v430
  %v494 = vmul.f32 %v419, %v430
  %v495 = vmul.f32 %v424, %v430
  %v496 = vld [vmem:[%s2] sm:$0xff]
  %v497 = vld [vmem:[%s2 + $0x8] sm:$0xff]
  %v498 = vld [vmem:[%s2 + $0x10] sm:$0xff]
  %v499 = vld [vmem:[%s2 + $0x18] sm:$0xff]
  %v500 = vld [vmem:[%s2 + $0x20] sm:$0xff]
  %v501 = vld [vmem:[%s2 + $0x28] sm:$0xff]
  %v502 = vld [vmem:[%s2 + $0x30] sm:$0xff]
  %v503 = vld [vmem:[%s2 + $0x38] sm:$0xff]
  %v504 = vld [vmem:[%s2 + $0x40] sm:$0xff]
  %v505 = vld [vmem:[%s2 + $0x48] sm:$0xff]
  %v506 = vld [vmem:[%s2 + $0x50] sm:$0xff]
  %v507 = vld [vmem:[%s2 + $0x58] sm:$0xff]
  %v508 = vld [vmem:[%s2 + $0x60] sm:$0xff]
  %v509 = vld [vmem:[%s2 + $0x68] sm:$0xff]
  %v510 = vld [vmem:[%s2 + $0x70] sm:$0xff]
  %v511 = vld [vmem:[%s2 + $0x78] sm:$0xff]
  %v512 = vld [vmem:[%s2 + $0x80] sm:$0xff]
  %v513 = vld [vmem:[%s2 + $0x88] sm:$0xff]
  %v514 = vld [vmem:[%s2 + $0x90] sm:$0xff]
  %v515 = vld [vmem:[%s2 + $0x98] sm:$0xff]
  %v516 = vld [vmem:[%s2 + $0xa0] sm:$0xff]
  %v517 = vld [vmem:[%s2 + $0xa8] sm:$0xff]
  %v518 = vld [vmem:[%s2 + $0xb0] sm:$0xff]
  %v519 = vld [vmem:[%s2 + $0xb8] sm:$0xff]
  %v520 = vld [vmem:[%s2 + $0xc0] sm:$0xff]
  %v521 = vld [vmem:[%s2 + $0xc8] sm:$0xff]
  %v522 = vld [vmem:[%s2 + $0xd0] sm:$0xff]
  %v523 = vld [vmem:[%s2 + $0xd8] sm:$0xff]
  %v524 = vld [vmem:[%s2 + $0xe0] sm:$0xff]
  %v525 = vld [vmem:[%s2 + $0xe8] sm:$0xff]
  %v526 = vld [vmem:[%s2 + $0xf0] sm:$0xff]
  %v527 = vld [vmem:[%s2 + $0xf8] sm:$0xff]
  %v528 = vld [vmem:[%s2 + $0x100] sm:$0xff]
  %v529 = vld [vmem:[%s2 + $0x108] sm:$0xff]
  %v530 = vld [vmem:[%s2 + $0x110] sm:$0xff]
  %v531 = vld [vmem:[%s2 + $0x118] sm:$0xff]
  %v532 = vld [vmem:[%s2 + $0x120] sm:$0xff]
  %v533 = vld [vmem:[%s2 + $0x128] sm:$0xff]
  %v534 = vld [vmem:[%s2 + $0x130] sm:$0xff]
  %v535 = vld [vmem:[%s2 + $0x138] sm:$0xff]
  %v536 = vld [vmem:[%s2 + $0x140] sm:$0xff]
  %v537 = vld [vmem:[%s2 + $0x148] sm:$0xff]
  %v538 = vld [vmem:[%s2 + $0x150] sm:$0xff]
  %v539 = vld [vmem:[%s2 + $0x158] sm:$0xff]
  %v540 = vld [vmem:[%s2 + $0x160] sm:$0xff]
  %v541 = vld [vmem:[%s2 + $0x168] sm:$0xff]
  %v542 = vld [vmem:[%s2 + $0x170] sm:$0xff]
  %v543 = vld [vmem:[%s2 + $0x178] sm:$0xff]
  %v544 = vld [vmem:[%s2 + $0x180] sm:$0xff]
  %v545 = vld [vmem:[%s2 + $0x188] sm:$0xff]
  %v546 = vld [vmem:[%s2 + $0x190] sm:$0xff]
  %v547 = vld [vmem:[%s2 + $0x198] sm:$0xff]
  %v548 = vld [vmem:[%s2 + $0x1a0] sm:$0xff]
  %v549 = vld [vmem:[%s2 + $0x1a8] sm:$0xff]
  %v550 = vld [vmem:[%s2 + $0x1b0] sm:$0xff]
  %v551 = vld [vmem:[%s2 + $0x1b8] sm:$0xff]
  %v552 = vld [vmem:[%s2 + $0x1c0] sm:$0xff]
  %v553 = vld [vmem:[%s2 + $0x1c8] sm:$0xff]
  %v554 = vld [vmem:[%s2 + $0x1d0] sm:$0xff]
  %v555 = vld [vmem:[%s2 + $0x1d8] sm:$0xff]
  %v556 = vld [vmem:[%s2 + $0x1e0] sm:$0xff]
  %v557 = vld [vmem:[%s2 + $0x1e8] sm:$0xff]
  %v558 = vld [vmem:[%s2 + $0x1f0] sm:$0xff]
  %v559 = vld [vmem:[%s2 + $0x1f8] sm:$0xff]
  %561 = vset.pattern.permute.xlu0 0
  %562 = vperm.xlu0 %561, %v496
  %v563 = vpop.permute.xlu0 %562
  %566 = vset.pattern.permute.xlu0 0
  %567 = vperm.xlu0 %566, %v497
  %v568 = vpop.permute.xlu0 %567
  %571 = vset.pattern.permute.xlu0 0
  %572 = vperm.xlu0 %571, %v498
  %v573 = vpop.permute.xlu0 %572
  %576 = vset.pattern.permute.xlu0 0
  %577 = vperm.xlu0 %576, %v499
  %v578 = vpop.permute.xlu0 %577
  %581 = vset.pattern.permute.xlu0 0
  %582 = vperm.xlu0 %581, %v500
  %v583 = vpop.permute.xlu0 %582
  %586 = vset.pattern.permute.xlu0 0
  %587 = vperm.xlu0 %586, %v501
  %v588 = vpop.permute.xlu0 %587
  %591 = vset.pattern.permute.xlu0 0
  %592 = vperm.xlu0 %591, %v502
  %v593 = vpop.permute.xlu0 %592
  %596 = vset.pattern.permute.xlu0 0
  %597 = vperm.xlu0 %596, %v503
  %v598 = vpop.permute.xlu0 %597
  %601 = vset.pattern.permute.xlu0 0
  %602 = vperm.xlu0 %601, %v504
  %v603 = vpop.permute.xlu0 %602
  %606 = vset.pattern.permute.xlu0 0
  %607 = vperm.xlu0 %606, %v505
  %v608 = vpop.permute.xlu0 %607
  %611 = vset.pattern.permute.xlu0 0
  %612 = vperm.xlu0 %611, %v506
  %v613 = vpop.permute.xlu0 %612
  %616 = vset.pattern.permute.xlu0 0
  %617 = vperm.xlu0 %616, %v507
  %v618 = vpop.permute.xlu0 %617
  %621 = vset.pattern.permute.xlu0 0
  %622 = vperm.xlu0 %621, %v508
  %v623 = vpop.permute.xlu0 %622
  %626 = vset.pattern.permute.xlu0 0
  %627 = vperm.xlu0 %626, %v509
  %v628 = vpop.permute.xlu0 %627
  %631 = vset.pattern.permute.xlu0 0
  %632 = vperm.xlu0 %631, %v510
  %v633 = vpop.permute.xlu0 %632
  %636 = vset.pattern.permute.xlu0 0
  %637 = vperm.xlu0 %636, %v511
  %v638 = vpop.permute.xlu0 %637
  %641 = vset.pattern.permute.xlu0 0
  %642 = vperm.xlu0 %641, %v512
  %v643 = vpop.permute.xlu0 %642
  %646 = vset.pattern.permute.xlu0 0
  %647 = vperm.xlu0 %646, %v513
  %v648 = vpop.permute.xlu0 %647
  %651 = vset.pattern.permute.xlu0 0
  %652 = vperm.xlu0 %651, %v514
  %v653 = vpop.permute.xlu0 %652
  %656 = vset.pattern.permute.xlu0 0
  %657 = vperm.xlu0 %656, %v515
  %v658 = vpop.permute.xlu0 %657
  %661 = vset.pattern.permute.xlu0 0
  %662 = vperm.xlu0 %661, %v516
  %v663 = vpop.permute.xlu0 %662
  %666 = vset.pattern.permute.xlu0 0
  %667 = vperm.xlu0 %666, %v517
  %v668 = vpop.permute.xlu0 %667
  %671 = vset.pattern.permute.xlu0 0
  %672 = vperm.xlu0 %671, %v518
  %v673 = vpop.permute.xlu0 %672
  %676 = vset.pattern.permute.xlu0 0
  %677 = vperm.xlu0 %676, %v519
  %v678 = vpop.permute.xlu0 %677
  %681 = vset.pattern.permute.xlu0 0
  %682 = vperm.xlu0 %681, %v520
  %v683 = vpop.permute.xlu0 %682
  %686 = vset.pattern.permute.xlu0 0
  %687 = vperm.xlu0 %686, %v521
  %v688 = vpop.permute.xlu0 %687
  %691 = vset.pattern.permute.xlu0 0
  %692 = vperm.xlu0 %691, %v522
  %v693 = vpop.permute.xlu0 %692
  %696 = vset.pattern.permute.xlu0 0
  %697 = vperm.xlu0 %696, %v523
  %v698 = vpop.permute.xlu0 %697
  %701 = vset.pattern.permute.xlu0 0
  %702 = vperm.xlu0 %701, %v524
  %v703 = vpop.permute.xlu0 %702
  %706 = vset.pattern.permute.xlu0 0
  %707 = vperm.xlu0 %706, %v525
  %v708 = vpop.permute.xlu0 %707
  %711 = vset.pattern.permute.xlu0 0
  %712 = vperm.xlu0 %711, %v526
  %v713 = vpop.permute.xlu0 %712
  %716 = vset.pattern.permute.xlu0 0
  %717 = vperm.xlu0 %716, %v527
  %v718 = vpop.permute.xlu0 %717
  %721 = vset.pattern.permute.xlu0 0
  %722 = vperm.xlu0 %721, %v528
  %v723 = vpop.permute.xlu0 %722
  %726 = vset.pattern.permute.xlu0 0
  %727 = vperm.xlu0 %726, %v529
  %v728 = vpop.permute.xlu0 %727
  %731 = vset.pattern.permute.xlu0 0
  %732 = vperm.xlu0 %731, %v530
  %v733 = vpop.permute.xlu0 %732
  %736 = vset.pattern.permute.xlu0 0
  %737 = vperm.xlu0 %736, %v531
  %v738 = vpop.permute.xlu0 %737
  %741 = vset.pattern.permute.xlu0 0
  %742 = vperm.xlu0 %741, %v532
  %v743 = vpop.permute.xlu0 %742
  %746 = vset.pattern.permute.xlu0 0
  %747 = vperm.xlu0 %746, %v533
  %v748 = vpop.permute.xlu0 %747
  %751 = vset.pattern.permute.xlu0 0
  %752 = vperm.xlu0 %751, %v534
  %v753 = vpop.permute.xlu0 %752
  %756 = vset.pattern.permute.xlu0 0
  %757 = vperm.xlu0 %756, %v535
  %v758 = vpop.permute.xlu0 %757
  %761 = vset.pattern.permute.xlu0 0
  %762 = vperm.xlu0 %761, %v536
  %v763 = vpop.permute.xlu0 %762
  %766 = vset.pattern.permute.xlu0 0
  %767 = vperm.xlu0 %766, %v537
  %v768 = vpop.permute.xlu0 %767
  %771 = vset.pattern.permute.xlu0 0
  %772 = vperm.xlu0 %771, %v538
  %v773 = vpop.permute.xlu0 %772
  %776 = vset.pattern.permute.xlu0 0
  %777 = vperm.xlu0 %776, %v539
  %v778 = vpop.permute.xlu0 %777
  %781 = vset.pattern.permute.xlu0 0
  %782 = vperm.xlu0 %781, %v540
  %v783 = vpop.permute.xlu0 %782
  %786 = vset.pattern.permute.xlu0 0
  %787 = vperm.xlu0 %786, %v541
  %v788 = vpop.permute.xlu0 %787
  %791 = vset.pattern.permute.xlu0 0
  %792 = vperm.xlu0 %791, %v542
  %v793 = vpop.permute.xlu0 %792
  %796 = vset.pattern.permute.xlu0 0
  %797 = vperm.xlu0 %796, %v543
  %v798 = vpop.permute.xlu0 %797
  %801 = vset.pattern.permute.xlu0 0
  %802 = vperm.xlu0 %801, %v544
  %v803 = vpop.permute.xlu0 %802
  %806 = vset.pattern.permute.xlu0 0
  %807 = vperm.xlu0 %806, %v545
  %v808 = vpop.permute.xlu0 %807
  %811 = vset.pattern.permute.xlu0 0
  %812 = vperm.xlu0 %811, %v546
  %v813 = vpop.permute.xlu0 %812
  %816 = vset.pattern.permute.xlu0 0
  %817 = vperm.xlu0 %816, %v547
  %v818 = vpop.permute.xlu0 %817
  %821 = vset.pattern.permute.xlu0 0
  %822 = vperm.xlu0 %821, %v548
  %v823 = vpop.permute.xlu0 %822
  %826 = vset.pattern.permute.xlu0 0
  %827 = vperm.xlu0 %826, %v549
  %v828 = vpop.permute.xlu0 %827
  %831 = vset.pattern.permute.xlu0 0
  %832 = vperm.xlu0 %831, %v550
  %v833 = vpop.permute.xlu0 %832
  %836 = vset.pattern.permute.xlu0 0
  %837 = vperm.xlu0 %836, %v551
  %v838 = vpop.permute.xlu0 %837
  %841 = vset.pattern.permute.xlu0 0
  %842 = vperm.xlu0 %841, %v552
  %v843 = vpop.permute.xlu0 %842
  %846 = vset.pattern.permute.xlu0 0
  %847 = vperm.xlu0 %846, %v553
  %v848 = vpop.permute.xlu0 %847
  %851 = vset.pattern.permute.xlu0 0
  %852 = vperm.xlu0 %851, %v554
  %v853 = vpop.permute.xlu0 %852
  %856 = vset.pattern.permute.xlu0 0
  %857 = vperm.xlu0 %856, %v555
  %v858 = vpop.permute.xlu0 %857
  %861 = vset.pattern.permute.xlu0 0
  %862 = vperm.xlu0 %861, %v556
  %v863 = vpop.permute.xlu0 %862
  %866 = vset.pattern.permute.xlu0 0
  %867 = vperm.xlu0 %866, %v557
  %v868 = vpop.permute.xlu0 %867
  %871 = vset.pattern.permute.xlu0 0
  %872 = vperm.xlu0 %871, %v558
  %v873 = vpop.permute.xlu0 %872
  %876 = vset.pattern.permute.xlu0 0
  %877 = vperm.xlu0 %876, %v559
  %v878 = vpop.permute.xlu0 %877
  %v880 = vadd.f32 %v432, %v563
  %v881 = vadd.f32 %v433, %v568
  %v882 = vadd.f32 %v434, %v573
  %v883 = vadd.f32 %v435, %v578
  %v884 = vadd.f32 %v436, %v583
  %v885 = vadd.f32 %v437, %v588
  %v886 = vadd.f32 %v438, %v593
  %v887 = vadd.f32 %v439, %v598
  %v888 = vadd.f32 %v440, %v603
  %v889 = vadd.f32 %v441, %v608
  %v890 = vadd.f32 %v442, %v613
  %v891 = vadd.f32 %v443, %v618
  %v892 = vadd.f32 %v444, %v623
  %v893 = vadd.f32 %v445, %v628
  %v894 = vadd.f32 %v446, %v633
  %v895 = vadd.f32 %v447, %v638
  %v896 = vadd.f32 %v448, %v643
  %v897 = vadd.f32 %v449, %v648
  %v898 = vadd.f32 %v450, %v653
  %v899 = vadd.f32 %v451, %v658
  %v900 = vadd.f32 %v452, %v663
  %v901 = vadd.f32 %v453, %v668
  %v902 = vadd.f32 %v454, %v673
  %v903 = vadd.f32 %v455, %v678
  %v904 = vadd.f32 %v456, %v683
  %v905 = vadd.f32 %v457, %v688
  %v906 = vadd.f32 %v458, %v693
  %v907 = vadd.f32 %v459, %v698
  %v908 = vadd.f32 %v460, %v703
  %v909 = vadd.f32 %v461, %v708
  %v910 = vadd.f32 %v462, %v713
  %v911 = vadd.f32 %v463, %v718
  %v912 = vadd.f32 %v464, %v723
  %v913 = vadd.f32 %v465, %v728
  %v914 = vadd.f32 %v466, %v733
  %v915 = vadd.f32 %v467, %v738
  %v916 = vadd.f32 %v468, %v743
  %v917 = vadd.f32 %v469, %v748
  %v918 = vadd.f32 %v470, %v753
  %v919 = vadd.f32 %v471, %v758
  %v920 = vadd.f32 %v472, %v763
  %v921 = vadd.f32 %v473, %v768
  %v922 = vadd.f32 %v474, %v773
  %v923 = vadd.f32 %v475, %v778
  %v924 = vadd.f32 %v476, %v783
  %v925 = vadd.f32 %v477, %v788
  %v926 = vadd.f32 %v478, %v793
  %v927 = vadd.f32 %v479, %v798
  %v928 = vadd.f32 %v480, %v803
  %v929 = vadd.f32 %v481, %v808
  %v930 = vadd.f32 %v482, %v813
  %v931 = vadd.f32 %v483, %v818
  %v932 = vadd.f32 %v484, %v823
  %v933 = vadd.f32 %v485, %v828
  %v934 = vadd.f32 %v486, %v833
  %v935 = vadd.f32 %v487, %v838
  %v936 = vadd.f32 %v488, %v843
  %v937 = vadd.f32 %v489, %v848
  %v938 = vadd.f32 %v490, %v853
  %v939 = vadd.f32 %v491, %v858
  %v940 = vadd.f32 %v492, %v863
  %v941 = vadd.f32 %v493, %v868
  %v942 = vadd.f32 %v494, %v873
  %v943 = vadd.f32 %v495, %v878
  %v944 = vmax.f32 %v880, 0.0
  %v945 = vmax.f32 %v881, 0.0
  %v946 = vmax.f32 %v882, 0.0
  %v947 = vmax.f32 %v883, 0.0
  %v948 = vmax.f32 %v884, 0.0
  %v949 = vmax.f32 %v885, 0.0
  %v950 = vmax.f32 %v886, 0.0
  %v951 = vmax.f32 %v887, 0.0
  %v952 = vmax.f32 %v888, 0.0
  %v953 = vmax.f32 %v889, 0.0
  %v954 = vmax.f32 %v890, 0.0
  %v955 = vmax.f32 %v891, 0.0
  %v956 = vmax.f32 %v892, 0.0
  %v957 = vmax.f32 %v893, 0.0
  %v958 = vmax.f32 %v894, 0.0
  %v959 = vmax.f32 %v895, 0.0
  %v960 = vmax.f32 %v896, 0.0
  %v961 = vmax.f32 %v897, 0.0
  %v962 = vmax.f32 %v898, 0.0
  %v963 = vmax.f32 %v899, 0.0
  %v964 = vmax.f32 %v900, 0.0
  %v965 = vmax.f32 %v901, 0.0
  %v966 = vmax.f32 %v902, 0.0
  %v967 = vmax.f32 %v903, 0.0
  %v968 = vmax.f32 %v904, 0.0
  %v969 = vmax.f32 %v905, 0.0
  %v970 = vmax.f32 %v906, 0.0
  %v971 = vmax.f32 %v907, 0.0
  %v972 = vmax.f32 %v908, 0.0
  %v973 = vmax.f32 %v909, 0.0
  %v974 = vmax.f32 %v910, 0.0
  %v975 = vmax.f32 %v911, 0.0
  %v976 = vmax.f32 %v912, 0.0
  %v977 = vmax.f32 %v913, 0.0
  %v978 = vmax.f32 %v914, 0.0
  %v979 = vmax.f32 %v915, 0.0
  %v980 = vmax.f32 %v916, 0.0
  %v981 = vmax.f32 %v917, 0.0
  %v982 = vmax.f32 %v918, 0.0
  %v983 = vmax.f32 %v919, 0.0
  %v984 = vmax.f32 %v920, 0.0
  %v985 = vmax.f32 %v921, 0.0
  %v986 = vmax.f32 %v922, 0.0
  %v987 = vmax.f32 %v923, 0.0
  %v988 = vmax.f32 %v924, 0.0
  %v989 = vmax.f32 %v925, 0.0
  %v990 = vmax.f32 %v926, 0.0
  %v991 = vmax.f32 %v927, 0.0
  %v992 = vmax.f32 %v928, 0.0
  %v993 = vmax.f32 %v929, 0.0
  %v994 = vmax.f32 %v930, 0.0
  %v995 = vmax.f32 %v931, 0.0
  %v996 = vmax.f32 %v932, 0.0
  %v997 = vmax.f32 %v933, 0.0
  %v998 = vmax.f32 %v934, 0.0
  %v999 = vmax.f32 %v935, 0.0
  %v1000 = vmax.f32 %v936, 0.0
  %v1001 = vmax.f32 %v937, 0.0
  %v1002 = vmax.f32 %v938, 0.0
  %v1003 = vmax.f32 %v939, 0.0
  %v1004 = vmax.f32 %v940, 0.0
  %v1005 = vmax.f32 %v941, 0.0
  %v1006 = vmax.f32 %v942, 0.0
  %v1007 = vmax.f32 %v943, 0.0
  %v1008 = vld [vmem:[%s3] sm:$0xff]
  %v1009 = vld [vmem:[%s3 + $0x8] sm:$0xff]
  %v1010 = vld [vmem:[%s3 + $0x10] sm:$0xff]
  %v1011 = vld [vmem:[%s3 + $0x18] sm:$0xff]
  %v1012 = vld [vmem:[%s3 + $0x20] sm:$0xff]
  %v1013 = vld [vmem:[%s3 + $0x28] sm:$0xff]
  %v1014 = vld [vmem:[%s3 + $0x30] sm:$0xff]
  %v1015 = vld [vmem:[%s3 + $0x38] sm:$0xff]
  %v1016 = vld [vmem:[%s3 + $0x40] sm:$0xff]
  %v1017 = vld [vmem:[%s3 + $0x48] sm:$0xff]
  %v1018 = vld [vmem:[%s3 + $0x50] sm:$0xff]
  %v1019 = vld [vmem:[%s3 + $0x58] sm:$0xff]
  %v1020 = vld [vmem:[%s3 + $0x60] sm:$0xff]
  %v1021 = vld [vmem:[%s3 + $0x68] sm:$0xff]
  %v1022 = vld [vmem:[%s3 + $0x70] sm:$0xff]
  %v1023 = vld [vmem:[%s3 + $0x78] sm:$0xff]
  %v1024 = vld [vmem:[%s3 + $0x80] sm:$0xff]
  %v1025 = vld [vmem:[%s3 + $0x88] sm:$0xff]
  %v1026 = vld [vmem:[%s3 + $0x90] sm:$0xff]
  %v1027 = vld [vmem:[%s3 + $0x98] sm:$0xff]
  %v1028 = vld [vmem:[%s3 + $0xa0] sm:$0xff]
  %v1029 = vld [vmem:[%s3 + $0xa8] sm:$0xff]
  %v1030 = vld [vmem:[%s3 + $0xb0] sm:$0xff]
  %v1031 = vld [vmem:[%s3 + $0xb8] sm:$0xff]
  %v1032 = vld [vmem:[%s3 + $0xc0] sm:$0xff]
  %v1033 = vld [vmem:[%s3 + $0xc8] sm:$0xff]
  %v1034 = vld [vmem:[%s3 + $0xd0] sm:$0xff]
  %v1035 = vld [vmem:[%s3 + $0xd8] sm:$0xff]
  %v1036 = vld [vmem:[%s3 + $0xe0] sm:$0xff]
  %v1037 = vld [vmem:[%s3 + $0xe8] sm:$0xff]
  %v1038 = vld [vmem:[%s3 + $0xf0] sm:$0xff]
  %v1039 = vld [vmem:[%s3 + $0xf8] sm:$0xff]
  %v1040 = vld [vmem:[%s3 + $0x100] sm:$0xff]
  %v1041 = vld [vmem:[%s3 + $0x108] sm:$0xff]
  %v1042 = vld [vmem:[%s3 + $0x110] sm:$0xff]
  %v1043 = vld [vmem:[%s3 + $0x118] sm:$0xff]
  %v1044 = vld [vmem:[%s3 + $0x120] sm:$0xff]
  %v1045 = vld [vmem:[%s3 + $0x128] sm:$0xff]
  %v1046 = vld [vmem:[%s3 + $0x130] sm:$0xff]
  %v1047 = vld [vmem:[%s3 + $0x138] sm:$0xff]
  %v1048 = vld [vmem:[%s3 + $0x140] sm:$0xff]
  %v1049 = vld [vmem:[%s3 + $0x148] sm:$0xff]
  %v1050 = vld [vmem:[%s3 + $0x150] sm:$0xff]
  %v1051 = vld [vmem:[%s3 + $0x158] sm:$0xff]
  %v1052 = vld [vmem:[%s3 + $0x160] sm:$0xff]
  %v1053 = vld [vmem:[%s3 + $0x168] sm:$0xff]
  %v1054 = vld [vmem:[%s3 + $0x170] sm:$0xff]
  %v1055 = vld [vmem:[%s3 + $0x178] sm:$0xff]
  %v1056 = vld [vmem:[%s3 + $0x180] sm:$0xff]
  %v1057 = vld [vmem:[%s3 + $0x188] sm:$0xff]
  %v1058 = vld [vmem:[%s3 + $0x190] sm:$0xff]
  %v1059 = vld [vmem:[%s3 + $0x198] sm:$0xff]
  %v1060 = vld [vmem:[%s3 + $0x1a0] sm:$0xff]
  %v1061 = vld [vmem:[%s3 + $0x1a8] sm:$0xff]
  %v1062 = vld [vmem:[%s3 + $0x1b0] sm:$0xff]
  %v1063 = vld [vmem:[%s3 + $0x1b8] sm:$0xff]
  %v1064 = vld [vmem:[%s3 + $0x1c0] sm:$0xff]
  %v1065 = vld [vmem:[%s3 + $0x1c8] sm:$0xff]
  %v1066 = vld [vmem:[%s3 + $0x1d0] sm:$0xff]
  %v1067 = vld [vmem:[%s3 + $0x1d8] sm:$0xff]
  %v1068 = vld [vmem:[%s3 + $0x1e0] sm:$0xff]
  %v1069 = vld [vmem:[%s3 + $0x1e8] sm:$0xff]
  %v1070 = vld [vmem:[%s3 + $0x1f0] sm:$0xff]
  %v1071 = vld [vmem:[%s3 + $0x1f8] sm:$0xff]
  %v1072 = vld [vmem:[%s3 + $0x200] sm:$0xff]
  %v1073 = vld [vmem:[%s3 + $0x208] sm:$0xff]
  %v1074 = vld [vmem:[%s3 + $0x210] sm:$0xff]
  %v1075 = vld [vmem:[%s3 + $0x218] sm:$0xff]
  %v1076 = vld [vmem:[%s3 + $0x220] sm:$0xff]
  %v1077 = vld [vmem:[%s3 + $0x228] sm:$0xff]
  %v1078 = vld [vmem:[%s3 + $0x230] sm:$0xff]
  %v1079 = vld [vmem:[%s3 + $0x238] sm:$0xff]
  %v1080 = vld [vmem:[%s3 + $0x240] sm:$0xff]
  %v1081 = vld [vmem:[%s3 + $0x248] sm:$0xff]
  %v1082 = vld [vmem:[%s3 + $0x250] sm:$0xff]
  %v1083 = vld [vmem:[%s3 + $0x258] sm:$0xff]
  %v1084 = vld [vmem:[%s3 + $0x260] sm:$0xff]
  %v1085 = vld [vmem:[%s3 + $0x268] sm:$0xff]
  %v1086 = vld [vmem:[%s3 + $0x270] sm:$0xff]
  %v1087 = vld [vmem:[%s3 + $0x278] sm:$0xff]
  %v1088 = vld [vmem:[%s3 + $0x280] sm:$0xff]
  %v1089 = vld [vmem:[%s3 + $0x288] sm:$0xff]
  %v1090 = vld [vmem:[%s3 + $0x290] sm:$0xff]
  %v1091 = vld [vmem:[%s3 + $0x298] sm:$0xff]
  %v1092 = vld [vmem:[%s3 + $0x2a0] sm:$0xff]
  %v1093 = vld [vmem:[%s3 + $0x2a8] sm:$0xff]
  %v1094 = vld [vmem:[%s3 + $0x2b0] sm:$0xff]
  %v1095 = vld [vmem:[%s3 + $0x2b8] sm:$0xff]
  %v1096 = vld [vmem:[%s3 + $0x2c0] sm:$0xff]
  %v1097 = vld [vmem:[%s3 + $0x2c8] sm:$0xff]
  %v1098 = vld [vmem:[%s3 + $0x2d0] sm:$0xff]
  %v1099 = vld [vmem:[%s3 + $0x2d8] sm:$0xff]
  %v1100 = vld [vmem:[%s3 + $0x2e0] sm:$0xff]
  %v1101 = vld [vmem:[%s3 + $0x2e8] sm:$0xff]
  %v1102 = vld [vmem:[%s3 + $0x2f0] sm:$0xff]
  %v1103 = vld [vmem:[%s3 + $0x2f8] sm:$0xff]
  %v1104 = vld [vmem:[%s3 + $0x300] sm:$0xff]
  %v1105 = vld [vmem:[%s3 + $0x308] sm:$0xff]
  %v1106 = vld [vmem:[%s3 + $0x310] sm:$0xff]
  %v1107 = vld [vmem:[%s3 + $0x318] sm:$0xff]
  %v1108 = vld [vmem:[%s3 + $0x320] sm:$0xff]
  %v1109 = vld [vmem:[%s3 + $0x328] sm:$0xff]
  %v1110 = vld [vmem:[%s3 + $0x330] sm:$0xff]
  %v1111 = vld [vmem:[%s3 + $0x338] sm:$0xff]
  %v1112 = vld [vmem:[%s3 + $0x340] sm:$0xff]
  %v1113 = vld [vmem:[%s3 + $0x348] sm:$0xff]
  %v1114 = vld [vmem:[%s3 + $0x350] sm:$0xff]
  %v1115 = vld [vmem:[%s3 + $0x358] sm:$0xff]
  %v1116 = vld [vmem:[%s3 + $0x360] sm:$0xff]
  %v1117 = vld [vmem:[%s3 + $0x368] sm:$0xff]
  %v1118 = vld [vmem:[%s3 + $0x370] sm:$0xff]
  %v1119 = vld [vmem:[%s3 + $0x378] sm:$0xff]
  %v1120 = vld [vmem:[%s3 + $0x380] sm:$0xff]
  %v1121 = vld [vmem:[%s3 + $0x388] sm:$0xff]
  %v1122 = vld [vmem:[%s3 + $0x390] sm:$0xff]
  %v1123 = vld [vmem:[%s3 + $0x398] sm:$0xff]
  %v1124 = vld [vmem:[%s3 + $0x3a0] sm:$0xff]
  %v1125 = vld [vmem:[%s3 + $0x3a8] sm:$0xff]
  %v1126 = vld [vmem:[%s3 + $0x3b0] sm:$0xff]
  %v1127 = vld [vmem:[%s3 + $0x3b8] sm:$0xff]
  %v1128 = vld [vmem:[%s3 + $0x3c0] sm:$0xff]
  %v1129 = vld [vmem:[%s3 + $0x3c8] sm:$0xff]
  %v1130 = vld [vmem:[%s3 + $0x3d0] sm:$0xff]
  %v1131 = vld [vmem:[%s3 + $0x3d8] sm:$0xff]
  %v1132 = vld [vmem:[%s3 + $0x3e0] sm:$0xff]
  %v1133 = vld [vmem:[%s3 + $0x3e8] sm:$0xff]
  %v1134 = vld [vmem:[%s3 + $0x3f0] sm:$0xff]
  %v1135 = vld [vmem:[%s3 + $0x3f8] sm:$0xff]
  %v1136 = vpack.c.bf16 %v945, %v944
  %v1137 = vpack.c.bf16 %v947, %v946
  %v1138 = vpack.c.bf16 %v949, %v948
  %v1139 = vpack.c.bf16 %v951, %v950
  %v1140 = vpack.c.bf16 %v953, %v952
  %v1141 = vpack.c.bf16 %v955, %v954
  %v1142 = vpack.c.bf16 %v957, %v956
  %v1143 = vpack.c.bf16 %v959, %v958
  %v1144 = vpack.c.bf16 %v961, %v960
  %v1145 = vpack.c.bf16 %v963, %v962
  %v1146 = vpack.c.bf16 %v965, %v964
  %v1147 = vpack.c.bf16 %v967, %v966
  %v1148 = vpack.c.bf16 %v969, %v968
  %v1149 = vpack.c.bf16 %v971, %v970
  %v1150 = vpack.c.bf16 %v973, %v972
  %v1151 = vpack.c.bf16 %v975, %v974
  %v1152 = vpack.c.bf16 %v977, %v976
  %v1153 = vpack.c.bf16 %v979, %v978
  %v1154 = vpack.c.bf16 %v981, %v980
  %v1155 = vpack.c.bf16 %v983, %v982
  %v1156 = vpack.c.bf16 %v985, %v984
  %v1157 = vpack.c.bf16 %v987, %v986
  %v1158 = vpack.c.bf16 %v989, %v988
  %v1159 = vpack.c.bf16 %v991, %v990
  %v1160 = vpack.c.bf16 %v993, %v992
  %v1161 = vpack.c.bf16 %v995, %v994
  %v1162 = vpack.c.bf16 %v997, %v996
  %v1163 = vpack.c.bf16 %v999, %v998
  %v1164 = vpack.c.bf16 %v1001, %v1000
  %v1165 = vpack.c.bf16 %v1003, %v1002
  %v1166 = vpack.c.bf16 %v1005, %v1004
  %v1167 = vpack.c.bf16 %v1007, %v1006
  %v1168 = vld [vmem:[%s4] sm:$0xff]
  %v1169 = vld [vmem:[%s4 + $0x8] sm:$0xff]
  %v1170 = vld [vmem:[%s4 + $0x10] sm:$0xff]
  %v1171 = vld [vmem:[%s4 + $0x18] sm:$0xff]
  %v1172 = vld [vmem:[%s4 + $0x20] sm:$0xff]
  %v1173 = vld [vmem:[%s4 + $0x28] sm:$0xff]
  %v1174 = vld [vmem:[%s4 + $0x30] sm:$0xff]
  %v1175 = vld [vmem:[%s4 + $0x38] sm:$0xff]
  %v1176 = vld [vmem:[%s4 + $0x40] sm:$0xff]
  %v1177 = vld [vmem:[%s4 + $0x48] sm:$0xff]
  %v1178 = vld [vmem:[%s4 + $0x50] sm:$0xff]
  %v1179 = vld [vmem:[%s4 + $0x58] sm:$0xff]
  %v1180 = vld [vmem:[%s4 + $0x60] sm:$0xff]
  %v1181 = vld [vmem:[%s4 + $0x68] sm:$0xff]
  %v1182 = vld [vmem:[%s4 + $0x70] sm:$0xff]
  %v1183 = vld [vmem:[%s4 + $0x78] sm:$0xff]
  %v1184 = vld [vmem:[%s4 + $0x80] sm:$0xff]
  %v1185 = vld [vmem:[%s4 + $0x88] sm:$0xff]
  %v1186 = vld [vmem:[%s4 + $0x90] sm:$0xff]
  %v1187 = vld [vmem:[%s4 + $0x98] sm:$0xff]
  %v1188 = vld [vmem:[%s4 + $0xa0] sm:$0xff]
  %v1189 = vld [vmem:[%s4 + $0xa8] sm:$0xff]
  %v1190 = vld [vmem:[%s4 + $0xb0] sm:$0xff]
  %v1191 = vld [vmem:[%s4 + $0xb8] sm:$0xff]
  %v1192 = vld [vmem:[%s4 + $0xc0] sm:$0xff]
  %v1193 = vld [vmem:[%s4 + $0xc8] sm:$0xff]
  %v1194 = vld [vmem:[%s4 + $0xd0] sm:$0xff]
  %v1195 = vld [vmem:[%s4 + $0xd8] sm:$0xff]
  %v1196 = vld [vmem:[%s4 + $0xe0] sm:$0xff]
  %v1197 = vld [vmem:[%s4 + $0xe8] sm:$0xff]
  %v1198 = vld [vmem:[%s4 + $0xf0] sm:$0xff]
  %v1199 = vld [vmem:[%s4 + $0xf8] sm:$0xff]
  %v1200 = vld [vmem:[%s4 + $0x100] sm:$0xff]
  %v1201 = vld [vmem:[%s4 + $0x108] sm:$0xff]
  %v1202 = vld [vmem:[%s4 + $0x110] sm:$0xff]
  %v1203 = vld [vmem:[%s4 + $0x118] sm:$0xff]
  %v1204 = vld [vmem:[%s4 + $0x120] sm:$0xff]
  %v1205 = vld [vmem:[%s4 + $0x128] sm:$0xff]
  %v1206 = vld [vmem:[%s4 + $0x130] sm:$0xff]
  %v1207 = vld [vmem:[%s4 + $0x138] sm:$0xff]
  %v1208 = vld [vmem:[%s4 + $0x140] sm:$0xff]
  %v1209 = vld [vmem:[%s4 + $0x148] sm:$0xff]
  %v1210 = vld [vmem:[%s4 + $0x150] sm:$0xff]
  %v1211 = vld [vmem:[%s4 + $0x158] sm:$0xff]
  %v1212 = vld [vmem:[%s4 + $0x160] sm:$0xff]
  %v1213 = vld [vmem:[%s4 + $0x168] sm:$0xff]
  %v1214 = vld [vmem:[%s4 + $0x170] sm:$0xff]
  %v1215 = vld [vmem:[%s4 + $0x178] sm:$0xff]
  %v1216 = vld [vmem:[%s4 + $0x180] sm:$0xff]
  %v1217 = vld [vmem:[%s4 + $0x188] sm:$0xff]
  %v1218 = vld [vmem:[%s4 + $0x190] sm:$0xff]
  %v1219 = vld [vmem:[%s4 + $0x198] sm:$0xff]
  %v1220 = vld [vmem:[%s4 + $0x1a0] sm:$0xff]
  %v1221 = vld [vmem:[%s4 + $0x1a8] sm:$0xff]
  %v1222 = vld [vmem:[%s4 + $0x1b0] sm:$0xff]
  %v1223 = vld [vmem:[%s4 + $0x1b8] sm:$0xff]
  %v1224 = vld [vmem:[%s4 + $0x1c0] sm:$0xff]
  %v1225 = vld [vmem:[%s4 + $0x1c8] sm:$0xff]
  %v1226 = vld [vmem:[%s4 + $0x1d0] sm:$0xff]
  %v1227 = vld [vmem:[%s4 + $0x1d8] sm:$0xff]
  %v1228 = vld [vmem:[%s4 + $0x1e0] sm:$0xff]
  %v1229 = vld [vmem:[%s4 + $0x1e8] sm:$0xff]
  %v1230 = vld [vmem:[%s4 + $0x1f0] sm:$0xff]
  %v1231 = vld [vmem:[%s4 + $0x1f8] sm:$0xff]
  %1233 = vset.pattern.permute.xlu0 0
  %1234 = vperm.xlu0 %1233, %v1168
  %v1235 = vpop.permute.xlu0 %1234
  %1238 = vset.pattern.permute.xlu0 0
  %1239 = vperm.xlu0 %1238, %v1169
  %v1240 = vpop.permute.xlu0 %1239
  %1243 = vset.pattern.permute.xlu0 0
  %1244 = vperm.xlu0 %1243, %v1170
  %v1245 = vpop.permute.xlu0 %1244
  %1248 = vset.pattern.permute.xlu0 0
  %1249 = vperm.xlu0 %1248, %v1171
  %v1250 = vpop.permute.xlu0 %1249
  %1253 = vset.pattern.permute.xlu0 0
  %1254 = vperm.xlu0 %1253, %v1172
  %v1255 = vpop.permute.xlu0 %1254
  %1258 = vset.pattern.permute.xlu0 0
  %1259 = vperm.xlu0 %1258, %v1173
  %v1260 = vpop.permute.xlu0 %1259
  %1263 = vset.pattern.permute.xlu0 0
  %1264 = vperm.xlu0 %1263, %v1174
  %v1265 = vpop.permute.xlu0 %1264
  %1268 = vset.pattern.permute.xlu0 0
  %1269 = vperm.xlu0 %1268, %v1175
  %v1270 = vpop.permute.xlu0 %1269
  %1273 = vset.pattern.permute.xlu0 0
  %1274 = vperm.xlu0 %1273, %v1176
  %v1275 = vpop.permute.xlu0 %1274
  %1278 = vset.pattern.permute.xlu0 0
  %1279 = vperm.xlu0 %1278, %v1177
  %v1280 = vpop.permute.xlu0 %1279
  %1283 = vset.pattern.permute.xlu0 0
  %1284 = vperm.xlu0 %1283, %v1178
  %v1285 = vpop.permute.xlu0 %1284
  %1288 = vset.pattern.permute.xlu0 0
  %1289 = vperm.xlu0 %1288, %v1179
  %v1290 = vpop.permute.xlu0 %1289
  %1293 = vset.pattern.permute.xlu0 0
  %1294 = vperm.xlu0 %1293, %v1180
  %v1295 = vpop.permute.xlu0 %1294
  %1298 = vset.pattern.permute.xlu0 0
  %1299 = vperm.xlu0 %1298, %v1181
  %v1300 = vpop.permute.xlu0 %1299
  %1303 = vset.pattern.permute.xlu0 0
  %1304 = vperm.xlu0 %1303, %v1182
  %v1305 = vpop.permute.xlu0 %1304
  %1308 = vset.pattern.permute.xlu0 0
  %1309 = vperm.xlu0 %1308, %v1183
  %v1310 = vpop.permute.xlu0 %1309
  %1313 = vset.pattern.permute.xlu0 0
  %1314 = vperm.xlu0 %1313, %v1184
  %v1315 = vpop.permute.xlu0 %1314
  %1318 = vset.pattern.permute.xlu0 0
  %1319 = vperm.xlu0 %1318, %v1185
  %v1320 = vpop.permute.xlu0 %1319
  %1323 = vset.pattern.permute.xlu0 0
  %1324 = vperm.xlu0 %1323, %v1186
  %v1325 = vpop.permute.xlu0 %1324
  %1328 = vset.pattern.permute.xlu0 0
  %1329 = vperm.xlu0 %1328, %v1187
  %v1330 = vpop.permute.xlu0 %1329
  %1333 = vset.pattern.permute.xlu0 0
  %1334 = vperm.xlu0 %1333, %v1188
  %v1335 = vpop.permute.xlu0 %1334
  %1338 = vset.pattern.permute.xlu0 0
  %1339 = vperm.xlu0 %1338, %v1189
  %v1340 = vpop.permute.xlu0 %1339
  %1343 = vset.pattern.permute.xlu0 0
  %1344 = vperm.xlu0 %1343, %v1190
  %v1345 = vpop.permute.xlu0 %1344
  %1348 = vset.pattern.permute.xlu0 0
  %1349 = vperm.xlu0 %1348, %v1191
  %v1350 = vpop.permute.xlu0 %1349
  %1353 = vset.pattern.permute.xlu0 0
  %1354 = vperm.xlu0 %1353, %v1192
  %v1355 = vpop.permute.xlu0 %1354
  %1358 = vset.pattern.permute.xlu0 0
  %1359 = vperm.xlu0 %1358, %v1193
  %v1360 = vpop.permute.xlu0 %1359
  %1363 = vset.pattern.permute.xlu0 0
  %1364 = vperm.xlu0 %1363, %v1194
  %v1365 = vpop.permute.xlu0 %1364
  %1368 = vset.pattern.permute.xlu0 0
  %1369 = vperm.xlu0 %1368, %v1195
  %v1370 = vpop.permute.xlu0 %1369
  %1373 = vset.pattern.permute.xlu0 0
  %1374 = vperm.xlu0 %1373, %v1196
  %v1375 = vpop.permute.xlu0 %1374
  %1378 = vset.pattern.permute.xlu0 0
  %1379 = vperm.xlu0 %1378, %v1197
  %v1380 = vpop.permute.xlu0 %1379
  %1383 = vset.pattern.permute.xlu0 0
  %1384 = vperm.xlu0 %1383, %v1198
  %v1385 = vpop.permute.xlu0 %1384
  %1388 = vset.pattern.permute.xlu0 0
  %1389 = vperm.xlu0 %1388, %v1199
  %v1390 = vpop.permute.xlu0 %1389
  %1393 = vset.pattern.permute.xlu0 0
  %1394 = vperm.xlu0 %1393, %v1200
  %v1395 = vpop.permute.xlu0 %1394
  %1398 = vset.pattern.permute.xlu0 0
  %1399 = vperm.xlu0 %1398, %v1201
  %v1400 = vpop.permute.xlu0 %1399
  %1403 = vset.pattern.permute.xlu0 0
  %1404 = vperm.xlu0 %1403, %v1202
  %v1405 = vpop.permute.xlu0 %1404
  %1408 = vset.pattern.permute.xlu0 0
  %1409 = vperm.xlu0 %1408, %v1203
  %v1410 = vpop.permute.xlu0 %1409
  %1413 = vset.pattern.permute.xlu0 0
  %1414 = vperm.xlu0 %1413, %v1204
  %v1415 = vpop.permute.xlu0 %1414
  %1418 = vset.pattern.permute.xlu0 0
  %1419 = vperm.xlu0 %1418, %v1205
  %v1420 = vpop.permute.xlu0 %1419
  %1423 = vset.pattern.permute.xlu0 0
  %1424 = vperm.xlu0 %1423, %v1206
  %v1425 = vpop.permute.xlu0 %1424
  %1428 = vset.pattern.permute.xlu0 0
  %1429 = vperm.xlu0 %1428, %v1207
  %v1430 = vpop.permute.xlu0 %1429
  %1433 = vset.pattern.permute.xlu0 0
  %1434 = vperm.xlu0 %1433, %v1208
  %v1435 = vpop.permute.xlu0 %1434
  %1438 = vset.pattern.permute.xlu0 0
  %1439 = vperm.xlu0 %1438, %v1209
  %v1440 = vpop.permute.xlu0 %1439
  %1443 = vset.pattern.permute.xlu0 0
  %1444 = vperm.xlu0 %1443, %v1210
  %v1445 = vpop.permute.xlu0 %1444
  %1448 = vset.pattern.permute.xlu0 0
  %1449 = vperm.xlu0 %1448, %v1211
  %v1450 = vpop.permute.xlu0 %1449
  %1453 = vset.pattern.permute.xlu0 0
  %1454 = vperm.xlu0 %1453, %v1212
  %v1455 = vpop.permute.xlu0 %1454
  %1458 = vset.pattern.permute.xlu0 0
  %1459 = vperm.xlu0 %1458, %v1213
  %v1460 = vpop.permute.xlu0 %1459
  %1463 = vset.pattern.permute.xlu0 0
  %1464 = vperm.xlu0 %1463, %v1214
  %v1465 = vpop.permute.xlu0 %1464
  %1468 = vset.pattern.permute.xlu0 0
  %1469 = vperm.xlu0 %1468, %v1215
  %v1470 = vpop.permute.xlu0 %1469
  %1473 = vset.pattern.permute.xlu0 0
  %1474 = vperm.xlu0 %1473, %v1216
  %v1475 = vpop.permute.xlu0 %1474
  %1478 = vset.pattern.permute.xlu0 0
  %1479 = vperm.xlu0 %1478, %v1217
  %v1480 = vpop.permute.xlu0 %1479
  %1483 = vset.pattern.permute.xlu0 0
  %1484 = vperm.xlu0 %1483, %v1218
  %v1485 = vpop.permute.xlu0 %1484
  %1488 = vset.pattern.permute.xlu0 0
  %1489 = vperm.xlu0 %1488, %v1219
  %v1490 = vpop.permute.xlu0 %1489
  %1493 = vset.pattern.permute.xlu0 0
  %1494 = vperm.xlu0 %1493, %v1220
  %v1495 = vpop.permute.xlu0 %1494
  %1498 = vset.pattern.permute.xlu0 0
  %1499 = vperm.xlu0 %1498, %v1221
  %v1500 = vpop.permute.xlu0 %1499
  %1503 = vset.pattern.permute.xlu0 0
  %1504 = vperm.xlu0 %1503, %v1222
  %v1505 = vpop.permute.xlu0 %1504
  %1508 = vset.pattern.permute.xlu0 0
  %1509 = vperm.xlu0 %1508, %v1223
  %v1510 = vpop.permute.xlu0 %1509
  %1513 = vset.pattern.permute.xlu0 0
  %1514 = vperm.xlu0 %1513, %v1224
  %v1515 = vpop.permute.xlu0 %1514
  %1518 = vset.pattern.permute.xlu0 0
  %1519 = vperm.xlu0 %1518, %v1225
  %v1520 = vpop.permute.xlu0 %1519
  %1523 = vset.pattern.permute.xlu0 0
  %1524 = vperm.xlu0 %1523, %v1226
  %v1525 = vpop.permute.xlu0 %1524
  %1528 = vset.pattern.permute.xlu0 0
  %1529 = vperm.xlu0 %1528, %v1227
  %v1530 = vpop.permute.xlu0 %1529
  %1533 = vset.pattern.permute.xlu0 0
  %1534 = vperm.xlu0 %1533, %v1228
  %v1535 = vpop.permute.xlu0 %1534
  %1538 = vset.pattern.permute.xlu0 0
  %1539 = vperm.xlu0 %1538, %v1229
  %v1540 = vpop.permute.xlu0 %1539
  %1543 = vset.pattern.permute.xlu0 0
  %1544 = vperm.xlu0 %1543, %v1230
  %v1545 = vpop.permute.xlu0 %1544
  %1548 = vset.pattern.permute.xlu0 0
  %1549 = vperm.xlu0 %1548, %v1231
  %v1550 = vpop.permute.xlu0 %1549
  %v1680 = vunpack.c.l.b16 %v1008
  %v1681 = vunpack.c.h.b16 %v1008
  %v1682 = vunpack.c.l.b16 %v1009
  %v1683 = vunpack.c.h.b16 %v1009
  %v1684 = vunpack.c.l.b16 %v1010
  %v1685 = vunpack.c.h.b16 %v1010
  %v1686 = vunpack.c.l.b16 %v1011
  %v1687 = vunpack.c.h.b16 %v1011
  %v1688 = vunpack.c.l.b16 %v1012
  %v1689 = vunpack.c.h.b16 %v1012
  %v1690 = vunpack.c.l.b16 %v1013
  %v1691 = vunpack.c.h.b16 %v1013
  %v1692 = vunpack.c.l.b16 %v1014
  %v1693 = vunpack.c.h.b16 %v1014
  %v1694 = vunpack.c.l.b16 %v1015
  %v1695 = vunpack.c.h.b16 %v1015
  %v1696 = vunpack.c.l.b16 %v1016
  %v1697 = vunpack.c.h.b16 %v1016
  %v1698 = vunpack.c.l.b16 %v1017
  %v1699 = vunpack.c.h.b16 %v1017
  %v1700 = vunpack.c.l.b16 %v1018
  %v1701 = vunpack.c.h.b16 %v1018
  %v1702 = vunpack.c.l.b16 %v1019
  %v1703 = vunpack.c.h.b16 %v1019
  %v1704 = vunpack.c.l.b16 %v1020
  %v1705 = vunpack.c.h.b16 %v1020
  %v1706 = vunpack.c.l.b16 %v1021
  %v1707 = vunpack.c.h.b16 %v1021
  %v1708 = vunpack.c.l.b16 %v1022
  %v1709 = vunpack.c.h.b16 %v1022
  %v1710 = vunpack.c.l.b16 %v1023
  %v1711 = vunpack.c.h.b16 %v1023
  %v1712 = vunpack.c.l.b16 %v1024
  %v1713 = vunpack.c.h.b16 %v1024
  %v1714 = vunpack.c.l.b16 %v1025
  %v1715 = vunpack.c.h.b16 %v1025
  %v1716 = vunpack.c.l.b16 %v1026
  %v1717 = vunpack.c.h.b16 %v1026
  %v1718 = vunpack.c.l.b16 %v1027
  %v1719 = vunpack.c.h.b16 %v1027
  %v1720 = vunpack.c.l.b16 %v1028
  %v1721 = vunpack.c.h.b16 %v1028
  %v1722 = vunpack.c.l.b16 %v1029
  %v1723 = vunpack.c.h.b16 %v1029
  %v1724 = vunpack.c.l.b16 %v1030
  %v1725 = vunpack.c.h.b16 %v1030
  %v1726 = vunpack.c.l.b16 %v1031
  %v1727 = vunpack.c.h.b16 %v1031
  %v1728 = vunpack.c.l.b16 %v1032
  %v1729 = vunpack.c.h.b16 %v1032
  %v1730 = vunpack.c.l.b16 %v1033
  %v1731 = vunpack.c.h.b16 %v1033
  %v1732 = vunpack.c.l.b16 %v1034
  %v1733 = vunpack.c.h.b16 %v1034
  %v1734 = vunpack.c.l.b16 %v1035
  %v1735 = vunpack.c.h.b16 %v1035
  %v1736 = vunpack.c.l.b16 %v1036
  %v1737 = vunpack.c.h.b16 %v1036
  %v1738 = vunpack.c.l.b16 %v1037
  %v1739 = vunpack.c.h.b16 %v1037
  %v1740 = vunpack.c.l.b16 %v1038
  %v1741 = vunpack.c.h.b16 %v1038
  %v1742 = vunpack.c.l.b16 %v1039
  %v1743 = vunpack.c.h.b16 %v1039
  %v1744 = vunpack.c.l.b16 %v1040
  %v1745 = vunpack.c.h.b16 %v1040
  %v1746 = vunpack.c.l.b16 %v1041
  %v1747 = vunpack.c.h.b16 %v1041
  %v1748 = vunpack.c.l.b16 %v1042
  %v1749 = vunpack.c.h.b16 %v1042
  %v1750 = vunpack.c.l.b16 %v1043
  %v1751 = vunpack.c.h.b16 %v1043
  %v1752 = vunpack.c.l.b16 %v1044
  %v1753 = vunpack.c.h.b16 %v1044
  %v1754 = vunpack.c.l.b16 %v1045
  %v1755 = vunpack.c.h.b16 %v1045
  %v1756 = vunpack.c.l.b16 %v1046
  %v1757 = vunpack.c.h.b16 %v1046
  %v1758 = vunpack.c.l.b16 %v1047
  %v1759 = vunpack.c.h.b16 %v1047
  %v1760 = vunpack.c.l.b16 %v1048
  %v1761 = vunpack.c.h.b16 %v1048
  %v1762 = vunpack.c.l.b16 %v1049
  %v1763 = vunpack.c.h.b16 %v1049
  %v1764 = vunpack.c.l.b16 %v1050
  %v1765 = vunpack.c.h.b16 %v1050
  %v1766 = vunpack.c.l.b16 %v1051
  %v1767 = vunpack.c.h.b16 %v1051
  %v1768 = vunpack.c.l.b16 %v1052
  %v1769 = vunpack.c.h.b16 %v1052
  %v1770 = vunpack.c.l.b16 %v1053
  %v1771 = vunpack.c.h.b16 %v1053
  %v1772 = vunpack.c.l.b16 %v1054
  %v1773 = vunpack.c.h.b16 %v1054
  %v1774 = vunpack.c.l.b16 %v1055
  %v1775 = vunpack.c.h.b16 %v1055
  %v1776 = vunpack.c.l.b16 %v1056
  %v1777 = vunpack.c.h.b16 %v1056
  %v1778 = vunpack.c.l.b16 %v1057
  %v1779 = vunpack.c.h.b16 %v1057
  %v1780 = vunpack.c.l.b16 %v1058
  %v1781 = vunpack.c.h.b16 %v1058
  %v1782 = vunpack.c.l.b16 %v1059
  %v1783 = vunpack.c.h.b16 %v1059
  %v1784 = vunpack.c.l.b16 %v1060
  %v1785 = vunpack.c.h.b16 %v1060
  %v1786 = vunpack.c.l.b16 %v1061
  %v1787 = vunpack.c.h.b16 %v1061
  %v1788 = vunpack.c.l.b16 %v1062
  %v1789 = vunpack.c.h.b16 %v1062
  %v1790 = vunpack.c.l.b16 %v1063
  %v1791 = vunpack.c.h.b16 %v1063
  %v1792 = vunpack.c.l.b16 %v1064
  %v1793 = vunpack.c.h.b16 %v1064
  %v1794 = vunpack.c.l.b16 %v1065
  %v1795 = vunpack.c.h.b16 %v1065
  %v1796 = vunpack.c.l.b16 %v1066
  %v1797 = vunpack.c.h.b16 %v1066
  %v1798 = vunpack.c.l.b16 %v1067
  %v1799 = vunpack.c.h.b16 %v1067
  %v1800 = vunpack.c.l.b16 %v1068
  %v1801 = vunpack.c.h.b16 %v1068
  %v1802 = vunpack.c.l.b16 %v1069
  %v1803 = vunpack.c.h.b16 %v1069
  %v1804 = vunpack.c.l.b16 %v1070
  %v1805 = vunpack.c.h.b16 %v1070
  %v1806 = vunpack.c.l.b16 %v1071
  %v1807 = vunpack.c.h.b16 %v1071
  %v1808 = vunpack.c.l.b16 %v1072
  %v1809 = vunpack.c.h.b16 %v1072
  %v1810 = vunpack.c.l.b16 %v1073
  %v1811 = vunpack.c.h.b16 %v1073
  %v1812 = vunpack.c.l.b16 %v1074
  %v1813 = vunpack.c.h.b16 %v1074
  %v1814 = vunpack.c.l.b16 %v1075
  %v1815 = vunpack.c.h.b16 %v1075
  %v1816 = vunpack.c.l.b16 %v1076
  %v1817 = vunpack.c.h.b16 %v1076
  %v1818 = vunpack.c.l.b16 %v1077
  %v1819 = vunpack.c.h.b16 %v1077
  %v1820 = vunpack.c.l.b16 %v1078
  %v1821 = vunpack.c.h.b16 %v1078
  %v1822 = vunpack.c.l.b16 %v1079
  %v1823 = vunpack.c.h.b16 %v1079
  %v1824 = vunpack.c.l.b16 %v1080
  %v1825 = vunpack.c.h.b16 %v1080
  %v1826 = vunpack.c.l.b16 %v1081
  %v1827 = vunpack.c.h.b16 %v1081
  %v1828 = vunpack.c.l.b16 %v1082
  %v1829 = vunpack.c.h.b16 %v1082
  %v1830 = vunpack.c.l.b16 %v1083
  %v1831 = vunpack.c.h.b16 %v1083
  %v1832 = vunpack.c.l.b16 %v1084
  %v1833 = vunpack.c.h.b16 %v1084
  %v1834 = vunpack.c.l.b16 %v1085
  %v1835 = vunpack.c.h.b16 %v1085
  %v1836 = vunpack.c.l.b16 %v1086
  %v1837 = vunpack.c.h.b16 %v1086
  %v1838 = vunpack.c.l.b16 %v1087
  %v1839 = vunpack.c.h.b16 %v1087
  %v1840 = vunpack.c.l.b16 %v1088
  %v1841 = vunpack.c.h.b16 %v1088
  %v1842 = vunpack.c.l.b16 %v1089
  %v1843 = vunpack.c.h.b16 %v1089
  %v1844 = vunpack.c.l.b16 %v1090
  %v1845 = vunpack.c.h.b16 %v1090
  %v1846 = vunpack.c.l.b16 %v1091
  %v1847 = vunpack.c.h.b16 %v1091
  %v1848 = vunpack.c.l.b16 %v1092
  %v1849 = vunpack.c.h.b16 %v1092
  %v1850 = vunpack.c.l.b16 %v1093
  %v1851 = vunpack.c.h.b16 %v1093
  %v1852 = vunpack.c.l.b16 %v1094
  %v1853 = vunpack.c.h.b16 %v1094
  %v1854 = vunpack.c.l.b16 %v1095
  %v1855 = vunpack.c.h.b16 %v1095
  %v1856 = vunpack.c.l.b16 %v1096
  %v1857 = vunpack.c.h.b16 %v1096
  %v1858 = vunpack.c.l.b16 %v1097
  %v1859 = vunpack.c.h.b16 %v1097
  %v1860 = vunpack.c.l.b16 %v1098
  %v1861 = vunpack.c.h.b16 %v1098
  %v1862 = vunpack.c.l.b16 %v1099
  %v1863 = vunpack.c.h.b16 %v1099
  %v1864 = vunpack.c.l.b16 %v1100
  %v1865 = vunpack.c.h.b16 %v1100
  %v1866 = vunpack.c.l.b16 %v1101
  %v1867 = vunpack.c.h.b16 %v1101
  %v1868 = vunpack.c.l.b16 %v1102
  %v1869 = vunpack.c.h.b16 %v1102
  %v1870 = vunpack.c.l.b16 %v1103
  %v1871 = vunpack.c.h.b16 %v1103
  %v1872 = vunpack.c.l.b16 %v1104
  %v1873 = vunpack.c.h.b16 %v1104
  %v1874 = vunpack.c.l.b16 %v1105
  %v1875 = vunpack.c.h.b16 %v1105
  %v1876 = vunpack.c.l.b16 %v1106
  %v1877 = vunpack.c.h.b16 %v1106
  %v1878 = vunpack.c.l.b16 %v1107
  %v1879 = vunpack.c.h.b16 %v1107
  %v1880 = vunpack.c.l.b16 %v1108
  %v1881 = vunpack.c.h.b16 %v1108
  %v1882 = vunpack.c.l.b16 %v1109
  %v1883 = vunpack.c.h.b16 %v1109
  %v1884 = vunpack.c.l.b16 %v1110
  %v1885 = vunpack.c.h.b16 %v1110
  %v1886 = vunpack.c.l.b16 %v1111
  %v1887 = vunpack.c.h.b16 %v1111
  %v1888 = vunpack.c.l.b16 %v1112
  %v1889 = vunpack.c.h.b16 %v1112
  %v1890 = vunpack.c.l.b16 %v1113
  %v1891 = vunpack.c.h.b16 %v1113
  %v1892 = vunpack.c.l.b16 %v1114
  %v1893 = vunpack.c.h.b16 %v1114
  %v1894 = vunpack.c.l.b16 %v1115
  %v1895 = vunpack.c.h.b16 %v1115
  %v1896 = vunpack.c.l.b16 %v1116
  %v1897 = vunpack.c.h.b16 %v1116
  %v1898 = vunpack.c.l.b16 %v1117
  %v1899 = vunpack.c.h.b16 %v1117
  %v1900 = vunpack.c.l.b16 %v1118
  %v1901 = vunpack.c.h.b16 %v1118
  %v1902 = vunpack.c.l.b16 %v1119
  %v1903 = vunpack.c.h.b16 %v1119
  %v1904 = vunpack.c.l.b16 %v1120
  %v1905 = vunpack.c.h.b16 %v1120
  %v1906 = vunpack.c.l.b16 %v1121
  %v1907 = vunpack.c.h.b16 %v1121
  %v1908 = vunpack.c.l.b16 %v1122
  %v1909 = vunpack.c.h.b16 %v1122
  %v1910 = vunpack.c.l.b16 %v1123
  %v1911 = vunpack.c.h.b16 %v1123
  %v1912 = vunpack.c.l.b16 %v1124
  %v1913 = vunpack.c.h.b16 %v1124
  %v1914 = vunpack.c.l.b16 %v1125
  %v1915 = vunpack.c.h.b16 %v1125
  %v1916 = vunpack.c.l.b16 %v1126
  %v1917 = vunpack.c.h.b16 %v1126
  %v1918 = vunpack.c.l.b16 %v1127
  %v1919 = vunpack.c.h.b16 %v1127
  %v1920 = vunpack.c.l.b16 %v1128
  %v1921 = vunpack.c.h.b16 %v1128
  %v1922 = vunpack.c.l.b16 %v1129
  %v1923 = vunpack.c.h.b16 %v1129
  %v1924 = vunpack.c.l.b16 %v1130
  %v1925 = vunpack.c.h.b16 %v1130
  %v1926 = vunpack.c.l.b16 %v1131
  %v1927 = vunpack.c.h.b16 %v1131
  %v1928 = vunpack.c.l.b16 %v1132
  %v1929 = vunpack.c.h.b16 %v1132
  %v1930 = vunpack.c.l.b16 %v1133
  %v1931 = vunpack.c.h.b16 %v1133
  %v1932 = vunpack.c.l.b16 %v1134
  %v1933 = vunpack.c.h.b16 %v1134
  %v1934 = vunpack.c.l.b16 %v1135
  %v1935 = vunpack.c.h.b16 %v1135
  %v1936 = vpack.c.b16 %v1684, %v1680
  %v1937 = vpack.c.b16 %v1685, %v1681
  %v1938 = vpack.c.b16 %v1686, %v1682
  %v1939 = vpack.c.b16 %v1687, %v1683
  %v1940 = vpack.c.b16 %v1692, %v1688
  %v1941 = vpack.c.b16 %v1693, %v1689
  %v1942 = vpack.c.b16 %v1694, %v1690
  %v1943 = vpack.c.b16 %v1695, %v1691
  %v1944 = vpack.c.b16 %v1700, %v1696
  %v1945 = vpack.c.b16 %v1701, %v1697
  %v1946 = vpack.c.b16 %v1702, %v1698
  %v1947 = vpack.c.b16 %v1703, %v1699
  %v1948 = vpack.c.b16 %v1708, %v1704
  %v1949 = vpack.c.b16 %v1709, %v1705
  %v1950 = vpack.c.b16 %v1710, %v1706
  %v1951 = vpack.c.b16 %v1711, %v1707
  %v1952 = vpack.c.b16 %v1716, %v1712
  %v1953 = vpack.c.b16 %v1717, %v1713
  %v1954 = vpack.c.b16 %v1718, %v1714
  %v1955 = vpack.c.b16 %v1719, %v1715
  %v1956 = vpack.c.b16 %v1724, %v1720
  %v1957 = vpack.c.b16 %v1725, %v1721
  %v1958 = vpack.c.b16 %v1726, %v1722
  %v1959 = vpack.c.b16 %v1727, %v1723
  %v1960 = vpack.c.b16 %v1732, %v1728
  %v1961 = vpack.c.b16 %v1733, %v1729
  %v1962 = vpack.c.b16 %v1734, %v1730
  %v1963 = vpack.c.b16 %v1735, %v1731
  %v1964 = vpack.c.b16 %v1740, %v1736
  %v1965 = vpack.c.b16 %v1741, %v1737
  %v1966 = vpack.c.b16 %v1742, %v1738
  %v1967 = vpack.c.b16 %v1743, %v1739
  %v1968 = vpack.c.b16 %v1748, %v1744
  %v1969 = vpack.c.b16 %v1749, %v1745
  %v1970 = vpack.c.b16 %v1750, %v1746
  %v1971 = vpack.c.b16 %v1751, %v1747
  %v1972 = vpack.c.b16 %v1756, %v1752
  %v1973 = vpack.c.b16 %v1757, %v1753
  %v1974 = vpack.c.b16 %v1758, %v1754
  %v1975 = vpack.c.b16 %v1759, %v1755
  %v1976 = vpack.c.b16 %v1764, %v1760
  %v1977 = vpack.c.b16 %v1765, %v1761
  %v1978 = vpack.c.b16 %v1766, %v1762
  %v1979 = vpack.c.b16 %v1767, %v1763
  %v1980 = vpack.c.b16 %v1772, %v1768
  %v1981 = vpack.c.b16 %v1773, %v1769
  %v1982 = vpack.c.b16 %v1774, %v1770
  %v1983 = vpack.c.b16 %v1775, %v1771
  %v1984 = vpack.c.b16 %v1780, %v1776
  %v1985 = vpack.c.b16 %v1781, %v1777
  %v1986 = vpack.c.b16 %v1782, %v1778
  %v1987 = vpack.c.b16 %v1783, %v1779
  %v1988 = vpack.c.b16 %v1788, %v1784
  %v1989 = vpack.c.b16 %v1789, %v1785
  %v1990 = vpack.c.b16 %v1790, %v1786
  %v1991 = vpack.c.b16 %v1791, %v1787
  %v1992 = vpack.c.b16 %v1796, %v1792
  %v1993 = vpack.c.b16 %v1797, %v1793
  %v1994 = vpack.c.b16 %v1798, %v1794
  %v1995 = vpack.c.b16 %v1799, %v1795
  %v1996 = vpack.c.b16 %v1804, %v1800
  %v1997 = vpack.c.b16 %v1805, %v1801
  %v1998 = vpack.c.b16 %v1806, %v1802
  %v1999 = vpack.c.b16 %v1807, %v1803
  %v2000 = vpack.c.b16 %v1812, %v1808
  %v2001 = vpack.c.b16 %v1813, %v1809
  %v2002 = vpack.c.b16 %v1814, %v1810
  %v2003 = vpack.c.b16 %v1815, %v1811
  %v2004 = vpack.c.b16 %v1820, %v1816
  %v2005 = vpack.c.b16 %v1821, %v1817
  %v2006 = vpack.c.b16 %v1822, %v1818
  %v2007 = vpack.c.b16 %v1823, %v1819
  %v2008 = vpack.c.b16 %v1828, %v1824
  %v2009 = vpack.c.b16 %v1829, %v1825
  %v2010 = vpack.c.b16 %v1830, %v1826
  %v2011 = vpack.c.b16 %v1831, %v1827
  %v2012 = vpack.c.b16 %v1836, %v1832
  %v2013 = vpack.c.b16 %v1837, %v1833
  %v2014 = vpack.c.b16 %v1838, %v1834
  %v2015 = vpack.c.b16 %v1839, %v1835
  %v2016 = vpack.c.b16 %v1844, %v1840
  %v2017 = vpack.c.b16 %v1845, %v1841
  %v2018 = vpack.c.b16 %v1846, %v1842
  %v2019 = vpack.c.b16 %v1847, %v1843
  %v2020 = vpack.c.b16 %v1852, %v1848
  %v2021 = vpack.c.b16 %v1853, %v1849
  %v2022 = vpack.c.b16 %v1854, %v1850
  %v2023 = vpack.c.b16 %v1855, %v1851
  %v2024 = vpack.c.b16 %v1860, %v1856
  %v2025 = vpack.c.b16 %v1861, %v1857
  %v2026 = vpack.c.b16 %v1862, %v1858
  %v2027 = vpack.c.b16 %v1863, %v1859
  %v2028 = vpack.c.b16 %v1868, %v1864
  %v2029 = vpack.c.b16 %v1869, %v1865
  %v2030 = vpack.c.b16 %v1870, %v1866
  %v2031 = vpack.c.b16 %v1871, %v1867
  %v2032 = vpack.c.b16 %v1876, %v1872
  %v2033 = vpack.c.b16 %v1877, %v1873
  %v2034 = vpack.c.b16 %v1878, %v1874
  %v2035 = vpack.c.b16 %v1879, %v1875
  %v2036 = vpack.c.b16 %v1884, %v1880
  %v2037 = vpack.c.b16 %v1885, %v1881
  %v2038 = vpack.c.b16 %v1886, %v1882
  %v2039 = vpack.c.b16 %v1887, %v1883
  %v2040 = vpack.c.b16 %v1892, %v1888
  %v2041 = vpack.c.b16 %v1893, %v1889
  %v2042 = vpack.c.b16 %v1894, %v1890
  %v2043 = vpack.c.b16 %v1895, %v1891
  %v2044 = vpack.c.b16 %v1900, %v1896
  %v2045 = vpack.c.b16 %v1901, %v1897
  %v2046 = vpack.c.b16 %v1902, %v1898
  %v2047 = vpack.c.b16 %v1903, %v1899
  %v2048 = vpack.c.b16 %v1908, %v1904
  %v2049 = vpack.c.b16 %v1909, %v1905
  %v2050 = vpack.c.b16 %v1910, %v1906
  %v2051 = vpack.c.b16 %v1911, %v1907
  %v2052 = vpack.c.b16 %v1916, %v1912
  %v2053 = vpack.c.b16 %v1917, %v1913
  %v2054 = vpack.c.b16 %v1918, %v1914
  %v2055 = vpack.c.b16 %v1919, %v1915
  %v2056 = vpack.c.b16 %v1924, %v1920
  %v2057 = vpack.c.b16 %v1925, %v1921
  %v2058 = vpack.c.b16 %v1926, %v1922
  %v2059 = vpack.c.b16 %v1927, %v1923
  %v2060 = vpack.c.b16 %v1932, %v1928
  %v2061 = vpack.c.b16 %v1933, %v1929
  %v2062 = vpack.c.b16 %v1934, %v1930
  %v2063 = vpack.c.b16 %v1935, %v1931
  %2192 = vmatprep.subr.bf16.mxu0 0
  %2193 = vmatpush1.bf16.msra.mxu0 %v1143
  %2194 = vmatprep.subr.bf16.mxu0 0
  %2195 = vmatpush1.bf16.msra.mxu0 %v1142
  %2196 = vmatprep.subr.bf16.mxu0 0
  %2197 = vmatpush1.bf16.msra.mxu0 %v1141
  %2198 = vmatprep.subr.bf16.mxu0 0
  %2199 = vmatpush1.bf16.msra.mxu0 %v1140
  %2200 = vmatprep.subr.bf16.mxu0 0
  %2201 = vmatpush1.bf16.msra.mxu0 %v1139
  %2202 = vmatprep.subr.bf16.mxu0 0
  %2203 = vmatpush1.bf16.msra.mxu0 %v1138
  %2204 = vmatprep.subr.bf16.mxu0 0
  %2205 = vmatpush1.bf16.msra.mxu0 %v1137
  %2206 = vmatprep.subr.bf16.mxu0 0
  %2207 = vmatpush1.bf16.msra.mxu0 %v1136
  %2208 = vmatprep.subr.bf16.mxu0 0
  %2209 = vmatpush2.bf16.msra.mxu0 %v1151
  %2210 = vmatprep.subr.bf16.mxu0 0
  %2211 = vmatpush2.bf16.msra.mxu0 %v1150
  %2212 = vmatprep.subr.bf16.mxu0 0
  %2213 = vmatpush2.bf16.msra.mxu0 %v1149
  %2214 = vmatprep.subr.bf16.mxu0 0
  %2215 = vmatpush2.bf16.msra.mxu0 %v1148
  %2216 = vmatprep.subr.bf16.mxu0 0
  %2217 = vmatpush2.bf16.msra.mxu0 %v1147
  %2218 = vmatprep.subr.bf16.mxu0 0
  %2219 = vmatpush2.bf16.msra.mxu0 %v1146
  %2220 = vmatprep.subr.bf16.mxu0 0
  %2221 = vmatpush2.bf16.msra.mxu0 %v1145
  %2222 = vmatprep.subr.bf16.mxu0 0
  %2223 = vmatpush2.bf16.msra.mxu0 %v1144
  %2224 = vmatprep.mubr.bf16.mxu0 %v1937
  %2225 = vmatmul.mubr.bf16.gmra.mxu0 %v1936
  %v2226 = vpop.f32.mrf.mxu0
  %v2227 = vadd.f32 %v1235, %v2226
  %v2228 = vpop.f32.mrf.mxu0
  %v2229 = vpop.f32.mrf.mxu0
  %v2230 = vadd.f32 %v1240, %v2229
  %v2231 = vpop.f32.mrf.mxu0
  %2232 = vmatprep.mubr.bf16.mxu0 %v1941
  %2233 = vmatmul.mubr.bf16.gmra.mxu0 %v1940
  %v2234 = vpop.f32.mrf.mxu0
  %v2235 = vadd.f32 %v1245, %v2234
  %v2236 = vpop.f32.mrf.mxu0
  %v2237 = vpop.f32.mrf.mxu0
  %v2238 = vadd.f32 %v1250, %v2237
  %v2239 = vpop.f32.mrf.mxu0
  %2240 = vmatprep.mubr.bf16.mxu0 %v1945
  %2241 = vmatmul.mubr.bf16.gmra.mxu0 %v1944
  %v2242 = vpop.f32.mrf.mxu0
  %v2243 = vadd.f32 %v1255, %v2242
  %v2244 = vpop.f32.mrf.mxu0
  %v2245 = vpop.f32.mrf.mxu0
  %v2246 = vadd.f32 %v1260, %v2245
  %v2247 = vpop.f32.mrf.mxu0
  %2248 = vmatprep.mubr.bf16.mxu0 %v1949
  %2249 = vmatmul.mubr.bf16.gmra.mxu0 %v1948
  %v2250 = vpop.f32.mrf.mxu0
  %v2251 = vadd.f32 %v1265, %v2250
  %v2252 = vpop.f32.mrf.mxu0
  %v2253 = vpop.f32.mrf.mxu0
  %v2254 = vadd.f32 %v1270, %v2253
  %v2255 = vpop.f32.mrf.mxu0
  %2256 = vmatprep.mubr.bf16.mxu0 %v1953
  %2257 = vmatmul.mubr.bf16.gmra.mxu0 %v1952
  %v2258 = vpop.f32.mrf.mxu0
  %v2259 = vadd.f32 %v1275, %v2258
  %v2260 = vpop.f32.mrf.mxu0
  %v2261 = vpop.f32.mrf.mxu0
  %v2262 = vadd.f32 %v1280, %v2261
  %v2263 = vpop.f32.mrf.mxu0
  %2264 = vmatprep.mubr.bf16.mxu0 %v1957
  %2265 = vmatmul.mubr.bf16.gmra.mxu0 %v1956
  %v2266 = vpop.f32.mrf.mxu0
  %v2267 = vadd.f32 %v1285, %v2266
  %v2268 = vpop.f32.mrf.mxu0
  %v2269 = vpop.f32.mrf.mxu0
  %v2270 = vadd.f32 %v1290, %v2269
  %v2271 = vpop.f32.mrf.mxu0
  %2272 = vmatprep.mubr.bf16.mxu0 %v1961
  %2273 = vmatmul.mubr.bf16.gmra.mxu0 %v1960
  %v2274 = vpop.f32.mrf.mxu0
  %v2275 = vadd.f32 %v1295, %v2274
  %v2276 = vpop.f32.mrf.mxu0
  %v2277 = vpop.f32.mrf.mxu0
  %v2278 = vadd.f32 %v1300, %v2277
  %v2279 = vpop.f32.mrf.mxu0
  %2280 = vmatprep.mubr.bf16.mxu0 %v1965
  %2281 = vmatmul.mubr.bf16.gmra.mxu0 %v1964
  %v2282 = vpop.f32.mrf.mxu0
  %v2283 = vadd.f32 %v1305, %v2282
  %v2284 = vpop.f32.mrf.mxu0
  %v2285 = vpop.f32.mrf.mxu0
  %v2286 = vadd.f32 %v1310, %v2285
  %v2287 = vpop.f32.mrf.mxu0
  %2288 = vmatprep.mubr.bf16.mxu0 %v1969
  %2289 = vmatmul.mubr.bf16.gmra.mxu0 %v1968
  %v2290 = vpop.f32.mrf.mxu0
  %v2291 = vadd.f32 %v1315, %v2290
  %v2292 = vpop.f32.mrf.mxu0
  %v2293 = vpop.f32.mrf.mxu0
  %v2294 = vadd.f32 %v1320, %v2293
  %v2295 = vpop.f32.mrf.mxu0
  %2296 = vmatprep.mubr.bf16.mxu0 %v1973
  %2297 = vmatmul.mubr.bf16.gmra.mxu0 %v1972
  %v2298 = vpop.f32.mrf.mxu0
  %v2299 = vadd.f32 %v1325, %v2298
  %v2300 = vpop.f32.mrf.mxu0
  %v2301 = vpop.f32.mrf.mxu0
  %v2302 = vadd.f32 %v1330, %v2301
  %v2303 = vpop.f32.mrf.mxu0
  %2304 = vmatprep.mubr.bf16.mxu0 %v1977
  %2305 = vmatmul.mubr.bf16.gmra.mxu0 %v1976
  %v2306 = vpop.f32.mrf.mxu0
  %v2307 = vadd.f32 %v1335, %v2306
  %v2308 = vpop.f32.mrf.mxu0
  %v2309 = vpop.f32.mrf.mxu0
  %v2310 = vadd.f32 %v1340, %v2309
  %v2311 = vpop.f32.mrf.mxu0
  %2312 = vmatprep.mubr.bf16.mxu0 %v1981
  %2313 = vmatmul.mubr.bf16.gmra.mxu0 %v1980
  %v2314 = vpop.f32.mrf.mxu0
  %v2315 = vadd.f32 %v1345, %v2314
  %v2316 = vpop.f32.mrf.mxu0
  %v2317 = vpop.f32.mrf.mxu0
  %v2318 = vadd.f32 %v1350, %v2317
  %v2319 = vpop.f32.mrf.mxu0
  %2320 = vmatprep.mubr.bf16.mxu0 %v1985
  %2321 = vmatmul.mubr.bf16.gmra.mxu0 %v1984
  %v2322 = vpop.f32.mrf.mxu0
  %v2323 = vadd.f32 %v1355, %v2322
  %v2324 = vpop.f32.mrf.mxu0
  %v2325 = vpop.f32.mrf.mxu0
  %v2326 = vadd.f32 %v1360, %v2325
  %v2327 = vpop.f32.mrf.mxu0
  %2328 = vmatprep.mubr.bf16.mxu0 %v1989
  %2329 = vmatmul.mubr.bf16.gmra.mxu0 %v1988
  %v2330 = vpop.f32.mrf.mxu0
  %v2331 = vadd.f32 %v1365, %v2330
  %v2332 = vpop.f32.mrf.mxu0
  %v2333 = vpop.f32.mrf.mxu0
  %v2334 = vadd.f32 %v1370, %v2333
  %v2335 = vpop.f32.mrf.mxu0
  %2336 = vmatprep.mubr.bf16.mxu0 %v1993
  %2337 = vmatmul.mubr.bf16.gmra.mxu0 %v1992
  %v2338 = vpop.f32.mrf.mxu0
  %v2339 = vadd.f32 %v1375, %v2338
  %v2340 = vpop.f32.mrf.mxu0
  %v2341 = vpop.f32.mrf.mxu0
  %v2342 = vadd.f32 %v1380, %v2341
  %v2343 = vpop.f32.mrf.mxu0
  %2344 = vmatprep.mubr.bf16.mxu0 %v1997
  %2345 = vmatmul.mubr.bf16.gmra.mxu0 %v1996
  %v2346 = vpop.f32.mrf.mxu0
  %v2347 = vadd.f32 %v1385, %v2346
  %v2348 = vpop.f32.mrf.mxu0
  %v2349 = vpop.f32.mrf.mxu0
  %v2350 = vadd.f32 %v1390, %v2349
  %v2351 = vpop.f32.mrf.mxu0
  %2352 = vmatprep.mubr.bf16.mxu0 %v2001
  %2353 = vmatmul.mubr.bf16.gmra.mxu0 %v2000
  %v2354 = vpop.f32.mrf.mxu0
  %v2355 = vadd.f32 %v1395, %v2354
  %v2356 = vpop.f32.mrf.mxu0
  %v2357 = vpop.f32.mrf.mxu0
  %v2358 = vadd.f32 %v1400, %v2357
  %v2359 = vpop.f32.mrf.mxu0
  %2360 = vmatprep.mubr.bf16.mxu0 %v2005
  %2361 = vmatmul.mubr.bf16.gmra.mxu0 %v2004
  %v2362 = vpop.f32.mrf.mxu0
  %v2363 = vadd.f32 %v1405, %v2362
  %v2364 = vpop.f32.mrf.mxu0
  %v2365 = vpop.f32.mrf.mxu0
  %v2366 = vadd.f32 %v1410, %v2365
  %v2367 = vpop.f32.mrf.mxu0
  %2368 = vmatprep.mubr.bf16.mxu0 %v2009
  %2369 = vmatmul.mubr.bf16.gmra.mxu0 %v2008
  %v2370 = vpop.f32.mrf.mxu0
  %v2371 = vadd.f32 %v1415, %v2370
  %v2372 = vpop.f32.mrf.mxu0
  %v2373 = vpop.f32.mrf.mxu0
  %v2374 = vadd.f32 %v1420, %v2373
  %v2375 = vpop.f32.mrf.mxu0
  %2376 = vmatprep.mubr.bf16.mxu0 %v2013
  %2377 = vmatmul.mubr.bf16.gmra.mxu0 %v2012
  %v2378 = vpop.f32.mrf.mxu0
  %v2379 = vadd.f32 %v1425, %v2378
  %v2380 = vpop.f32.mrf.mxu0
  %v2381 = vpop.f32.mrf.mxu0
  %v2382 = vadd.f32 %v1430, %v2381
  %v2383 = vpop.f32.mrf.mxu0
  %2384 = vmatprep.mubr.bf16.mxu0 %v2017
  %2385 = vmatmul.mubr.bf16.gmra.mxu0 %v2016
  %v2386 = vpop.f32.mrf.mxu0
  %v2387 = vadd.f32 %v1435, %v2386
  %v2388 = vpop.f32.mrf.mxu0
  %v2389 = vpop.f32.mrf.mxu0
  %v2390 = vadd.f32 %v1440, %v2389
  %v2391 = vpop.f32.mrf.mxu0
  %2392 = vmatprep.mubr.bf16.mxu0 %v2021
  %2393 = vmatmul.mubr.bf16.gmra.mxu0 %v2020
  %v2394 = vpop.f32.mrf.mxu0
  %v2395 = vadd.f32 %v1445, %v2394
  %v2396 = vpop.f32.mrf.mxu0
  %v2397 = vpop.f32.mrf.mxu0
  %v2398 = vadd.f32 %v1450, %v2397
  %v2399 = vpop.f32.mrf.mxu0
  %2400 = vmatprep.mubr.bf16.mxu0 %v2025
  %2401 = vmatmul.mubr.bf16.gmra.mxu0 %v2024
  %v2402 = vpop.f32.mrf.mxu0
  %v2403 = vadd.f32 %v1455, %v2402
  %v2404 = vpop.f32.mrf.mxu0
  %v2405 = vpop.f32.mrf.mxu0
  %v2406 = vadd.f32 %v1460, %v2405
  %v2407 = vpop.f32.mrf.mxu0
  %2408 = vmatprep.mubr.bf16.mxu0 %v2029
  %2409 = vmatmul.mubr.bf16.gmra.mxu0 %v2028
  %v2410 = vpop.f32.mrf.mxu0
  %v2411 = vadd.f32 %v1465, %v2410
  %v2412 = vpop.f32.mrf.mxu0
  %v2413 = vpop.f32.mrf.mxu0
  %v2414 = vadd.f32 %v1470, %v2413
  %v2415 = vpop.f32.mrf.mxu0
  %2416 = vmatprep.mubr.bf16.mxu0 %v2033
  %2417 = vmatmul.mubr.bf16.gmra.mxu0 %v2032
  %v2418 = vpop.f32.mrf.mxu0
  %v2419 = vadd.f32 %v1475, %v2418
  %v2420 = vpop.f32.mrf.mxu0
  %v2421 = vpop.f32.mrf.mxu0
  %v2422 = vadd.f32 %v1480, %v2421
  %v2423 = vpop.f32.mrf.mxu0
  %2424 = vmatprep.mubr.bf16.mxu0 %v2037
  %2425 = vmatmul.mubr.bf16.gmra.mxu0 %v2036
  %v2426 = vpop.f32.mrf.mxu0
  %v2427 = vadd.f32 %v1485, %v2426
  %v2428 = vpop.f32.mrf.mxu0
  %v2429 = vpop.f32.mrf.mxu0
  %v2430 = vadd.f32 %v1490, %v2429
  %v2431 = vpop.f32.mrf.mxu0
  %2432 = vmatprep.mubr.bf16.mxu0 %v2041
  %2433 = vmatmul.mubr.bf16.gmra.mxu0 %v2040
  %v2434 = vpop.f32.mrf.mxu0
  %v2435 = vadd.f32 %v1495, %v2434
  %v2436 = vpop.f32.mrf.mxu0
  %v2437 = vpop.f32.mrf.mxu0
  %v2438 = vadd.f32 %v1500, %v2437
  %v2439 = vpop.f32.mrf.mxu0
  %2440 = vmatprep.mubr.bf16.mxu0 %v2045
  %2441 = vmatmul.mubr.bf16.gmra.mxu0 %v2044
  %v2442 = vpop.f32.mrf.mxu0
  %v2443 = vadd.f32 %v1505, %v2442
  %v2444 = vpop.f32.mrf.mxu0
  %v2445 = vpop.f32.mrf.mxu0
  %v2446 = vadd.f32 %v1510, %v2445
  %v2447 = vpop.f32.mrf.mxu0
  %2448 = vmatprep.mubr.bf16.mxu0 %v2049
  %2449 = vmatmul.mubr.bf16.gmra.mxu0 %v2048
  %v2450 = vpop.f32.mrf.mxu0
  %v2451 = vadd.f32 %v1515, %v2450
  %v2452 = vpop.f32.mrf.mxu0
  %v2453 = vpop.f32.mrf.mxu0
  %v2454 = vadd.f32 %v1520, %v2453
  %v2455 = vpop.f32.mrf.mxu0
  %2456 = vmatprep.mubr.bf16.mxu0 %v2053
  %2457 = vmatmul.mubr.bf16.gmra.mxu0 %v2052
  %v2458 = vpop.f32.mrf.mxu0
  %v2459 = vadd.f32 %v1525, %v2458
  %v2460 = vpop.f32.mrf.mxu0
  %v2461 = vpop.f32.mrf.mxu0
  %v2462 = vadd.f32 %v1530, %v2461
  %v2463 = vpop.f32.mrf.mxu0
  %2464 = vmatprep.mubr.bf16.mxu0 %v2057
  %2465 = vmatmul.mubr.bf16.gmra.mxu0 %v2056
  %v2466 = vpop.f32.mrf.mxu0
  %v2467 = vadd.f32 %v1535, %v2466
  %v2468 = vpop.f32.mrf.mxu0
  %v2469 = vpop.f32.mrf.mxu0
  %v2470 = vadd.f32 %v1540, %v2469
  %v2471 = vpop.f32.mrf.mxu0
  %2472 = vmatprep.mubr.bf16.mxu0 %v2061
  %2473 = vmatmul.mubr.bf16.gmra.mxu0 %v2060
  %v2474 = vpop.f32.mrf.mxu0
  %v2475 = vadd.f32 %v1545, %v2474
  %v2476 = vpop.f32.mrf.mxu0
  %v2477 = vpop.f32.mrf.mxu0
  %v2478 = vadd.f32 %v1550, %v2477
  %v2479 = vpop.f32.mrf.mxu0
  %2480 = vdwg.mxu0
  %2481 = vmatprep.subr.bf16.mxu0 0
  %2482 = vmatpush1.bf16.msra.mxu0 %v1159
  %2483 = vmatprep.subr.bf16.mxu0 0
  %2484 = vmatpush1.bf16.msra.mxu0 %v1158
  %2485 = vmatprep.subr.bf16.mxu0 0
  %2486 = vmatpush1.bf16.msra.mxu0 %v1157
  %2487 = vmatprep.subr.bf16.mxu0 0
  %2488 = vmatpush1.bf16.msra.mxu0 %v1156
  %2489 = vmatprep.subr.bf16.mxu0 0
  %2490 = vmatpush1.bf16.msra.mxu0 %v1155
  %2491 = vmatprep.subr.bf16.mxu0 0
  %2492 = vmatpush1.bf16.msra.mxu0 %v1154
  %2493 = vmatprep.subr.bf16.mxu0 0
  %2494 = vmatpush1.bf16.msra.mxu0 %v1153
  %2495 = vmatprep.subr.bf16.mxu0 0
  %2496 = vmatpush1.bf16.msra.mxu0 %v1152
  %2497 = vmatprep.subr.bf16.mxu0 0
  %2498 = vmatpush2.bf16.msra.mxu0 %v1167
  %2499 = vmatprep.subr.bf16.mxu0 0
  %2500 = vmatpush2.bf16.msra.mxu0 %v1166
  %2501 = vmatprep.subr.bf16.mxu0 0
  %2502 = vmatpush2.bf16.msra.mxu0 %v1165
  %2503 = vmatprep.subr.bf16.mxu0 0
  %2504 = vmatpush2.bf16.msra.mxu0 %v1164
  %2505 = vmatprep.subr.bf16.mxu0 0
  %2506 = vmatpush2.bf16.msra.mxu0 %v1163
  %2507 = vmatprep.subr.bf16.mxu0 0
  %2508 = vmatpush2.bf16.msra.mxu0 %v1162
  %2509 = vmatprep.subr.bf16.mxu0 0
  %2510 = vmatpush2.bf16.msra.mxu0 %v1161
  %2511 = vmatprep.subr.bf16.mxu0 0
  %2512 = vmatpush2.bf16.msra.mxu0 %v1160
  %2513 = vmatprep.mubr.bf16.mxu0 %v1939
  %2514 = vmatmul.mubr.bf16.gmra.mxu0 %v1938
  %v2515 = vpop.f32.mrf.mxu0
  %v2516 = vadd.f32 %v2227, %v2515
  %v2517 = vpop.f32.mrf.mxu0
  %v2518 = vpop.f32.mrf.mxu0
  %v2519 = vadd.f32 %v2230, %v2518
  %v2520 = vpop.f32.mrf.mxu0
  %2521 = vmatprep.mubr.bf16.mxu0 %v1943
  %2522 = vmatmul.mubr.bf16.gmra.mxu0 %v1942
  %v2523 = vpop.f32.mrf.mxu0
  %v2524 = vadd.f32 %v2235, %v2523
  %v2525 = vpop.f32.mrf.mxu0
  %v2526 = vpop.f32.mrf.mxu0
  %v2527 = vadd.f32 %v2238, %v2526
  %v2528 = vpop.f32.mrf.mxu0
  %2529 = vmatprep.mubr.bf16.mxu0 %v1947
  %2530 = vmatmul.mubr.bf16.gmra.mxu0 %v1946
  %v2531 = vpop.f32.mrf.mxu0
  %v2532 = vadd.f32 %v2243, %v2531
  %v2533 = vpop.f32.mrf.mxu0
  %v2534 = vpop.f32.mrf.mxu0
  %v2535 = vadd.f32 %v2246, %v2534
  %v2536 = vpop.f32.mrf.mxu0
  %2537 = vmatprep.mubr.bf16.mxu0 %v1951
  %2538 = vmatmul.mubr.bf16.gmra.mxu0 %v1950
  %v2539 = vpop.f32.mrf.mxu0
  %v2540 = vadd.f32 %v2251, %v2539
  %v2541 = vpop.f32.mrf.mxu0
  %v2542 = vpop.f32.mrf.mxu0
  %v2543 = vadd.f32 %v2254, %v2542
  %v2544 = vpop.f32.mrf.mxu0
  %2545 = vmatprep.mubr.bf16.mxu0 %v1955
  %2546 = vmatmul.mubr.bf16.gmra.mxu0 %v1954
  %v2547 = vpop.f32.mrf.mxu0
  %v2548 = vadd.f32 %v2259, %v2547
  %v2549 = vpop.f32.mrf.mxu0
  %v2550 = vpop.f32.mrf.mxu0
  %v2551 = vadd.f32 %v2262, %v2550
  %v2552 = vpop.f32.mrf.mxu0
  %2553 = vmatprep.mubr.bf16.mxu0 %v1959
  %2554 = vmatmul.mubr.bf16.gmra.mxu0 %v1958
  %v2555 = vpop.f32.mrf.mxu0
  %v2556 = vadd.f32 %v2267, %v2555
  %v2557 = vpop.f32.mrf.mxu0
  %v2558 = vpop.f32.mrf.mxu0
  %v2559 = vadd.f32 %v2270, %v2558
  %v2560 = vpop.f32.mrf.mxu0
  %2561 = vmatprep.mubr.bf16.mxu0 %v1963
  %2562 = vmatmul.mubr.bf16.gmra.mxu0 %v1962
  %v2563 = vpop.f32.mrf.mxu0
  %v2564 = vadd.f32 %v2275, %v2563
  %v2565 = vpop.f32.mrf.mxu0
  %v2566 = vpop.f32.mrf.mxu0
  %v2567 = vadd.f32 %v2278, %v2566
  %v2568 = vpop.f32.mrf.mxu0
  %2569 = vmatprep.mubr.bf16.mxu0 %v1967
  %2570 = vmatmul.mubr.bf16.gmra.mxu0 %v1966
  %v2571 = vpop.f32.mrf.mxu0
  %v2572 = vadd.f32 %v2283, %v2571
  %v2573 = vpop.f32.mrf.mxu0
  %v2574 = vpop.f32.mrf.mxu0
  %v2575 = vadd.f32 %v2286, %v2574
  %v2576 = vpop.f32.mrf.mxu0
  %2577 = vmatprep.mubr.bf16.mxu0 %v1971
  %2578 = vmatmul.mubr.bf16.gmra.mxu0 %v1970
  %v2579 = vpop.f32.mrf.mxu0
  %v2580 = vadd.f32 %v2291, %v2579
  %v2581 = vpop.f32.mrf.mxu0
  %v2582 = vpop.f32.mrf.mxu0
  %v2583 = vadd.f32 %v2294, %v2582
  %v2584 = vpop.f32.mrf.mxu0
  %2585 = vmatprep.mubr.bf16.mxu0 %v1975
  %2586 = vmatmul.mubr.bf16.gmra.mxu0 %v1974
  %v2587 = vpop.f32.mrf.mxu0
  %v2588 = vadd.f32 %v2299, %v2587
  %v2589 = vpop.f32.mrf.mxu0
  %v2590 = vpop.f32.mrf.mxu0
  %v2591 = vadd.f32 %v2302, %v2590
  %v2592 = vpop.f32.mrf.mxu0
  %2593 = vmatprep.mubr.bf16.mxu0 %v1979
  %2594 = vmatmul.mubr.bf16.gmra.mxu0 %v1978
  %v2595 = vpop.f32.mrf.mxu0
  %v2596 = vadd.f32 %v2307, %v2595
  %v2597 = vpop.f32.mrf.mxu0
  %v2598 = vpop.f32.mrf.mxu0
  %v2599 = vadd.f32 %v2310, %v2598
  %v2600 = vpop.f32.mrf.mxu0
  %2601 = vmatprep.mubr.bf16.mxu0 %v1983
  %2602 = vmatmul.mubr.bf16.gmra.mxu0 %v1982
  %v2603 = vpop.f32.mrf.mxu0
  %v2604 = vadd.f32 %v2315, %v2603
  %v2605 = vpop.f32.mrf.mxu0
  %v2606 = vpop.f32.mrf.mxu0
  %v2607 = vadd.f32 %v2318, %v2606
  %v2608 = vpop.f32.mrf.mxu0
  %2609 = vmatprep.mubr.bf16.mxu0 %v1987
  %2610 = vmatmul.mubr.bf16.gmra.mxu0 %v1986
  %v2611 = vpop.f32.mrf.mxu0
  %v2612 = vadd.f32 %v2323, %v2611
  %v2613 = vpop.f32.mrf.mxu0
  %v2614 = vpop.f32.mrf.mxu0
  %v2615 = vadd.f32 %v2326, %v2614
  %v2616 = vpop.f32.mrf.mxu0
  %2617 = vmatprep.mubr.bf16.mxu0 %v1991
  %2618 = vmatmul.mubr.bf16.gmra.mxu0 %v1990
  %v2619 = vpop.f32.mrf.mxu0
  %v2620 = vadd.f32 %v2331, %v2619
  %v2621 = vpop.f32.mrf.mxu0
  %v2622 = vpop.f32.mrf.mxu0
  %v2623 = vadd.f32 %v2334, %v2622
  %v2624 = vpop.f32.mrf.mxu0
  %2625 = vmatprep.mubr.bf16.mxu0 %v1995
  %2626 = vmatmul.mubr.bf16.gmra.mxu0 %v1994
  %v2627 = vpop.f32.mrf.mxu0
  %v2628 = vadd.f32 %v2339, %v2627
  %v2629 = vpop.f32.mrf.mxu0
  %v2630 = vpop.f32.mrf.mxu0
  %v2631 = vadd.f32 %v2342, %v2630
  %v2632 = vpop.f32.mrf.mxu0
  %2633 = vmatprep.mubr.bf16.mxu0 %v1999
  %2634 = vmatmul.mubr.bf16.gmra.mxu0 %v1998
  %v2635 = vpop.f32.mrf.mxu0
  %v2636 = vadd.f32 %v2347, %v2635
  %v2637 = vpop.f32.mrf.mxu0
  %v2638 = vpop.f32.mrf.mxu0
  %v2639 = vadd.f32 %v2350, %v2638
  %v2640 = vpop.f32.mrf.mxu0
  %2641 = vmatprep.mubr.bf16.mxu0 %v2003
  %2642 = vmatmul.mubr.bf16.gmra.mxu0 %v2002
  %v2643 = vpop.f32.mrf.mxu0
  %v2644 = vadd.f32 %v2355, %v2643
  %v2645 = vpop.f32.mrf.mxu0
  %v2646 = vpop.f32.mrf.mxu0
  %v2647 = vadd.f32 %v2358, %v2646
  %v2648 = vpop.f32.mrf.mxu0
  %2649 = vmatprep.mubr.bf16.mxu0 %v2007
  %2650 = vmatmul.mubr.bf16.gmra.mxu0 %v2006
  %v2651 = vpop.f32.mrf.mxu0
  %v2652 = vadd.f32 %v2363, %v2651
  %v2653 = vpop.f32.mrf.mxu0
  %v2654 = vpop.f32.mrf.mxu0
  %v2655 = vadd.f32 %v2366, %v2654
  %v2656 = vpop.f32.mrf.mxu0
  %2657 = vmatprep.mubr.bf16.mxu0 %v2011
  %2658 = vmatmul.mubr.bf16.gmra.mxu0 %v2010
  %v2659 = vpop.f32.mrf.mxu0
  %v2660 = vadd.f32 %v2371, %v2659
  %v2661 = vpop.f32.mrf.mxu0
  %v2662 = vpop.f32.mrf.mxu0
  %v2663 = vadd.f32 %v2374, %v2662
  %v2664 = vpop.f32.mrf.mxu0
  %2665 = vmatprep.mubr.bf16.mxu0 %v2015
  %2666 = vmatmul.mubr.bf16.gmra.mxu0 %v2014
  %v2667 = vpop.f32.mrf.mxu0
  %v2668 = vadd.f32 %v2379, %v2667
  %v2669 = vpop.f32.mrf.mxu0
  %v2670 = vpop.f32.mrf.mxu0
  %v2671 = vadd.f32 %v2382, %v2670
  %v2672 = vpop.f32.mrf.mxu0
  %2673 = vmatprep.mubr.bf16.mxu0 %v2019
  %2674 = vmatmul.mubr.bf16.gmra.mxu0 %v2018
  %v2675 = vpop.f32.mrf.mxu0
  %v2676 = vadd.f32 %v2387, %v2675
  %v2677 = vpop.f32.mrf.mxu0
  %v2678 = vpop.f32.mrf.mxu0
  %v2679 = vadd.f32 %v2390, %v2678
  %v2680 = vpop.f32.mrf.mxu0
  %2681 = vmatprep.mubr.bf16.mxu0 %v2023
  %2682 = vmatmul.mubr.bf16.gmra.mxu0 %v2022
  %v2683 = vpop.f32.mrf.mxu0
  %v2684 = vadd.f32 %v2395, %v2683
  %v2685 = vpop.f32.mrf.mxu0
  %v2686 = vpop.f32.mrf.mxu0
  %v2687 = vadd.f32 %v2398, %v2686
  %v2688 = vpop.f32.mrf.mxu0
  %2689 = vmatprep.mubr.bf16.mxu0 %v2027
  %2690 = vmatmul.mubr.bf16.gmra.mxu0 %v2026
  %v2691 = vpop.f32.mrf.mxu0
  %v2692 = vadd.f32 %v2403, %v2691
  %v2693 = vpop.f32.mrf.mxu0
  %v2694 = vpop.f32.mrf.mxu0
  %v2695 = vadd.f32 %v2406, %v2694
  %v2696 = vpop.f32.mrf.mxu0
  %2697 = vmatprep.mubr.bf16.mxu0 %v2031
  %2698 = vmatmul.mubr.bf16.gmra.mxu0 %v2030
  %v2699 = vpop.f32.mrf.mxu0
  %v2700 = vadd.f32 %v2411, %v2699
  %v2701 = vpop.f32.mrf.mxu0
  %v2702 = vpop.f32.mrf.mxu0
  %v2703 = vadd.f32 %v2414, %v2702
  %v2704 = vpop.f32.mrf.mxu0
  %2705 = vmatprep.mubr.bf16.mxu0 %v2035
  %2706 = vmatmul.mubr.bf16.gmra.mxu0 %v2034
  %v2707 = vpop.f32.mrf.mxu0
  %v2708 = vadd.f32 %v2419, %v2707
  %v2709 = vpop.f32.mrf.mxu0
  %v2710 = vpop.f32.mrf.mxu0
  %v2711 = vadd.f32 %v2422, %v2710
  %v2712 = vpop.f32.mrf.mxu0
  %2713 = vmatprep.mubr.bf16.mxu0 %v2039
  %2714 = vmatmul.mubr.bf16.gmra.mxu0 %v2038
  %v2715 = vpop.f32.mrf.mxu0
  %v2716 = vadd.f32 %v2427, %v2715
  %v2717 = vpop.f32.mrf.mxu0
  %v2718 = vpop.f32.mrf.mxu0
  %v2719 = vadd.f32 %v2430, %v2718
  %v2720 = vpop.f32.mrf.mxu0
  %2721 = vmatprep.mubr.bf16.mxu0 %v2043
  %2722 = vmatmul.mubr.bf16.gmra.mxu0 %v2042
  %v2723 = vpop.f32.mrf.mxu0
  %v2724 = vadd.f32 %v2435, %v2723
  %v2725 = vpop.f32.mrf.mxu0
  %v2726 = vpop.f32.mrf.mxu0
  %v2727 = vadd.f32 %v2438, %v2726
  %v2728 = vpop.f32.mrf.mxu0
  %2729 = vmatprep.mubr.bf16.mxu0 %v2047
  %2730 = vmatmul.mubr.bf16.gmra.mxu0 %v2046
  %v2731 = vpop.f32.mrf.mxu0
  %v2732 = vadd.f32 %v2443, %v2731
  %v2733 = vpop.f32.mrf.mxu0
  %v2734 = vpop.f32.mrf.mxu0
  %v2735 = vadd.f32 %v2446, %v2734
  %v2736 = vpop.f32.mrf.mxu0
  %2737 = vmatprep.mubr.bf16.mxu0 %v2051
  %2738 = vmatmul.mubr.bf16.gmra.mxu0 %v2050
  %v2739 = vpop.f32.mrf.mxu0
  %v2740 = vadd.f32 %v2451, %v2739
  %v2741 = vpop.f32.mrf.mxu0
  %v2742 = vpop.f32.mrf.mxu0
  %v2743 = vadd.f32 %v2454, %v2742
  %v2744 = vpop.f32.mrf.mxu0
  %2745 = vmatprep.mubr.bf16.mxu0 %v2055
  %2746 = vmatmul.mubr.bf16.gmra.mxu0 %v2054
  %v2747 = vpop.f32.mrf.mxu0
  %v2748 = vadd.f32 %v2459, %v2747
  %v2749 = vpop.f32.mrf.mxu0
  %v2750 = vpop.f32.mrf.mxu0
  %v2751 = vadd.f32 %v2462, %v2750
  %v2752 = vpop.f32.mrf.mxu0
  %2753 = vmatprep.mubr.bf16.mxu0 %v2059
  %2754 = vmatmul.mubr.bf16.gmra.mxu0 %v2058
  %v2755 = vpop.f32.mrf.mxu0
  %v2756 = vadd.f32 %v2467, %v2755
  %v2757 = vpop.f32.mrf.mxu0
  %v2758 = vpop.f32.mrf.mxu0
  %v2759 = vadd.f32 %v2470, %v2758
  %v2760 = vpop.f32.mrf.mxu0
  %2761 = vmatprep.mubr.bf16.mxu0 %v2063
  %2762 = vmatmul.mubr.bf16.gmra.mxu0 %v2062
  %v2763 = vpop.f32.mrf.mxu0
  %v2764 = vadd.f32 %v2475, %v2763
  %v2765 = vpop.f32.mrf.mxu0
  %v2766 = vpop.f32.mrf.mxu0
  %v2767 = vadd.f32 %v2478, %v2766
  %v2768 = vpop.f32.mrf.mxu0
  %2769 = vdwg.mxu0
  %v2770 = vmax.f32 %v2516, 0.0
  %v2771 = vmax.f32 %v2519, 0.0
  %v2772 = vmax.f32 %v2524, 0.0
  %v2773 = vmax.f32 %v2527, 0.0
  %v2774 = vmax.f32 %v2532, 0.0
  %v2775 = vmax.f32 %v2535, 0.0
  %v2776 = vmax.f32 %v2540, 0.0
  %v2777 = vmax.f32 %v2543, 0.0
  %v2778 = vmax.f32 %v2548, 0.0
  %v2779 = vmax.f32 %v2551, 0.0
  %v2780 = vmax.f32 %v2556, 0.0
  %v2781 = vmax.f32 %v2559, 0.0
  %v2782 = vmax.f32 %v2564, 0.0
  %v2783 = vmax.f32 %v2567, 0.0
  %v2784 = vmax.f32 %v2572, 0.0
  %v2785 = vmax.f32 %v2575, 0.0
  %v2786 = vmax.f32 %v2580, 0.0
  %v2787 = vmax.f32 %v2583, 0.0
  %v2788 = vmax.f32 %v2588, 0.0
  %v2789 = vmax.f32 %v2591, 0.0
  %v2790 = vmax.f32 %v2596, 0.0
  %v2791 = vmax.f32 %v2599, 0.0
  %v2792 = vmax.f32 %v2604, 0.0
  %v2793 = vmax.f32 %v2607, 0.0
  %v2794 = vmax.f32 %v2612, 0.0
  %v2795 = vmax.f32 %v2615, 0.0
  %v2796 = vmax.f32 %v2620, 0.0
  %v2797 = vmax.f32 %v2623, 0.0
  %v2798 = vmax.f32 %v2628, 0.0
  %v2799 = vmax.f32 %v2631, 0.0
  %v2800 = vmax.f32 %v2636, 0.0
  %v2801 = vmax.f32 %v2639, 0.0
  %v2802 = vmax.f32 %v2644, 0.0
  %v2803 = vmax.f32 %v2647, 0.0
  %v2804 = vmax.f32 %v2652, 0.0
  %v2805 = vmax.f32 %v2655, 0.0
  %v2806 = vmax.f32 %v2660, 0.0
  %v2807 = vmax.f32 %v2663, 0.0
  %v2808 = vmax.f32 %v2668, 0.0
  %v2809 = vmax.f32 %v2671, 0.0
  %v2810 = vmax.f32 %v2676, 0.0
  %v2811 = vmax.f32 %v2679, 0.0
  %v2812 = vmax.f32 %v2684, 0.0
  %v2813 = vmax.f32 %v2687, 0.0
  %v2814 = vmax.f32 %v2692, 0.0
  %v2815 = vmax.f32 %v2695, 0.0
  %v2816 = vmax.f32 %v2700, 0.0
  %v2817 = vmax.f32 %v2703, 0.0
  %v2818 = vmax.f32 %v2708, 0.0
  %v2819 = vmax.f32 %v2711, 0.0
  %v2820 = vmax.f32 %v2716, 0.0
  %v2821 = vmax.f32 %v2719, 0.0
  %v2822 = vmax.f32 %v2724, 0.0
  %v2823 = vmax.f32 %v2727, 0.0
  %v2824 = vmax.f32 %v2732, 0.0
  %v2825 = vmax.f32 %v2735, 0.0
  %v2826 = vmax.f32 %v2740, 0.0
  %v2827 = vmax.f32 %v2743, 0.0
  %v2828 = vmax.f32 %v2748, 0.0
  %v2829 = vmax.f32 %v2751, 0.0
  %v2830 = vmax.f32 %v2756, 0.0
  %v2831 = vmax.f32 %v2759, 0.0
  %v2832 = vmax.f32 %v2764, 0.0
  %v2833 = vmax.f32 %v2767, 0.0
  %v2834 = vld [vmem:[%s5] sm:$0xff]
  %v2835 = vld [vmem:[%s5 + $0x8] sm:$0xff]
  %v2836 = vld [vmem:[%s5 + $0x10] sm:$0xff]
  %v2837 = vld [vmem:[%s5 + $0x18] sm:$0xff]
  %v2838 = vld [vmem:[%s5 + $0x20] sm:$0xff]
  %v2839 = vld [vmem:[%s5 + $0x28] sm:$0xff]
  %v2840 = vld [vmem:[%s5 + $0x30] sm:$0xff]
  %v2841 = vld [vmem:[%s5 + $0x38] sm:$0xff]
  %v2842 = vld [vmem:[%s5 + $0x40] sm:$0xff]
  %v2843 = vld [vmem:[%s5 + $0x48] sm:$0xff]
  %v2844 = vld [vmem:[%s5 + $0x50] sm:$0xff]
  %v2845 = vld [vmem:[%s5 + $0x58] sm:$0xff]
  %v2846 = vld [vmem:[%s5 + $0x60] sm:$0xff]
  %v2847 = vld [vmem:[%s5 + $0x68] sm:$0xff]
  %v2848 = vld [vmem:[%s5 + $0x70] sm:$0xff]
  %v2849 = vld [vmem:[%s5 + $0x78] sm:$0xff]
  %v2850 = vld [vmem:[%s5 + $0x80] sm:$0xff]
  %v2851 = vld [vmem:[%s5 + $0x88] sm:$0xff]
  %v2852 = vld [vmem:[%s5 + $0x90] sm:$0xff]
  %v2853 = vld [vmem:[%s5 + $0x98] sm:$0xff]
  %v2854 = vld [vmem:[%s5 + $0xa0] sm:$0xff]
  %v2855 = vld [vmem:[%s5 + $0xa8] sm:$0xff]
  %v2856 = vld [vmem:[%s5 + $0xb0] sm:$0xff]
  %v2857 = vld [vmem:[%s5 + $0xb8] sm:$0xff]
  %v2858 = vld [vmem:[%s5 + $0xc0] sm:$0xff]
  %v2859 = vld [vmem:[%s5 + $0xc8] sm:$0xff]
  %v2860 = vld [vmem:[%s5 + $0xd0] sm:$0xff]
  %v2861 = vld [vmem:[%s5 + $0xd8] sm:$0xff]
  %v2862 = vld [vmem:[%s5 + $0xe0] sm:$0xff]
  %v2863 = vld [vmem:[%s5 + $0xe8] sm:$0xff]
  %v2864 = vld [vmem:[%s5 + $0xf0] sm:$0xff]
  %v2865 = vld [vmem:[%s5 + $0xf8] sm:$0xff]
  %v2866 = vld [vmem:[%s5 + $0x100] sm:$0xff]
  %v2867 = vld [vmem:[%s5 + $0x108] sm:$0xff]
  %v2868 = vld [vmem:[%s5 + $0x110] sm:$0xff]
  %v2869 = vld [vmem:[%s5 + $0x118] sm:$0xff]
  %v2870 = vld [vmem:[%s5 + $0x120] sm:$0xff]
  %v2871 = vld [vmem:[%s5 + $0x128] sm:$0xff]
  %v2872 = vld [vmem:[%s5 + $0x130] sm:$0xff]
  %v2873 = vld [vmem:[%s5 + $0x138] sm:$0xff]
  %v2874 = vld [vmem:[%s5 + $0x140] sm:$0xff]
  %v2875 = vld [vmem:[%s5 + $0x148] sm:$0xff]
  %v2876 = vld [vmem:[%s5 + $0x150] sm:$0xff]
  %v2877 = vld [vmem:[%s5 + $0x158] sm:$0xff]
  %v2878 = vld [vmem:[%s5 + $0x160] sm:$0xff]
  %v2879 = vld [vmem:[%s5 + $0x168] sm:$0xff]
  %v2880 = vld [vmem:[%s5 + $0x170] sm:$0xff]
  %v2881 = vld [vmem:[%s5 + $0x178] sm:$0xff]
  %v2882 = vld [vmem:[%s5 + $0x180] sm:$0xff]
  %v2883 = vld [vmem:[%s5 + $0x188] sm:$0xff]
  %v2884 = vld [vmem:[%s5 + $0x190] sm:$0xff]
  %v2885 = vld [vmem:[%s5 + $0x198] sm:$0xff]
  %v2886 = vld [vmem:[%s5 + $0x1a0] sm:$0xff]
  %v2887 = vld [vmem:[%s5 + $0x1a8] sm:$0xff]
  %v2888 = vld [vmem:[%s5 + $0x1b0] sm:$0xff]
  %v2889 = vld [vmem:[%s5 + $0x1b8] sm:$0xff]
  %v2890 = vld [vmem:[%s5 + $0x1c0] sm:$0xff]
  %v2891 = vld [vmem:[%s5 + $0x1c8] sm:$0xff]
  %v2892 = vld [vmem:[%s5 + $0x1d0] sm:$0xff]
  %v2893 = vld [vmem:[%s5 + $0x1d8] sm:$0xff]
  %v2894 = vld [vmem:[%s5 + $0x1e0] sm:$0xff]
  %v2895 = vld [vmem:[%s5 + $0x1e8] sm:$0xff]
  %v2896 = vld [vmem:[%s5 + $0x1f0] sm:$0xff]
  %v2897 = vld [vmem:[%s5 + $0x1f8] sm:$0xff]
  %v2898 = vld [vmem:[%s5 + $0x200] sm:$0xff]
  %v2899 = vld [vmem:[%s5 + $0x208] sm:$0xff]
  %v2900 = vld [vmem:[%s5 + $0x210] sm:$0xff]
  %v2901 = vld [vmem:[%s5 + $0x218] sm:$0xff]
  %v2902 = vld [vmem:[%s5 + $0x220] sm:$0xff]
  %v2903 = vld [vmem:[%s5 + $0x228] sm:$0xff]
  %v2904 = vld [vmem:[%s5 + $0x230] sm:$0xff]
  %v2905 = vld [vmem:[%s5 + $0x238] sm:$0xff]
  %v2906 = vld [vmem:[%s5 + $0x240] sm:$0xff]
  %v2907 = vld [vmem:[%s5 + $0x248] sm:$0xff]
  %v2908 = vld [vmem:[%s5 + $0x250] sm:$0xff]
  %v2909 = vld [vmem:[%s5 + $0x258] sm:$0xff]
  %v2910 = vld [vmem:[%s5 + $0x260] sm:$0xff]
  %v2911 = vld [vmem:[%s5 + $0x268] sm:$0xff]
  %v2912 = vld [vmem:[%s5 + $0x270] sm:$0xff]
  %v2913 = vld [vmem:[%s5 + $0x278] sm:$0xff]
  %v2914 = vld [vmem:[%s5 + $0x280] sm:$0xff]
  %v2915 = vld [vmem:[%s5 + $0x288] sm:$0xff]
  %v2916 = vld [vmem:[%s5 + $0x290] sm:$0xff]
  %v2917 = vld [vmem:[%s5 + $0x298] sm:$0xff]
  %v2918 = vld [vmem:[%s5 + $0x2a0] sm:$0xff]
  %v2919 = vld [vmem:[%s5 + $0x2a8] sm:$0xff]
  %v2920 = vld [vmem:[%s5 + $0x2b0] sm:$0xff]
  %v2921 = vld [vmem:[%s5 + $0x2b8] sm:$0xff]
  %v2922 = vld [vmem:[%s5 + $0x2c0] sm:$0xff]
  %v2923 = vld [vmem:[%s5 + $0x2c8] sm:$0xff]
  %v2924 = vld [vmem:[%s5 + $0x2d0] sm:$0xff]
  %v2925 = vld [vmem:[%s5 + $0x2d8] sm:$0xff]
  %v2926 = vld [vmem:[%s5 + $0x2e0] sm:$0xff]
  %v2927 = vld [vmem:[%s5 + $0x2e8] sm:$0xff]
  %v2928 = vld [vmem:[%s5 + $0x2f0] sm:$0xff]
  %v2929 = vld [vmem:[%s5 + $0x2f8] sm:$0xff]
  %v2930 = vld [vmem:[%s5 + $0x300] sm:$0xff]
  %v2931 = vld [vmem:[%s5 + $0x308] sm:$0xff]
  %v2932 = vld [vmem:[%s5 + $0x310] sm:$0xff]
  %v2933 = vld [vmem:[%s5 + $0x318] sm:$0xff]
  %v2934 = vld [vmem:[%s5 + $0x320] sm:$0xff]
  %v2935 = vld [vmem:[%s5 + $0x328] sm:$0xff]
  %v2936 = vld [vmem:[%s5 + $0x330] sm:$0xff]
  %v2937 = vld [vmem:[%s5 + $0x338] sm:$0xff]
  %v2938 = vld [vmem:[%s5 + $0x340] sm:$0xff]
  %v2939 = vld [vmem:[%s5 + $0x348] sm:$0xff]
  %v2940 = vld [vmem:[%s5 + $0x350] sm:$0xff]
  %v2941 = vld [vmem:[%s5 + $0x358] sm:$0xff]
  %v2942 = vld [vmem:[%s5 + $0x360] sm:$0xff]
  %v2943 = vld [vmem:[%s5 + $0x368] sm:$0xff]
  %v2944 = vld [vmem:[%s5 + $0x370] sm:$0xff]
  %v2945 = vld [vmem:[%s5 + $0x378] sm:$0xff]
  %v2946 = vld [vmem:[%s5 + $0x380] sm:$0xff]
  %v2947 = vld [vmem:[%s5 + $0x388] sm:$0xff]
  %v2948 = vld [vmem:[%s5 + $0x390] sm:$0xff]
  %v2949 = vld [vmem:[%s5 + $0x398] sm:$0xff]
  %v2950 = vld [vmem:[%s5 + $0x3a0] sm:$0xff]
  %v2951 = vld [vmem:[%s5 + $0x3a8] sm:$0xff]
  %v2952 = vld [vmem:[%s5 + $0x3b0] sm:$0xff]
  %v2953 = vld [vmem:[%s5 + $0x3b8] sm:$0xff]
  %v2954 = vld [vmem:[%s5 + $0x3c0] sm:$0xff]
  %v2955 = vld [vmem:[%s5 + $0x3c8] sm:$0xff]
  %v2956 = vld [vmem:[%s5 + $0x3d0] sm:$0xff]
  %v2957 = vld [vmem:[%s5 + $0x3d8] sm:$0xff]
  %v2958 = vld [vmem:[%s5 + $0x3e0] sm:$0xff]
  %v2959 = vld [vmem:[%s5 + $0x3e8] sm:$0xff]
  %v2960 = vld [vmem:[%s5 + $0x3f0] sm:$0xff]
  %v2961 = vld [vmem:[%s5 + $0x3f8] sm:$0xff]
  %v2962 = vpack.c.bf16 %v2771, %v2770
  %v2963 = vpack.c.bf16 %v2773, %v2772
  %v2964 = vpack.c.bf16 %v2775, %v2774
  %v2965 = vpack.c.bf16 %v2777, %v2776
  %v2966 = vpack.c.bf16 %v2779, %v2778
  %v2967 = vpack.c.bf16 %v2781, %v2780
  %v2968 = vpack.c.bf16 %v2783, %v2782
  %v2969 = vpack.c.bf16 %v2785, %v2784
  %v2970 = vpack.c.bf16 %v2787, %v2786
  %v2971 = vpack.c.bf16 %v2789, %v2788
  %v2972 = vpack.c.bf16 %v2791, %v2790
  %v2973 = vpack.c.bf16 %v2793, %v2792
  %v2974 = vpack.c.bf16 %v2795, %v2794
  %v2975 = vpack.c.bf16 %v2797, %v2796
  %v2976 = vpack.c.bf16 %v2799, %v2798
  %v2977 = vpack.c.bf16 %v2801, %v2800
  %v2978 = vpack.c.bf16 %v2803, %v2802
  %v2979 = vpack.c.bf16 %v2805, %v2804
  %v2980 = vpack.c.bf16 %v2807, %v2806
  %v2981 = vpack.c.bf16 %v2809, %v2808
  %v2982 = vpack.c.bf16 %v2811, %v2810
  %v2983 = vpack.c.bf16 %v2813, %v2812
  %v2984 = vpack.c.bf16 %v2815, %v2814
  %v2985 = vpack.c.bf16 %v2817, %v2816
  %v2986 = vpack.c.bf16 %v2819, %v2818
  %v2987 = vpack.c.bf16 %v2821, %v2820
  %v2988 = vpack.c.bf16 %v2823, %v2822
  %v2989 = vpack.c.bf16 %v2825, %v2824
  %v2990 = vpack.c.bf16 %v2827, %v2826
  %v2991 = vpack.c.bf16 %v2829, %v2828
  %v2992 = vpack.c.bf16 %v2831, %v2830
  %v2993 = vpack.c.bf16 %v2833, %v2832
  %v2994 = vld [vmem:[%s6] sm:$0xff]
  %v2995 = vld [vmem:[%s6 + $0x8] sm:$0xff]
  %v2996 = vld [vmem:[%s6 + $0x10] sm:$0xff]
  %v2997 = vld [vmem:[%s6 + $0x18] sm:$0xff]
  %v2998 = vld [vmem:[%s6 + $0x20] sm:$0xff]
  %v2999 = vld [vmem:[%s6 + $0x28] sm:$0xff]
  %v3000 = vld [vmem:[%s6 + $0x30] sm:$0xff]
  %v3001 = vld [vmem:[%s6 + $0x38] sm:$0xff]
  %v3002 = vld [vmem:[%s6 + $0x40] sm:$0xff]
  %v3003 = vld [vmem:[%s6 + $0x48] sm:$0xff]
  %v3004 = vld [vmem:[%s6 + $0x50] sm:$0xff]
  %v3005 = vld [vmem:[%s6 + $0x58] sm:$0xff]
  %v3006 = vld [vmem:[%s6 + $0x60] sm:$0xff]
  %v3007 = vld [vmem:[%s6 + $0x68] sm:$0xff]
  %v3008 = vld [vmem:[%s6 + $0x70] sm:$0xff]
  %v3009 = vld [vmem:[%s6 + $0x78] sm:$0xff]
  %v3010 = vld [vmem:[%s6 + $0x80] sm:$0xff]
  %v3011 = vld [vmem:[%s6 + $0x88] sm:$0xff]
  %v3012 = vld [vmem:[%s6 + $0x90] sm:$0xff]
  %v3013 = vld [vmem:[%s6 + $0x98] sm:$0xff]
  %v3014 = vld [vmem:[%s6 + $0xa0] sm:$0xff]
  %v3015 = vld [vmem:[%s6 + $0xa8] sm:$0xff]
  %v3016 = vld [vmem:[%s6 + $0xb0] sm:$0xff]
  %v3017 = vld [vmem:[%s6 + $0xb8] sm:$0xff]
  %v3018 = vld [vmem:[%s6 + $0xc0] sm:$0xff]
  %v3019 = vld [vmem:[%s6 + $0xc8] sm:$0xff]
  %v3020 = vld [vmem:[%s6 + $0xd0] sm:$0xff]
  %v3021 = vld [vmem:[%s6 + $0xd8] sm:$0xff]
  %v3022 = vld [vmem:[%s6 + $0xe0] sm:$0xff]
  %v3023 = vld [vmem:[%s6 + $0xe8] sm:$0xff]
  %v3024 = vld [vmem:[%s6 + $0xf0] sm:$0xff]
  %v3025 = vld [vmem:[%s6 + $0xf8] sm:$0xff]
  %v3026 = vld [vmem:[%s6 + $0x100] sm:$0xff]
  %v3027 = vld [vmem:[%s6 + $0x108] sm:$0xff]
  %v3028 = vld [vmem:[%s6 + $0x110] sm:$0xff]
  %v3029 = vld [vmem:[%s6 + $0x118] sm:$0xff]
  %v3030 = vld [vmem:[%s6 + $0x120] sm:$0xff]
  %v3031 = vld [vmem:[%s6 + $0x128] sm:$0xff]
  %v3032 = vld [vmem:[%s6 + $0x130] sm:$0xff]
  %v3033 = vld [vmem:[%s6 + $0x138] sm:$0xff]
  %v3034 = vld [vmem:[%s6 + $0x140] sm:$0xff]
  %v3035 = vld [vmem:[%s6 + $0x148] sm:$0xff]
  %v3036 = vld [vmem:[%s6 + $0x150] sm:$0xff]
  %v3037 = vld [vmem:[%s6 + $0x158] sm:$0xff]
  %v3038 = vld [vmem:[%s6 + $0x160] sm:$0xff]
  %v3039 = vld [vmem:[%s6 + $0x168] sm:$0xff]
  %v3040 = vld [vmem:[%s6 + $0x170] sm:$0xff]
  %v3041 = vld [vmem:[%s6 + $0x178] sm:$0xff]
  %v3042 = vld [vmem:[%s6 + $0x180] sm:$0xff]
  %v3043 = vld [vmem:[%s6 + $0x188] sm:$0xff]
  %v3044 = vld [vmem:[%s6 + $0x190] sm:$0xff]
  %v3045 = vld [vmem:[%s6 + $0x198] sm:$0xff]
  %v3046 = vld [vmem:[%s6 + $0x1a0] sm:$0xff]
  %v3047 = vld [vmem:[%s6 + $0x1a8] sm:$0xff]
  %v3048 = vld [vmem:[%s6 + $0x1b0] sm:$0xff]
  %v3049 = vld [vmem:[%s6 + $0x1b8] sm:$0xff]
  %v3050 = vld [vmem:[%s6 + $0x1c0] sm:$0xff]
  %v3051 = vld [vmem:[%s6 + $0x1c8] sm:$0xff]
  %v3052 = vld [vmem:[%s6 + $0x1d0] sm:$0xff]
  %v3053 = vld [vmem:[%s6 + $0x1d8] sm:$0xff]
  %v3054 = vld [vmem:[%s6 + $0x1e0] sm:$0xff]
  %v3055 = vld [vmem:[%s6 + $0x1e8] sm:$0xff]
  %v3056 = vld [vmem:[%s6 + $0x1f0] sm:$0xff]
  %v3057 = vld [vmem:[%s6 + $0x1f8] sm:$0xff]
  %3059 = vset.pattern.permute.xlu0 0
  %3060 = vperm.xlu0 %3059, %v2994
  %v3061 = vpop.permute.xlu0 %3060
  %3064 = vset.pattern.permute.xlu0 0
  %3065 = vperm.xlu0 %3064, %v2995
  %v3066 = vpop.permute.xlu0 %3065
  %3069 = vset.pattern.permute.xlu0 0
  %3070 = vperm.xlu0 %3069, %v2996
  %v3071 = vpop.permute.xlu0 %3070
  %3074 = vset.pattern.permute.xlu0 0
  %3075 = vperm.xlu0 %3074, %v2997
  %v3076 = vpop.permute.xlu0 %3075
  %3079 = vset.pattern.permute.xlu0 0
  %3080 = vperm.xlu0 %3079, %v2998
  %v3081 = vpop.permute.xlu0 %3080
  %3084 = vset.pattern.permute.xlu0 0
  %3085 = vperm.xlu0 %3084, %v2999
  %v3086 = vpop.permute.xlu0 %3085
  %3089 = vset.pattern.permute.xlu0 0
  %3090 = vperm.xlu0 %3089, %v3000
  %v3091 = vpop.permute.xlu0 %3090
  %3094 = vset.pattern.permute.xlu0 0
  %3095 = vperm.xlu0 %3094, %v3001
  %v3096 = vpop.permute.xlu0 %3095
  %3099 = vset.pattern.permute.xlu0 0
  %3100 = vperm.xlu0 %3099, %v3002
  %v3101 = vpop.permute.xlu0 %3100
  %3104 = vset.pattern.permute.xlu0 0
  %3105 = vperm.xlu0 %3104, %v3003
  %v3106 = vpop.permute.xlu0 %3105
  %3109 = vset.pattern.permute.xlu0 0
  %3110 = vperm.xlu0 %3109, %v3004
  %v3111 = vpop.permute.xlu0 %3110
  %3114 = vset.pattern.permute.xlu0 0
  %3115 = vperm.xlu0 %3114, %v3005
  %v3116 = vpop.permute.xlu0 %3115
  %3119 = vset.pattern.permute.xlu0 0
  %3120 = vperm.xlu0 %3119, %v3006
  %v3121 = vpop.permute.xlu0 %3120
  %3124 = vset.pattern.permute.xlu0 0
  %3125 = vperm.xlu0 %3124, %v3007
  %v3126 = vpop.permute.xlu0 %3125
  %3129 = vset.pattern.permute.xlu0 0
  %3130 = vperm.xlu0 %3129, %v3008
  %v3131 = vpop.permute.xlu0 %3130
  %3134 = vset.pattern.permute.xlu0 0
  %3135 = vperm.xlu0 %3134, %v3009
  %v3136 = vpop.permute.xlu0 %3135
  %3139 = vset.pattern.permute.xlu0 0
  %3140 = vperm.xlu0 %3139, %v3010
  %v3141 = vpop.permute.xlu0 %3140
  %3144 = vset.pattern.permute.xlu0 0
  %3145 = vperm.xlu0 %3144, %v3011
  %v3146 = vpop.permute.xlu0 %3145
  %3149 = vset.pattern.permute.xlu0 0
  %3150 = vperm.xlu0 %3149, %v3012
  %v3151 = vpop.permute.xlu0 %3150
  %3154 = vset.pattern.permute.xlu0 0
  %3155 = vperm.xlu0 %3154, %v3013
  %v3156 = vpop.permute.xlu0 %3155
  %3159 = vset.pattern.permute.xlu0 0
  %3160 = vperm.xlu0 %3159, %v3014
  %v3161 = vpop.permute.xlu0 %3160
  %3164 = vset.pattern.permute.xlu0 0
  %3165 = vperm.xlu0 %3164, %v3015
  %v3166 = vpop.permute.xlu0 %3165
  %3169 = vset.pattern.permute.xlu0 0
  %3170 = vperm.xlu0 %3169, %v3016
  %v3171 = vpop.permute.xlu0 %3170
  %3174 = vset.pattern.permute.xlu0 0
  %3175 = vperm.xlu0 %3174, %v3017
  %v3176 = vpop.permute.xlu0 %3175
  %3179 = vset.pattern.permute.xlu0 0
  %3180 = vperm.xlu0 %3179, %v3018
  %v3181 = vpop.permute.xlu0 %3180
  %3184 = vset.pattern.permute.xlu0 0
  %3185 = vperm.xlu0 %3184, %v3019
  %v3186 = vpop.permute.xlu0 %3185
  %3189 = vset.pattern.permute.xlu0 0
  %3190 = vperm.xlu0 %3189, %v3020
  %v3191 = vpop.permute.xlu0 %3190
  %3194 = vset.pattern.permute.xlu0 0
  %3195 = vperm.xlu0 %3194, %v3021
  %v3196 = vpop.permute.xlu0 %3195
  %3199 = vset.pattern.permute.xlu0 0
  %3200 = vperm.xlu0 %3199, %v3022
  %v3201 = vpop.permute.xlu0 %3200
  %3204 = vset.pattern.permute.xlu0 0
  %3205 = vperm.xlu0 %3204, %v3023
  %v3206 = vpop.permute.xlu0 %3205
  %3209 = vset.pattern.permute.xlu0 0
  %3210 = vperm.xlu0 %3209, %v3024
  %v3211 = vpop.permute.xlu0 %3210
  %3214 = vset.pattern.permute.xlu0 0
  %3215 = vperm.xlu0 %3214, %v3025
  %v3216 = vpop.permute.xlu0 %3215
  %3219 = vset.pattern.permute.xlu0 0
  %3220 = vperm.xlu0 %3219, %v3026
  %v3221 = vpop.permute.xlu0 %3220
  %3224 = vset.pattern.permute.xlu0 0
  %3225 = vperm.xlu0 %3224, %v3027
  %v3226 = vpop.permute.xlu0 %3225
  %3229 = vset.pattern.permute.xlu0 0
  %3230 = vperm.xlu0 %3229, %v3028
  %v3231 = vpop.permute.xlu0 %3230
  %3234 = vset.pattern.permute.xlu0 0
  %3235 = vperm.xlu0 %3234, %v3029
  %v3236 = vpop.permute.xlu0 %3235
  %3239 = vset.pattern.permute.xlu0 0
  %3240 = vperm.xlu0 %3239, %v3030
  %v3241 = vpop.permute.xlu0 %3240
  %3244 = vset.pattern.permute.xlu0 0
  %3245 = vperm.xlu0 %3244, %v3031
  %v3246 = vpop.permute.xlu0 %3245
  %3249 = vset.pattern.permute.xlu0 0
  %3250 = vperm.xlu0 %3249, %v3032
  %v3251 = vpop.permute.xlu0 %3250
  %3254 = vset.pattern.permute.xlu0 0
  %3255 = vperm.xlu0 %3254, %v3033
  %v3256 = vpop.permute.xlu0 %3255
  %3259 = vset.pattern.permute.xlu0 0
  %3260 = vperm.xlu0 %3259, %v3034
  %v3261 = vpop.permute.xlu0 %3260
  %3264 = vset.pattern.permute.xlu0 0
  %3265 = vperm.xlu0 %3264, %v3035
  %v3266 = vpop.permute.xlu0 %3265
  %3269 = vset.pattern.permute.xlu0 0
  %3270 = vperm.xlu0 %3269, %v3036
  %v3271 = vpop.permute.xlu0 %3270
  %3274 = vset.pattern.permute.xlu0 0
  %3275 = vperm.xlu0 %3274, %v3037
  %v3276 = vpop.permute.xlu0 %3275
  %3279 = vset.pattern.permute.xlu0 0
  %3280 = vperm.xlu0 %3279, %v3038
  %v3281 = vpop.permute.xlu0 %3280
  %3284 = vset.pattern.permute.xlu0 0
  %3285 = vperm.xlu0 %3284, %v3039
  %v3286 = vpop.permute.xlu0 %3285
  %3289 = vset.pattern.permute.xlu0 0
  %3290 = vperm.xlu0 %3289, %v3040
  %v3291 = vpop.permute.xlu0 %3290
  %3294 = vset.pattern.permute.xlu0 0
  %3295 = vperm.xlu0 %3294, %v3041
  %v3296 = vpop.permute.xlu0 %3295
  %3299 = vset.pattern.permute.xlu0 0
  %3300 = vperm.xlu0 %3299, %v3042
  %v3301 = vpop.permute.xlu0 %3300
  %3304 = vset.pattern.permute.xlu0 0
  %3305 = vperm.xlu0 %3304, %v3043
  %v3306 = vpop.permute.xlu0 %3305
  %3309 = vset.pattern.permute.xlu0 0
  %3310 = vperm.xlu0 %3309, %v3044
  %v3311 = vpop.permute.xlu0 %3310
  %3314 = vset.pattern.permute.xlu0 0
  %3315 = vperm.xlu0 %3314, %v3045
  %v3316 = vpop.permute.xlu0 %3315
  %3319 = vset.pattern.permute.xlu0 0
  %3320 = vperm.xlu0 %3319, %v3046
  %v3321 = vpop.permute.xlu0 %3320
  %3324 = vset.pattern.permute.xlu0 0
  %3325 = vperm.xlu0 %3324, %v3047
  %v3326 = vpop.permute.xlu0 %3325
  %3329 = vset.pattern.permute.xlu0 0
  %3330 = vperm.xlu0 %3329, %v3048
  %v3331 = vpop.permute.xlu0 %3330
  %3334 = vset.pattern.permute.xlu0 0
  %3335 = vperm.xlu0 %3334, %v3049
  %v3336 = vpop.permute.xlu0 %3335
  %3339 = vset.pattern.permute.xlu0 0
  %3340 = vperm.xlu0 %3339, %v3050
  %v3341 = vpop.permute.xlu0 %3340
  %3344 = vset.pattern.permute.xlu0 0
  %3345 = vperm.xlu0 %3344, %v3051
  %v3346 = vpop.permute.xlu0 %3345
  %3349 = vset.pattern.permute.xlu0 0
  %3350 = vperm.xlu0 %3349, %v3052
  %v3351 = vpop.permute.xlu0 %3350
  %3354 = vset.pattern.permute.xlu0 0
  %3355 = vperm.xlu0 %3354, %v3053
  %v3356 = vpop.permute.xlu0 %3355
  %3359 = vset.pattern.permute.xlu0 0
  %3360 = vperm.xlu0 %3359, %v3054
  %v3361 = vpop.permute.xlu0 %3360
  %3364 = vset.pattern.permute.xlu0 0
  %3365 = vperm.xlu0 %3364, %v3055
  %v3366 = vpop.permute.xlu0 %3365
  %3369 = vset.pattern.permute.xlu0 0
  %3370 = vperm.xlu0 %3369, %v3056
  %v3371 = vpop.permute.xlu0 %3370
  %3374 = vset.pattern.permute.xlu0 0
  %3375 = vperm.xlu0 %3374, %v3057
  %v3376 = vpop.permute.xlu0 %3375
  %v3506 = vunpack.c.l.b16 %v2834
  %v3507 = vunpack.c.h.b16 %v2834
  %v3508 = vunpack.c.l.b16 %v2835
  %v3509 = vunpack.c.h.b16 %v2835
  %v3510 = vunpack.c.l.b16 %v2836
  %v3511 = vunpack.c.h.b16 %v2836
  %v3512 = vunpack.c.l.b16 %v2837
  %v3513 = vunpack.c.h.b16 %v2837
  %v3514 = vunpack.c.l.b16 %v2838
  %v3515 = vunpack.c.h.b16 %v2838
  %v3516 = vunpack.c.l.b16 %v2839
  %v3517 = vunpack.c.h.b16 %v2839
  %v3518 = vunpack.c.l.b16 %v2840
  %v3519 = vunpack.c.h.b16 %v2840
  %v3520 = vunpack.c.l.b16 %v2841
  %v3521 = vunpack.c.h.b16 %v2841
  %v3522 = vunpack.c.l.b16 %v2842
  %v3523 = vunpack.c.h.b16 %v2842
  %v3524 = vunpack.c.l.b16 %v2843
  %v3525 = vunpack.c.h.b16 %v2843
  %v3526 = vunpack.c.l.b16 %v2844
  %v3527 = vunpack.c.h.b16 %v2844
  %v3528 = vunpack.c.l.b16 %v2845
  %v3529 = vunpack.c.h.b16 %v2845
  %v3530 = vunpack.c.l.b16 %v2846
  %v3531 = vunpack.c.h.b16 %v2846
  %v3532 = vunpack.c.l.b16 %v2847
  %v3533 = vunpack.c.h.b16 %v2847
  %v3534 = vunpack.c.l.b16 %v2848
  %v3535 = vunpack.c.h.b16 %v2848
  %v3536 = vunpack.c.l.b16 %v2849
  %v3537 = vunpack.c.h.b16 %v2849
  %v3538 = vunpack.c.l.b16 %v2850
  %v3539 = vunpack.c.h.b16 %v2850
  %v3540 = vunpack.c.l.b16 %v2851
  %v3541 = vunpack.c.h.b16 %v2851
  %v3542 = vunpack.c.l.b16 %v2852
  %v3543 = vunpack.c.h.b16 %v2852
  %v3544 = vunpack.c.l.b16 %v2853
  %v3545 = vunpack.c.h.b16 %v2853
  %v3546 = vunpack.c.l.b16 %v2854
  %v3547 = vunpack.c.h.b16 %v2854
  %v3548 = vunpack.c.l.b16 %v2855
  %v3549 = vunpack.c.h.b16 %v2855
  %v3550 = vunpack.c.l.b16 %v2856
  %v3551 = vunpack.c.h.b16 %v2856
  %v3552 = vunpack.c.l.b16 %v2857
  %v3553 = vunpack.c.h.b16 %v2857
  %v3554 = vunpack.c.l.b16 %v2858
  %v3555 = vunpack.c.h.b16 %v2858
  %v3556 = vunpack.c.l.b16 %v2859
  %v3557 = vunpack.c.h.b16 %v2859
  %v3558 = vunpack.c.l.b16 %v2860
  %v3559 = vunpack.c.h.b16 %v2860
  %v3560 = vunpack.c.l.b16 %v2861
  %v3561 = vunpack.c.h.b16 %v2861
  %v3562 = vunpack.c.l.b16 %v2862
  %v3563 = vunpack.c.h.b16 %v2862
  %v3564 = vunpack.c.l.b16 %v2863
  %v3565 = vunpack.c.h.b16 %v2863
  %v3566 = vunpack.c.l.b16 %v2864
  %v3567 = vunpack.c.h.b16 %v2864
  %v3568 = vunpack.c.l.b16 %v2865
  %v3569 = vunpack.c.h.b16 %v2865
  %v3570 = vunpack.c.l.b16 %v2866
  %v3571 = vunpack.c.h.b16 %v2866
  %v3572 = vunpack.c.l.b16 %v2867
  %v3573 = vunpack.c.h.b16 %v2867
  %v3574 = vunpack.c.l.b16 %v2868
  %v3575 = vunpack.c.h.b16 %v2868
  %v3576 = vunpack.c.l.b16 %v2869
  %v3577 = vunpack.c.h.b16 %v2869
  %v3578 = vunpack.c.l.b16 %v2870
  %v3579 = vunpack.c.h.b16 %v2870
  %v3580 = vunpack.c.l.b16 %v2871
  %v3581 = vunpack.c.h.b16 %v2871
  %v3582 = vunpack.c.l.b16 %v2872
  %v3583 = vunpack.c.h.b16 %v2872
  %v3584 = vunpack.c.l.b16 %v2873
  %v3585 = vunpack.c.h.b16 %v2873
  %v3586 = vunpack.c.l.b16 %v2874
  %v3587 = vunpack.c.h.b16 %v2874
  %v3588 = vunpack.c.l.b16 %v2875
  %v3589 = vunpack.c.h.b16 %v2875
  %v3590 = vunpack.c.l.b16 %v2876
  %v3591 = vunpack.c.h.b16 %v2876
  %v3592 = vunpack.c.l.b16 %v2877
  %v3593 = vunpack.c.h.b16 %v2877
  %v3594 = vunpack.c.l.b16 %v2878
  %v3595 = vunpack.c.h.b16 %v2878
  %v3596 = vunpack.c.l.b16 %v2879
  %v3597 = vunpack.c.h.b16 %v2879
  %v3598 = vunpack.c.l.b16 %v2880
  %v3599 = vunpack.c.h.b16 %v2880
  %v3600 = vunpack.c.l.b16 %v2881
  %v3601 = vunpack.c.h.b16 %v2881
  %v3602 = vunpack.c.l.b16 %v2882
  %v3603 = vunpack.c.h.b16 %v2882
  %v3604 = vunpack.c.l.b16 %v2883
  %v3605 = vunpack.c.h.b16 %v2883
  %v3606 = vunpack.c.l.b16 %v2884
  %v3607 = vunpack.c.h.b16 %v2884
  %v3608 = vunpack.c.l.b16 %v2885
  %v3609 = vunpack.c.h.b16 %v2885
  %v3610 = vunpack.c.l.b16 %v2886
  %v3611 = vunpack.c.h.b16 %v2886
  %v3612 = vunpack.c.l.b16 %v2887
  %v3613 = vunpack.c.h.b16 %v2887
  %v3614 = vunpack.c.l.b16 %v2888
  %v3615 = vunpack.c.h.b16 %v2888
  %v3616 = vunpack.c.l.b16 %v2889
  %v3617 = vunpack.c.h.b16 %v2889
  %v3618 = vunpack.c.l.b16 %v2890
  %v3619 = vunpack.c.h.b16 %v2890
  %v3620 = vunpack.c.l.b16 %v2891
  %v3621 = vunpack.c.h.b16 %v2891
  %v3622 = vunpack.c.l.b16 %v2892
  %v3623 = vunpack.c.h.b16 %v2892
  %v3624 = vunpack.c.l.b16 %v2893
  %v3625 = vunpack.c.h.b16 %v2893
  %v3626 = vunpack.c.l.b16 %v2894
  %v3627 = vunpack.c.h.b16 %v2894
  %v3628 = vunpack.c.l.b16 %v2895
  %v3629 = vunpack.c.h.b16 %v2895
  %v3630 = vunpack.c.l.b16 %v2896
  %v3631 = vunpack.c.h.b16 %v2896
  %v3632 = vunpack.c.l.b16 %v2897
  %v3633 = vunpack.c.h.b16 %v2897
  %v3634 = vunpack.c.l.b16 %v2898
  %v3635 = vunpack.c.h.b16 %v2898
  %v3636 = vunpack.c.l.b16 %v2899
  %v3637 = vunpack.c.h.b16 %v2899
  %v3638 = vunpack.c.l.b16 %v2900
  %v3639 = vunpack.c.h.b16 %v2900
  %v3640 = vunpack.c.l.b16 %v2901
  %v3641 = vunpack.c.h.b16 %v2901
  %v3642 = vunpack.c.l.b16 %v2902
  %v3643 = vunpack.c.h.b16 %v2902
  %v3644 = vunpack.c.l.b16 %v2903
  %v3645 = vunpack.c.h.b16 %v2903
  %v3646 = vunpack.c.l.b16 %v2904
  %v3647 = vunpack.c.h.b16 %v2904
  %v3648 = vunpack.c.l.b16 %v2905
  %v3649 = vunpack.c.h.b16 %v2905
  %v3650 = vunpack.c.l.b16 %v2906
  %v3651 = vunpack.c.h.b16 %v2906
  %v3652 = vunpack.c.l.b16 %v2907
  %v3653 = vunpack.c.h.b16 %v2907
  %v3654 = vunpack.c.l.b16 %v2908
  %v3655 = vunpack.c.h.b16 %v2908
  %v3656 = vunpack.c.l.b16 %v2909
  %v3657 = vunpack.c.h.b16 %v2909
  %v3658 = vunpack.c.l.b16 %v2910
  %v3659 = vunpack.c.h.b16 %v2910
  %v3660 = vunpack.c.l.b16 %v2911
  %v3661 = vunpack.c.h.b16 %v2911
  %v3662 = vunpack.c.l.b16 %v2912
  %v3663 = vunpack.c.h.b16 %v2912
  %v3664 = vunpack.c.l.b16 %v2913
  %v3665 = vunpack.c.h.b16 %v2913
  %v3666 = vunpack.c.l.b16 %v2914
  %v3667 = vunpack.c.h.b16 %v2914
  %v3668 = vunpack.c.l.b16 %v2915
  %v3669 = vunpack.c.h.b16 %v2915
  %v3670 = vunpack.c.l.b16 %v2916
  %v3671 = vunpack.c.h.b16 %v2916
  %v3672 = vunpack.c.l.b16 %v2917
  %v3673 = vunpack.c.h.b16 %v2917
  %v3674 = vunpack.c.l.b16 %v2918
  %v3675 = vunpack.c.h.b16 %v2918
  %v3676 = vunpack.c.l.b16 %v2919
  %v3677 = vunpack.c.h.b16 %v2919
  %v3678 = vunpack.c.l.b16 %v2920
  %v3679 = vunpack.c.h.b16 %v2920
  %v3680 = vunpack.c.l.b16 %v2921
  %v3681 = vunpack.c.h.b16 %v2921
  %v3682 = vunpack.c.l.b16 %v2922
  %v3683 = vunpack.c.h.b16 %v2922
  %v3684 = vunpack.c.l.b16 %v2923
  %v3685 = vunpack.c.h.b16 %v2923
  %v3686 = vunpack.c.l.b16 %v2924
  %v3687 = vunpack.c.h.b16 %v2924
  %v3688 = vunpack.c.l.b16 %v2925
  %v3689 = vunpack.c.h.b16 %v2925
  %v3690 = vunpack.c.l.b16 %v2926
  %v3691 = vunpack.c.h.b16 %v2926
  %v3692 = vunpack.c.l.b16 %v2927
  %v3693 = vunpack.c.h.b16 %v2927
  %v3694 = vunpack.c.l.b16 %v2928
  %v3695 = vunpack.c.h.b16 %v2928
  %v3696 = vunpack.c.l.b16 %v2929
  %v3697 = vunpack.c.h.b16 %v2929
  %v3698 = vunpack.c.l.b16 %v2930
  %v3699 = vunpack.c.h.b16 %v2930
  %v3700 = vunpack.c.l.b16 %v2931
  %v3701 = vunpack.c.h.b16 %v2931
  %v3702 = vunpack.c.l.b16 %v2932
  %v3703 = vunpack.c.h.b16 %v2932
  %v3704 = vunpack.c.l.b16 %v2933
  %v3705 = vunpack.c.h.b16 %v2933
  %v3706 = vunpack.c.l.b16 %v2934
  %v3707 = vunpack.c.h.b16 %v2934
  %v3708 = vunpack.c.l.b16 %v2935
  %v3709 = vunpack.c.h.b16 %v2935
  %v3710 = vunpack.c.l.b16 %v2936
  %v3711 = vunpack.c.h.b16 %v2936
  %v3712 = vunpack.c.l.b16 %v2937
  %v3713 = vunpack.c.h.b16 %v2937
  %v3714 = vunpack.c.l.b16 %v2938
  %v3715 = vunpack.c.h.b16 %v2938
  %v3716 = vunpack.c.l.b16 %v2939
  %v3717 = vunpack.c.h.b16 %v2939
  %v3718 = vunpack.c.l.b16 %v2940
  %v3719 = vunpack.c.h.b16 %v2940
  %v3720 = vunpack.c.l.b16 %v2941
  %v3721 = vunpack.c.h.b16 %v2941
  %v3722 = vunpack.c.l.b16 %v2942
  %v3723 = vunpack.c.h.b16 %v2942
  %v3724 = vunpack.c.l.b16 %v2943
  %v3725 = vunpack.c.h.b16 %v2943
  %v3726 = vunpack.c.l.b16 %v2944
  %v3727 = vunpack.c.h.b16 %v2944
  %v3728 = vunpack.c.l.b16 %v2945
  %v3729 = vunpack.c.h.b16 %v2945
  %v3730 = vunpack.c.l.b16 %v2946
  %v3731 = vunpack.c.h.b16 %v2946
  %v3732 = vunpack.c.l.b16 %v2947
  %v3733 = vunpack.c.h.b16 %v2947
  %v3734 = vunpack.c.l.b16 %v2948
  %v3735 = vunpack.c.h.b16 %v2948
  %v3736 = vunpack.c.l.b16 %v2949
  %v3737 = vunpack.c.h.b16 %v2949
  %v3738 = vunpack.c.l.b16 %v2950
  %v3739 = vunpack.c.h.b16 %v2950
  %v3740 = vunpack.c.l.b16 %v2951
  %v3741 = vunpack.c.h.b16 %v2951
  %v3742 = vunpack.c.l.b16 %v2952
  %v3743 = vunpack.c.h.b16 %v2952
  %v3744 = vunpack.c.l.b16 %v2953
  %v3745 = vunpack.c.h.b16 %v2953
  %v3746 = vunpack.c.l.b16 %v2954
  %v3747 = vunpack.c.h.b16 %v2954
  %v3748 = vunpack.c.l.b16 %v2955
  %v3749 = vunpack.c.h.b16 %v2955
  %v3750 = vunpack.c.l.b16 %v2956
  %v3751 = vunpack.c.h.b16 %v2956
  %v3752 = vunpack.c.l.b16 %v2957
  %v3753 = vunpack.c.h.b16 %v2957
  %v3754 = vunpack.c.l.b16 %v2958
  %v3755 = vunpack.c.h.b16 %v2958
  %v3756 = vunpack.c.l.b16 %v2959
  %v3757 = vunpack.c.h.b16 %v2959
  %v3758 = vunpack.c.l.b16 %v2960
  %v3759 = vunpack.c.h.b16 %v2960
  %v3760 = vunpack.c.l.b16 %v2961
  %v3761 = vunpack.c.h.b16 %v2961
  %v3762 = vpack.c.b16 %v3510, %v3506
  %v3763 = vpack.c.b16 %v3511, %v3507
  %v3764 = vpack.c.b16 %v3512, %v3508
  %v3765 = vpack.c.b16 %v3513, %v3509
  %v3766 = vpack.c.b16 %v3518, %v3514
  %v3767 = vpack.c.b16 %v3519, %v3515
  %v3768 = vpack.c.b16 %v3520, %v3516
  %v3769 = vpack.c.b16 %v3521, %v3517
  %v3770 = vpack.c.b16 %v3526, %v3522
  %v3771 = vpack.c.b16 %v3527, %v3523
  %v3772 = vpack.c.b16 %v3528, %v3524
  %v3773 = vpack.c.b16 %v3529, %v3525
  %v3774 = vpack.c.b16 %v3534, %v3530
  %v3775 = vpack.c.b16 %v3535, %v3531
  %v3776 = vpack.c.b16 %v3536, %v3532
  %v3777 = vpack.c.b16 %v3537, %v3533
  %v3778 = vpack.c.b16 %v3542, %v3538
  %v3779 = vpack.c.b16 %v3543, %v3539
  %v3780 = vpack.c.b16 %v3544, %v3540
  %v3781 = vpack.c.b16 %v3545, %v3541
  %v3782 = vpack.c.b16 %v3550, %v3546
  %v3783 = vpack.c.b16 %v3551, %v3547
  %v3784 = vpack.c.b16 %v3552, %v3548
  %v3785 = vpack.c.b16 %v3553, %v3549
  %v3786 = vpack.c.b16 %v3558, %v3554
  %v3787 = vpack.c.b16 %v3559, %v3555
  %v3788 = vpack.c.b16 %v3560, %v3556
  %v3789 = vpack.c.b16 %v3561, %v3557
  %v3790 = vpack.c.b16 %v3566, %v3562
  %v3791 = vpack.c.b16 %v3567, %v3563
  %v3792 = vpack.c.b16 %v3568, %v3564
  %v3793 = vpack.c.b16 %v3569, %v3565
  %v3794 = vpack.c.b16 %v3574, %v3570
  %v3795 = vpack.c.b16 %v3575, %v3571
  %v3796 = vpack.c.b16 %v3576, %v3572
  %v3797 = vpack.c.b16 %v3577, %v3573
  %v3798 = vpack.c.b16 %v3582, %v3578
  %v3799 = vpack.c.b16 %v3583, %v3579
  %v3800 = vpack.c.b16 %v3584, %v3580
  %v3801 = vpack.c.b16 %v3585, %v3581
  %v3802 = vpack.c.b16 %v3590, %v3586
  %v3803 = vpack.c.b16 %v3591, %v3587
  %v3804 = vpack.c.b16 %v3592, %v3588
  %v3805 = vpack.c.b16 %v3593, %v3589
  %v3806 = vpack.c.b16 %v3598, %v3594
  %v3807 = vpack.c.b16 %v3599, %v3595
  %v3808 = vpack.c.b16 %v3600, %v3596
  %v3809 = vpack.c.b16 %v3601, %v3597
  %v3810 = vpack.c.b16 %v3606, %v3602
  %v3811 = vpack.c.b16 %v3607, %v3603
  %v3812 = vpack.c.b16 %v3608, %v3604
  %v3813 = vpack.c.b16 %v3609, %v3605
  %v3814 = vpack.c.b16 %v3614, %v3610
  %v3815 = vpack.c.b16 %v3615, %v3611
  %v3816 = vpack.c.b16 %v3616, %v3612
  %v3817 = vpack.c.b16 %v3617, %v3613
  %v3818 = vpack.c.b16 %v3622, %v3618
  %v3819 = vpack.c.b16 %v3623, %v3619
  %v3820 = vpack.c.b16 %v3624, %v3620
  %v3821 = vpack.c.b16 %v3625, %v3621
  %v3822 = vpack.c.b16 %v3630, %v3626
  %v3823 = vpack.c.b16 %v3631, %v3627
  %v3824 = vpack.c.b16 %v3632, %v3628
  %v3825 = vpack.c.b16 %v3633, %v3629
  %v3826 = vpack.c.b16 %v3638, %v3634
  %v3827 = vpack.c.b16 %v3639, %v3635
  %v3828 = vpack.c.b16 %v3640, %v3636
  %v3829 = vpack.c.b16 %v3641, %v3637
  %v3830 = vpack.c.b16 %v3646, %v3642
  %v3831 = vpack.c.b16 %v3647, %v3643
  %v3832 = vpack.c.b16 %v3648, %v3644
  %v3833 = vpack.c.b16 %v3649, %v3645
  %v3834 = vpack.c.b16 %v3654, %v3650
  %v3835 = vpack.c.b16 %v3655, %v3651
  %v3836 = vpack.c.b16 %v3656, %v3652
  %v3837 = vpack.c.b16 %v3657, %v3653
  %v3838 = vpack.c.b16 %v3662, %v3658
  %v3839 = vpack.c.b16 %v3663, %v3659
  %v3840 = vpack.c.b16 %v3664, %v3660
  %v3841 = vpack.c.b16 %v3665, %v3661
  %v3842 = vpack.c.b16 %v3670, %v3666
  %v3843 = vpack.c.b16 %v3671, %v3667
  %v3844 = vpack.c.b16 %v3672, %v3668
  %v3845 = vpack.c.b16 %v3673, %v3669
  %v3846 = vpack.c.b16 %v3678, %v3674
  %v3847 = vpack.c.b16 %v3679, %v3675
  %v3848 = vpack.c.b16 %v3680, %v3676
  %v3849 = vpack.c.b16 %v3681, %v3677
  %v3850 = vpack.c.b16 %v3686, %v3682
  %v3851 = vpack.c.b16 %v3687, %v3683
  %v3852 = vpack.c.b16 %v3688, %v3684
  %v3853 = vpack.c.b16 %v3689, %v3685
  %v3854 = vpack.c.b16 %v3694, %v3690
  %v3855 = vpack.c.b16 %v3695, %v3691
  %v3856 = vpack.c.b16 %v3696, %v3692
  %v3857 = vpack.c.b16 %v3697, %v3693
  %v3858 = vpack.c.b16 %v3702, %v3698
  %v3859 = vpack.c.b16 %v3703, %v3699
  %v3860 = vpack.c.b16 %v3704, %v3700
  %v3861 = vpack.c.b16 %v3705, %v3701
  %v3862 = vpack.c.b16 %v3710, %v3706
  %v3863 = vpack.c.b16 %v3711, %v3707
  %v3864 = vpack.c.b16 %v3712, %v3708
  %v3865 = vpack.c.b16 %v3713, %v3709
  %v3866 = vpack.c.b16 %v3718, %v3714
  %v3867 = vpack.c.b16 %v3719, %v3715
  %v3868 = vpack.c.b16 %v3720, %v3716
  %v3869 = vpack.c.b16 %v3721, %v3717
  %v3870 = vpack.c.b16 %v3726, %v3722
  %v3871 = vpack.c.b16 %v3727, %v3723
  %v3872 = vpack.c.b16 %v3728, %v3724
  %v3873 = vpack.c.b16 %v3729, %v3725
  %v3874 = vpack.c.b16 %v3734, %v3730
  %v3875 = vpack.c.b16 %v3735, %v3731
  %v3876 = vpack.c.b16 %v3736, %v3732
  %v3877 = vpack.c.b16 %v3737, %v3733
  %v3878 = vpack.c.b16 %v3742, %v3738
  %v3879 = vpack.c.b16 %v3743, %v3739
  %v3880 = vpack.c.b16 %v3744, %v3740
  %v3881 = vpack.c.b16 %v3745, %v3741
  %v3882 = vpack.c.b16 %v3750, %v3746
  %v3883 = vpack.c.b16 %v3751, %v3747
  %v3884 = vpack.c.b16 %v3752, %v3748
  %v3885 = vpack.c.b16 %v3753, %v3749
  %v3886 = vpack.c.b16 %v3758, %v3754
  %v3887 = vpack.c.b16 %v3759, %v3755
  %v3888 = vpack.c.b16 %v3760, %v3756
  %v3889 = vpack.c.b16 %v3761, %v3757
  %4018 = vmatprep.subr.bf16.mxu0 0
  %4019 = vmatpush1.bf16.msra.mxu0 %v2969
  %4020 = vmatprep.subr.bf16.mxu0 0
  %4021 = vmatpush1.bf16.msra.mxu0 %v2968
  %4022 = vmatprep.subr.bf16.mxu0 0
  %4023 = vmatpush1.bf16.msra.mxu0 %v2967
  %4024 = vmatprep.subr.bf16.mxu0 0
  %4025 = vmatpush1.bf16.msra.mxu0 %v2966
  %4026 = vmatprep.subr.bf16.mxu0 0
  %4027 = vmatpush1.bf16.msra.mxu0 %v2965
  %4028 = vmatprep.subr.bf16.mxu0 0
  %4029 = vmatpush1.bf16.msra.mxu0 %v2964
  %4030 = vmatprep.subr.bf16.mxu0 0
  %4031 = vmatpush1.bf16.msra.mxu0 %v2963
  %4032 = vmatprep.subr.bf16.mxu0 0
  %4033 = vmatpush1.bf16.msra.mxu0 %v2962
  %4034 = vmatprep.subr.bf16.mxu0 0
  %4035 = vmatpush2.bf16.msra.mxu0 %v2977
  %4036 = vmatprep.subr.bf16.mxu0 0
  %4037 = vmatpush2.bf16.msra.mxu0 %v2976
  %4038 = vmatprep.subr.bf16.mxu0 0
  %4039 = vmatpush2.bf16.msra.mxu0 %v2975
  %4040 = vmatprep.subr.bf16.mxu0 0
  %4041 = vmatpush2.bf16.msra.mxu0 %v2974
  %4042 = vmatprep.subr.bf16.mxu0 0
  %4043 = vmatpush2.bf16.msra.mxu0 %v2973
  %4044 = vmatprep.subr.bf16.mxu0 0
  %4045 = vmatpush2.bf16.msra.mxu0 %v2972
  %4046 = vmatprep.subr.bf16.mxu0 0
  %4047 = vmatpush2.bf16.msra.mxu0 %v2971
  %4048 = vmatprep.subr.bf16.mxu0 0
  %4049 = vmatpush2.bf16.msra.mxu0 %v2970
  %4050 = vmatprep.mubr.bf16.mxu0 %v3763
  %4051 = vmatmul.mubr.bf16.gmra.mxu0 %v3762
  %v4052 = vpop.f32.mrf.mxu0
  %v4053 = vadd.f32 %v3061, %v4052
  %v4054 = vpop.f32.mrf.mxu0
  %v4055 = vpop.f32.mrf.mxu0
  %v4056 = vadd.f32 %v3066, %v4055
  %v4057 = vpop.f32.mrf.mxu0
  %4058 = vmatprep.mubr.bf16.mxu0 %v3767
  %4059 = vmatmul.mubr.bf16.gmra.mxu0 %v3766
  %v4060 = vpop.f32.mrf.mxu0
  %v4061 = vadd.f32 %v3071, %v4060
  %v4062 = vpop.f32.mrf.mxu0
  %v4063 = vpop.f32.mrf.mxu0
  %v4064 = vadd.f32 %v3076, %v4063
  %v4065 = vpop.f32.mrf.mxu0
  %4066 = vmatprep.mubr.bf16.mxu0 %v3771
  %4067 = vmatmul.mubr.bf16.gmra.mxu0 %v3770
  %v4068 = vpop.f32.mrf.mxu0
  %v4069 = vadd.f32 %v3081, %v4068
  %v4070 = vpop.f32.mrf.mxu0
  %v4071 = vpop.f32.mrf.mxu0
  %v4072 = vadd.f32 %v3086, %v4071
  %v4073 = vpop.f32.mrf.mxu0
  %4074 = vmatprep.mubr.bf16.mxu0 %v3775
  %4075 = vmatmul.mubr.bf16.gmra.mxu0 %v3774
  %v4076 = vpop.f32.mrf.mxu0
  %v4077 = vadd.f32 %v3091, %v4076
  %v4078 = vpop.f32.mrf.mxu0
  %v4079 = vpop.f32.mrf.mxu0
  %v4080 = vadd.f32 %v3096, %v4079
  %v4081 = vpop.f32.mrf.mxu0
  %4082 = vmatprep.mubr.bf16.mxu0 %v3779
  %4083 = vmatmul.mubr.bf16.gmra.mxu0 %v3778
  %v4084 = vpop.f32.mrf.mxu0
  %v4085 = vadd.f32 %v3101, %v4084
  %v4086 = vpop.f32.mrf.mxu0
  %v4087 = vpop.f32.mrf.mxu0
  %v4088 = vadd.f32 %v3106, %v4087
  %v4089 = vpop.f32.mrf.mxu0
  %4090 = vmatprep.mubr.bf16.mxu0 %v3783
  %4091 = vmatmul.mubr.bf16.gmra.mxu0 %v3782
  %v4092 = vpop.f32.mrf.mxu0
  %v4093 = vadd.f32 %v3111, %v4092
  %v4094 = vpop.f32.mrf.mxu0
  %v4095 = vpop.f32.mrf.mxu0
  %v4096 = vadd.f32 %v3116, %v4095
  %v4097 = vpop.f32.mrf.mxu0
  %4098 = vmatprep.mubr.bf16.mxu0 %v3787
  %4099 = vmatmul.mubr.bf16.gmra.mxu0 %v3786
  %v4100 = vpop.f32.mrf.mxu0
  %v4101 = vadd.f32 %v3121, %v4100
  %v4102 = vpop.f32.mrf.mxu0
  %v4103 = vpop.f32.mrf.mxu0
  %v4104 = vadd.f32 %v3126, %v4103
  %v4105 = vpop.f32.mrf.mxu0
  %4106 = vmatprep.mubr.bf16.mxu0 %v3791
  %4107 = vmatmul.mubr.bf16.gmra.mxu0 %v3790
  %v4108 = vpop.f32.mrf.mxu0
  %v4109 = vadd.f32 %v3131, %v4108
  %v4110 = vpop.f32.mrf.mxu0
  %v4111 = vpop.f32.mrf.mxu0
  %v4112 = vadd.f32 %v3136, %v4111
  %v4113 = vpop.f32.mrf.mxu0
  %4114 = vmatprep.mubr.bf16.mxu0 %v3795
  %4115 = vmatmul.mubr.bf16.gmra.mxu0 %v3794
  %v4116 = vpop.f32.mrf.mxu0
  %v4117 = vadd.f32 %v3141, %v4116
  %v4118 = vpop.f32.mrf.mxu0
  %v4119 = vpop.f32.mrf.mxu0
  %v4120 = vadd.f32 %v3146, %v4119
  %v4121 = vpop.f32.mrf.mxu0
  %4122 = vmatprep.mubr.bf16.mxu0 %v3799
  %4123 = vmatmul.mubr.bf16.gmra.mxu0 %v3798
  %v4124 = vpop.f32.mrf.mxu0
  %v4125 = vadd.f32 %v3151, %v4124
  %v4126 = vpop.f32.mrf.mxu0
  %v4127 = vpop.f32.mrf.mxu0
  %v4128 = vadd.f32 %v3156, %v4127
  %v4129 = vpop.f32.mrf.mxu0
  %4130 = vmatprep.mubr.bf16.mxu0 %v3803
  %4131 = vmatmul.mubr.bf16.gmra.mxu0 %v3802
  %v4132 = vpop.f32.mrf.mxu0
  %v4133 = vadd.f32 %v3161, %v4132
  %v4134 = vpop.f32.mrf.mxu0
  %v4135 = vpop.f32.mrf.mxu0
  %v4136 = vadd.f32 %v3166, %v4135
  %v4137 = vpop.f32.mrf.mxu0
  %4138 = vmatprep.mubr.bf16.mxu0 %v3807
  %4139 = vmatmul.mubr.bf16.gmra.mxu0 %v3806
  %v4140 = vpop.f32.mrf.mxu0
  %v4141 = vadd.f32 %v3171, %v4140
  %v4142 = vpop.f32.mrf.mxu0
  %v4143 = vpop.f32.mrf.mxu0
  %v4144 = vadd.f32 %v3176, %v4143
  %v4145 = vpop.f32.mrf.mxu0
  %4146 = vmatprep.mubr.bf16.mxu0 %v3811
  %4147 = vmatmul.mubr.bf16.gmra.mxu0 %v3810
  %v4148 = vpop.f32.mrf.mxu0
  %v4149 = vadd.f32 %v3181, %v4148
  %v4150 = vpop.f32.mrf.mxu0
  %v4151 = vpop.f32.mrf.mxu0
  %v4152 = vadd.f32 %v3186, %v4151
  %v4153 = vpop.f32.mrf.mxu0
  %4154 = vmatprep.mubr.bf16.mxu0 %v3815
  %4155 = vmatmul.mubr.bf16.gmra.mxu0 %v3814
  %v4156 = vpop.f32.mrf.mxu0
  %v4157 = vadd.f32 %v3191, %v4156
  %v4158 = vpop.f32.mrf.mxu0
  %v4159 = vpop.f32.mrf.mxu0
  %v4160 = vadd.f32 %v3196, %v4159
  %v4161 = vpop.f32.mrf.mxu0
  %4162 = vmatprep.mubr.bf16.mxu0 %v3819
  %4163 = vmatmul.mubr.bf16.gmra.mxu0 %v3818
  %v4164 = vpop.f32.mrf.mxu0
  %v4165 = vadd.f32 %v3201, %v4164
  %v4166 = vpop.f32.mrf.mxu0
  %v4167 = vpop.f32.mrf.mxu0
  %v4168 = vadd.f32 %v3206, %v4167
  %v4169 = vpop.f32.mrf.mxu0
  %4170 = vmatprep.mubr.bf16.mxu0 %v3823
  %4171 = vmatmul.mubr.bf16.gmra.mxu0 %v3822
  %v4172 = vpop.f32.mrf.mxu0
  %v4173 = vadd.f32 %v3211, %v4172
  %v4174 = vpop.f32.mrf.mxu0
  %v4175 = vpop.f32.mrf.mxu0
  %v4176 = vadd.f32 %v3216, %v4175
  %v4177 = vpop.f32.mrf.mxu0
  %4178 = vmatprep.mubr.bf16.mxu0 %v3827
  %4179 = vmatmul.mubr.bf16.gmra.mxu0 %v3826
  %v4180 = vpop.f32.mrf.mxu0
  %v4181 = vadd.f32 %v3221, %v4180
  %v4182 = vpop.f32.mrf.mxu0
  %v4183 = vpop.f32.mrf.mxu0
  %v4184 = vadd.f32 %v3226, %v4183
  %v4185 = vpop.f32.mrf.mxu0
  %4186 = vmatprep.mubr.bf16.mxu0 %v3831
  %4187 = vmatmul.mubr.bf16.gmra.mxu0 %v3830
  %v4188 = vpop.f32.mrf.mxu0
  %v4189 = vadd.f32 %v3231, %v4188
  %v4190 = vpop.f32.mrf.mxu0
  %v4191 = vpop.f32.mrf.mxu0
  %v4192 = vadd.f32 %v3236, %v4191
  %v4193 = vpop.f32.mrf.mxu0
  %4194 = vmatprep.mubr.bf16.mxu0 %v3835
  %4195 = vmatmul.mubr.bf16.gmra.mxu0 %v3834
  %v4196 = vpop.f32.mrf.mxu0
  %v4197 = vadd.f32 %v3241, %v4196
  %v4198 = vpop.f32.mrf.mxu0
  %v4199 = vpop.f32.mrf.mxu0
  %v4200 = vadd.f32 %v3246, %v4199
  %v4201 = vpop.f32.mrf.mxu0
  %4202 = vmatprep.mubr.bf16.mxu0 %v3839
  %4203 = vmatmul.mubr.bf16.gmra.mxu0 %v3838
  %v4204 = vpop.f32.mrf.mxu0
  %v4205 = vadd.f32 %v3251, %v4204
  %v4206 = vpop.f32.mrf.mxu0
  %v4207 = vpop.f32.mrf.mxu0
  %v4208 = vadd.f32 %v3256, %v4207
  %v4209 = vpop.f32.mrf.mxu0
  %4210 = vmatprep.mubr.bf16.mxu0 %v3843
  %4211 = vmatmul.mubr.bf16.gmra.mxu0 %v3842
  %v4212 = vpop.f32.mrf.mxu0
  %v4213 = vadd.f32 %v3261, %v4212
  %v4214 = vpop.f32.mrf.mxu0
  %v4215 = vpop.f32.mrf.mxu0
  %v4216 = vadd.f32 %v3266, %v4215
  %v4217 = vpop.f32.mrf.mxu0
  %4218 = vmatprep.mubr.bf16.mxu0 %v3847
  %4219 = vmatmul.mubr.bf16.gmra.mxu0 %v3846
  %v4220 = vpop.f32.mrf.mxu0
  %v4221 = vadd.f32 %v3271, %v4220
  %v4222 = vpop.f32.mrf.mxu0
  %v4223 = vpop.f32.mrf.mxu0
  %v4224 = vadd.f32 %v3276, %v4223
  %v4225 = vpop.f32.mrf.mxu0
  %4226 = vmatprep.mubr.bf16.mxu0 %v3851
  %4227 = vmatmul.mubr.bf16.gmra.mxu0 %v3850
  %v4228 = vpop.f32.mrf.mxu0
  %v4229 = vadd.f32 %v3281, %v4228
  %v4230 = vpop.f32.mrf.mxu0
  %v4231 = vpop.f32.mrf.mxu0
  %v4232 = vadd.f32 %v3286, %v4231
  %v4233 = vpop.f32.mrf.mxu0
  %4234 = vmatprep.mubr.bf16.mxu0 %v3855
  %4235 = vmatmul.mubr.bf16.gmra.mxu0 %v3854
  %v4236 = vpop.f32.mrf.mxu0
  %v4237 = vadd.f32 %v3291, %v4236
  %v4238 = vpop.f32.mrf.mxu0
  %v4239 = vpop.f32.mrf.mxu0
  %v4240 = vadd.f32 %v3296, %v4239
  %v4241 = vpop.f32.mrf.mxu0
  %4242 = vmatprep.mubr.bf16.mxu0 %v3859
  %4243 = vmatmul.mubr.bf16.gmra.mxu0 %v3858
  %v4244 = vpop.f32.mrf.mxu0
  %v4245 = vadd.f32 %v3301, %v4244
  %v4246 = vpop.f32.mrf.mxu0
  %v4247 = vpop.f32.mrf.mxu0
  %v4248 = vadd.f32 %v3306, %v4247
  %v4249 = vpop.f32.mrf.mxu0
  %4250 = vmatprep.mubr.bf16.mxu0 %v3863
  %4251 = vmatmul.mubr.bf16.gmra.mxu0 %v3862
  %v4252 = vpop.f32.mrf.mxu0
  %v4253 = vadd.f32 %v3311, %v4252
  %v4254 = vpop.f32.mrf.mxu0
  %v4255 = vpop.f32.mrf.mxu0
  %v4256 = vadd.f32 %v3316, %v4255
  %v4257 = vpop.f32.mrf.mxu0
  %4258 = vmatprep.mubr.bf16.mxu0 %v3867
  %4259 = vmatmul.mubr.bf16.gmra.mxu0 %v3866
  %v4260 = vpop.f32.mrf.mxu0
  %v4261 = vadd.f32 %v3321, %v4260
  %v4262 = vpop.f32.mrf.mxu0
  %v4263 = vpop.f32.mrf.mxu0
  %v4264 = vadd.f32 %v3326, %v4263
  %v4265 = vpop.f32.mrf.mxu0
  %4266 = vmatprep.mubr.bf16.mxu0 %v3871
  %4267 = vmatmul.mubr.bf16.gmra.mxu0 %v3870
  %v4268 = vpop.f32.mrf.mxu0
  %v4269 = vadd.f32 %v3331, %v4268
  %v4270 = vpop.f32.mrf.mxu0
  %v4271 = vpop.f32.mrf.mxu0
  %v4272 = vadd.f32 %v3336, %v4271
  %v4273 = vpop.f32.mrf.mxu0
  %4274 = vmatprep.mubr.bf16.mxu0 %v3875
  %4275 = vmatmul.mubr.bf16.gmra.mxu0 %v3874
  %v4276 = vpop.f32.mrf.mxu0
  %v4277 = vadd.f32 %v3341, %v4276
  %v4278 = vpop.f32.mrf.mxu0
  %v4279 = vpop.f32.mrf.mxu0
  %v4280 = vadd.f32 %v3346, %v4279
  %v4281 = vpop.f32.mrf.mxu0
  %4282 = vmatprep.mubr.bf16.mxu0 %v3879
  %4283 = vmatmul.mubr.bf16.gmra.mxu0 %v3878
  %v4284 = vpop.f32.mrf.mxu0
  %v4285 = vadd.f32 %v3351, %v4284
  %v4286 = vpop.f32.mrf.mxu0
  %v4287 = vpop.f32.mrf.mxu0
  %v4288 = vadd.f32 %v3356, %v4287
  %v4289 = vpop.f32.mrf.mxu0
  %4290 = vmatprep.mubr.bf16.mxu0 %v3883
  %4291 = vmatmul.mubr.bf16.gmra.mxu0 %v3882
  %v4292 = vpop.f32.mrf.mxu0
  %v4293 = vadd.f32 %v3361, %v4292
  %v4294 = vpop.f32.mrf.mxu0
  %v4295 = vpop.f32.mrf.mxu0
  %v4296 = vadd.f32 %v3366, %v4295
  %v4297 = vpop.f32.mrf.mxu0
  %4298 = vmatprep.mubr.bf16.mxu0 %v3887
  %4299 = vmatmul.mubr.bf16.gmra.mxu0 %v3886
  %v4300 = vpop.f32.mrf.mxu0
  %v4301 = vadd.f32 %v3371, %v4300
  %v4302 = vpop.f32.mrf.mxu0
  %v4303 = vpop.f32.mrf.mxu0
  %v4304 = vadd.f32 %v3376, %v4303
  %v4305 = vpop.f32.mrf.mxu0
  %4306 = vdwg.mxu0
  %4307 = vmatprep.subr.bf16.mxu0 0
  %4308 = vmatpush1.bf16.msra.mxu0 %v2985
  %4309 = vmatprep.subr.bf16.mxu0 0
  %4310 = vmatpush1.bf16.msra.mxu0 %v2984
  %4311 = vmatprep.subr.bf16.mxu0 0
  %4312 = vmatpush1.bf16.msra.mxu0 %v2983
  %4313 = vmatprep.subr.bf16.mxu0 0
  %4314 = vmatpush1.bf16.msra.mxu0 %v2982
  %4315 = vmatprep.subr.bf16.mxu0 0
  %4316 = vmatpush1.bf16.msra.mxu0 %v2981
  %4317 = vmatprep.subr.bf16.mxu0 0
  %4318 = vmatpush1.bf16.msra.mxu0 %v2980
  %4319 = vmatprep.subr.bf16.mxu0 0
  %4320 = vmatpush1.bf16.msra.mxu0 %v2979
  %4321 = vmatprep.subr.bf16.mxu0 0
  %4322 = vmatpush1.bf16.msra.mxu0 %v2978
  %4323 = vmatprep.subr.bf16.mxu0 0
  %4324 = vmatpush2.bf16.msra.mxu0 %v2993
  %4325 = vmatprep.subr.bf16.mxu0 0
  %4326 = vmatpush2.bf16.msra.mxu0 %v2992
  %4327 = vmatprep.subr.bf16.mxu0 0
  %4328 = vmatpush2.bf16.msra.mxu0 %v2991
  %4329 = vmatprep.subr.bf16.mxu0 0
  %4330 = vmatpush2.bf16.msra.mxu0 %v2990
  %4331 = vmatprep.subr.bf16.mxu0 0
  %4332 = vmatpush2.bf16.msra.mxu0 %v2989
  %4333 = vmatprep.subr.bf16.mxu0 0
  %4334 = vmatpush2.bf16.msra.mxu0 %v2988
  %4335 = vmatprep.subr.bf16.mxu0 0
  %4336 = vmatpush2.bf16.msra.mxu0 %v2987
  %4337 = vmatprep.subr.bf16.mxu0 0
  %4338 = vmatpush2.bf16.msra.mxu0 %v2986
  %4339 = vmatprep.mubr.bf16.mxu0 %v3765
  %4340 = vmatmul.mubr.bf16.gmra.mxu0 %v3764
  %v4341 = vpop.f32.mrf.mxu0
  %v4342 = vadd.f32 %v4053, %v4341
  %v4343 = vpop.f32.mrf.mxu0
  %v4344 = vpop.f32.mrf.mxu0
  %v4345 = vadd.f32 %v4056, %v4344
  %v4346 = vpop.f32.mrf.mxu0
  %4347 = vmatprep.mubr.bf16.mxu0 %v3769
  %4348 = vmatmul.mubr.bf16.gmra.mxu0 %v3768
  %v4349 = vpop.f32.mrf.mxu0
  %v4350 = vadd.f32 %v4061, %v4349
  %v4351 = vpop.f32.mrf.mxu0
  %v4352 = vpop.f32.mrf.mxu0
  %v4353 = vadd.f32 %v4064, %v4352
  %v4354 = vpop.f32.mrf.mxu0
  %4355 = vmatprep.mubr.bf16.mxu0 %v3773
  %4356 = vmatmul.mubr.bf16.gmra.mxu0 %v3772
  %v4357 = vpop.f32.mrf.mxu0
  %v4358 = vadd.f32 %v4069, %v4357
  %v4359 = vpop.f32.mrf.mxu0
  %v4360 = vpop.f32.mrf.mxu0
  %v4361 = vadd.f32 %v4072, %v4360
  %v4362 = vpop.f32.mrf.mxu0
  %4363 = vmatprep.mubr.bf16.mxu0 %v3777
  %4364 = vmatmul.mubr.bf16.gmra.mxu0 %v3776
  %v4365 = vpop.f32.mrf.mxu0
  %v4366 = vadd.f32 %v4077, %v4365
  %v4367 = vpop.f32.mrf.mxu0
  %v4368 = vpop.f32.mrf.mxu0
  %v4369 = vadd.f32 %v4080, %v4368
  %v4370 = vpop.f32.mrf.mxu0
  %4371 = vmatprep.mubr.bf16.mxu0 %v3781
  %4372 = vmatmul.mubr.bf16.gmra.mxu0 %v3780
  %v4373 = vpop.f32.mrf.mxu0
  %v4374 = vadd.f32 %v4085, %v4373
  %v4375 = vpop.f32.mrf.mxu0
  %v4376 = vpop.f32.mrf.mxu0
  %v4377 = vadd.f32 %v4088, %v4376
  %v4378 = vpop.f32.mrf.mxu0
  %4379 = vmatprep.mubr.bf16.mxu0 %v3785
  %4380 = vmatmul.mubr.bf16.gmra.mxu0 %v3784
  %v4381 = vpop.f32.mrf.mxu0
  %v4382 = vadd.f32 %v4093, %v4381
  %v4383 = vpop.f32.mrf.mxu0
  %v4384 = vpop.f32.mrf.mxu0
  %v4385 = vadd.f32 %v4096, %v4384
  %v4386 = vpop.f32.mrf.mxu0
  %4387 = vmatprep.mubr.bf16.mxu0 %v3789
  %4388 = vmatmul.mubr.bf16.gmra.mxu0 %v3788
  %v4389 = vpop.f32.mrf.mxu0
  %v4390 = vadd.f32 %v4101, %v4389
  %v4391 = vpop.f32.mrf.mxu0
  %v4392 = vpop.f32.mrf.mxu0
  %v4393 = vadd.f32 %v4104, %v4392
  %v4394 = vpop.f32.mrf.mxu0
  %4395 = vmatprep.mubr.bf16.mxu0 %v3793
  %4396 = vmatmul.mubr.bf16.gmra.mxu0 %v3792
  %v4397 = vpop.f32.mrf.mxu0
  %v4398 = vadd.f32 %v4109, %v4397
  %v4399 = vpop.f32.mrf.mxu0
  %v4400 = vpop.f32.mrf.mxu0
  %v4401 = vadd.f32 %v4112, %v4400
  %v4402 = vpop.f32.mrf.mxu0
  %4403 = vmatprep.mubr.bf16.mxu0 %v3797
  %4404 = vmatmul.mubr.bf16.gmra.mxu0 %v3796
  %v4405 = vpop.f32.mrf.mxu0
  %v4406 = vadd.f32 %v4117, %v4405
  %v4407 = vpop.f32.mrf.mxu0
  %v4408 = vpop.f32.mrf.mxu0
  %v4409 = vadd.f32 %v4120, %v4408
  %v4410 = vpop.f32.mrf.mxu0
  %4411 = vmatprep.mubr.bf16.mxu0 %v3801
  %4412 = vmatmul.mubr.bf16.gmra.mxu0 %v3800
  %v4413 = vpop.f32.mrf.mxu0
  %v4414 = vadd.f32 %v4125, %v4413
  %v4415 = vpop.f32.mrf.mxu0
  %v4416 = vpop.f32.mrf.mxu0
  %v4417 = vadd.f32 %v4128, %v4416
  %v4418 = vpop.f32.mrf.mxu0
  %4419 = vmatprep.mubr.bf16.mxu0 %v3805
  %4420 = vmatmul.mubr.bf16.gmra.mxu0 %v3804
  %v4421 = vpop.f32.mrf.mxu0
  %v4422 = vadd.f32 %v4133, %v4421
  %v4423 = vpop.f32.mrf.mxu0
  %v4424 = vpop.f32.mrf.mxu0
  %v4425 = vadd.f32 %v4136, %v4424
  %v4426 = vpop.f32.mrf.mxu0
  %4427 = vmatprep.mubr.bf16.mxu0 %v3809
  %4428 = vmatmul.mubr.bf16.gmra.mxu0 %v3808
  %v4429 = vpop.f32.mrf.mxu0
  %v4430 = vadd.f32 %v4141, %v4429
  %v4431 = vpop.f32.mrf.mxu0
  %v4432 = vpop.f32.mrf.mxu0
  %v4433 = vadd.f32 %v4144, %v4432
  %v4434 = vpop.f32.mrf.mxu0
  %4435 = vmatprep.mubr.bf16.mxu0 %v3813
  %4436 = vmatmul.mubr.bf16.gmra.mxu0 %v3812
  %v4437 = vpop.f32.mrf.mxu0
  %v4438 = vadd.f32 %v4149, %v4437
  %v4439 = vpop.f32.mrf.mxu0
  %v4440 = vpop.f32.mrf.mxu0
  %v4441 = vadd.f32 %v4152, %v4440
  %v4442 = vpop.f32.mrf.mxu0
  %4443 = vmatprep.mubr.bf16.mxu0 %v3817
  %4444 = vmatmul.mubr.bf16.gmra.mxu0 %v3816
  %v4445 = vpop.f32.mrf.mxu0
  %v4446 = vadd.f32 %v4157, %v4445
  %v4447 = vpop.f32.mrf.mxu0
  %v4448 = vpop.f32.mrf.mxu0
  %v4449 = vadd.f32 %v4160, %v4448
  %v4450 = vpop.f32.mrf.mxu0
  %4451 = vmatprep.mubr.bf16.mxu0 %v3821
  %4452 = vmatmul.mubr.bf16.gmra.mxu0 %v3820
  %v4453 = vpop.f32.mrf.mxu0
  %v4454 = vadd.f32 %v4165, %v4453
  %v4455 = vpop.f32.mrf.mxu0
  %v4456 = vpop.f32.mrf.mxu0
  %v4457 = vadd.f32 %v4168, %v4456
  %v4458 = vpop.f32.mrf.mxu0
  %4459 = vmatprep.mubr.bf16.mxu0 %v3825
  %4460 = vmatmul.mubr.bf16.gmra.mxu0 %v3824
  %v4461 = vpop.f32.mrf.mxu0
  %v4462 = vadd.f32 %v4173, %v4461
  %v4463 = vpop.f32.mrf.mxu0
  %v4464 = vpop.f32.mrf.mxu0
  %v4465 = vadd.f32 %v4176, %v4464
  %v4466 = vpop.f32.mrf.mxu0
  %4467 = vmatprep.mubr.bf16.mxu0 %v3829
  %4468 = vmatmul.mubr.bf16.gmra.mxu0 %v3828
  %v4469 = vpop.f32.mrf.mxu0
  %v4470 = vadd.f32 %v4181, %v4469
  %v4471 = vpop.f32.mrf.mxu0
  %v4472 = vpop.f32.mrf.mxu0
  %v4473 = vadd.f32 %v4184, %v4472
  %v4474 = vpop.f32.mrf.mxu0
  %4475 = vmatprep.mubr.bf16.mxu0 %v3833
  %4476 = vmatmul.mubr.bf16.gmra.mxu0 %v3832
  %v4477 = vpop.f32.mrf.mxu0
  %v4478 = vadd.f32 %v4189, %v4477
  %v4479 = vpop.f32.mrf.mxu0
  %v4480 = vpop.f32.mrf.mxu0
  %v4481 = vadd.f32 %v4192, %v4480
  %v4482 = vpop.f32.mrf.mxu0
  %4483 = vmatprep.mubr.bf16.mxu0 %v3837
  %4484 = vmatmul.mubr.bf16.gmra.mxu0 %v3836
  %v4485 = vpop.f32.mrf.mxu0
  %v4486 = vadd.f32 %v4197, %v4485
  %v4487 = vpop.f32.mrf.mxu0
  %v4488 = vpop.f32.mrf.mxu0
  %v4489 = vadd.f32 %v4200, %v4488
  %v4490 = vpop.f32.mrf.mxu0
  %4491 = vmatprep.mubr.bf16.mxu0 %v3841
  %4492 = vmatmul.mubr.bf16.gmra.mxu0 %v3840
  %v4493 = vpop.f32.mrf.mxu0
  %v4494 = vadd.f32 %v4205, %v4493
  %v4495 = vpop.f32.mrf.mxu0
  %v4496 = vpop.f32.mrf.mxu0
  %v4497 = vadd.f32 %v4208, %v4496
  %v4498 = vpop.f32.mrf.mxu0
  %4499 = vmatprep.mubr.bf16.mxu0 %v3845
  %4500 = vmatmul.mubr.bf16.gmra.mxu0 %v3844
  %v4501 = vpop.f32.mrf.mxu0
  %v4502 = vadd.f32 %v4213, %v4501
  %v4503 = vpop.f32.mrf.mxu0
  %v4504 = vpop.f32.mrf.mxu0
  %v4505 = vadd.f32 %v4216, %v4504
  %v4506 = vpop.f32.mrf.mxu0
  %4507 = vmatprep.mubr.bf16.mxu0 %v3849
  %4508 = vmatmul.mubr.bf16.gmra.mxu0 %v3848
  %v4509 = vpop.f32.mrf.mxu0
  %v4510 = vadd.f32 %v4221, %v4509
  %v4511 = vpop.f32.mrf.mxu0
  %v4512 = vpop.f32.mrf.mxu0
  %v4513 = vadd.f32 %v4224, %v4512
  %v4514 = vpop.f32.mrf.mxu0
  %4515 = vmatprep.mubr.bf16.mxu0 %v3853
  %4516 = vmatmul.mubr.bf16.gmra.mxu0 %v3852
  %v4517 = vpop.f32.mrf.mxu0
  %v4518 = vadd.f32 %v4229, %v4517
  %v4519 = vpop.f32.mrf.mxu0
  %v4520 = vpop.f32.mrf.mxu0
  %v4521 = vadd.f32 %v4232, %v4520
  %v4522 = vpop.f32.mrf.mxu0
  %4523 = vmatprep.mubr.bf16.mxu0 %v3857
  %4524 = vmatmul.mubr.bf16.gmra.mxu0 %v3856
  %v4525 = vpop.f32.mrf.mxu0
  %v4526 = vadd.f32 %v4237, %v4525
  %v4527 = vpop.f32.mrf.mxu0
  %v4528 = vpop.f32.mrf.mxu0
  %v4529 = vadd.f32 %v4240, %v4528
  %v4530 = vpop.f32.mrf.mxu0
  %4531 = vmatprep.mubr.bf16.mxu0 %v3861
  %4532 = vmatmul.mubr.bf16.gmra.mxu0 %v3860
  %v4533 = vpop.f32.mrf.mxu0
  %v4534 = vadd.f32 %v4245, %v4533
  %v4535 = vpop.f32.mrf.mxu0
  %v4536 = vpop.f32.mrf.mxu0
  %v4537 = vadd.f32 %v4248, %v4536
  %v4538 = vpop.f32.mrf.mxu0
  %4539 = vmatprep.mubr.bf16.mxu0 %v3865
  %4540 = vmatmul.mubr.bf16.gmra.mxu0 %v3864
  %v4541 = vpop.f32.mrf.mxu0
  %v4542 = vadd.f32 %v4253, %v4541
  %v4543 = vpop.f32.mrf.mxu0
  %v4544 = vpop.f32.mrf.mxu0
  %v4545 = vadd.f32 %v4256, %v4544
  %v4546 = vpop.f32.mrf.mxu0
  %4547 = vmatprep.mubr.bf16.mxu0 %v3869
  %4548 = vmatmul.mubr.bf16.gmra.mxu0 %v3868
  %v4549 = vpop.f32.mrf.mxu0
  %v4550 = vadd.f32 %v4261, %v4549
  %v4551 = vpop.f32.mrf.mxu0
  %v4552 = vpop.f32.mrf.mxu0
  %v4553 = vadd.f32 %v4264, %v4552
  %v4554 = vpop.f32.mrf.mxu0
  %4555 = vmatprep.mubr.bf16.mxu0 %v3873
  %4556 = vmatmul.mubr.bf16.gmra.mxu0 %v3872
  %v4557 = vpop.f32.mrf.mxu0
  %v4558 = vadd.f32 %v4269, %v4557
  %v4559 = vpop.f32.mrf.mxu0
  %v4560 = vpop.f32.mrf.mxu0
  %v4561 = vadd.f32 %v4272, %v4560
  %v4562 = vpop.f32.mrf.mxu0
  %4563 = vmatprep.mubr.bf16.mxu0 %v3877
  %4564 = vmatmul.mubr.bf16.gmra.mxu0 %v3876
  %v4565 = vpop.f32.mrf.mxu0
  %v4566 = vadd.f32 %v4277, %v4565
  %v4567 = vpop.f32.mrf.mxu0
  %v4568 = vpop.f32.mrf.mxu0
  %v4569 = vadd.f32 %v4280, %v4568
  %v4570 = vpop.f32.mrf.mxu0
  %4571 = vmatprep.mubr.bf16.mxu0 %v3881
  %4572 = vmatmul.mubr.bf16.gmra.mxu0 %v3880
  %v4573 = vpop.f32.mrf.mxu0
  %v4574 = vadd.f32 %v4285, %v4573
  %v4575 = vpop.f32.mrf.mxu0
  %v4576 = vpop.f32.mrf.mxu0
  %v4577 = vadd.f32 %v4288, %v4576
  %v4578 = vpop.f32.mrf.mxu0
  %4579 = vmatprep.mubr.bf16.mxu0 %v3885
  %4580 = vmatmul.mubr.bf16.gmra.mxu0 %v3884
  %v4581 = vpop.f32.mrf.mxu0
  %v4582 = vadd.f32 %v4293, %v4581
  %v4583 = vpop.f32.mrf.mxu0
  %v4584 = vpop.f32.mrf.mxu0
  %v4585 = vadd.f32 %v4296, %v4584
  %v4586 = vpop.f32.mrf.mxu0
  %4587 = vmatprep.mubr.bf16.mxu0 %v3889
  %4588 = vmatmul.mubr.bf16.gmra.mxu0 %v3888
  %v4589 = vpop.f32.mrf.mxu0
  %v4590 = vadd.f32 %v4301, %v4589
  %v4591 = vpop.f32.mrf.mxu0
  %v4592 = vpop.f32.mrf.mxu0
  %v4593 = vadd.f32 %v4304, %v4592
  %v4594 = vpop.f32.mrf.mxu0
  %4595 = vdwg.mxu0
  %v4596 = vmax.f32 %v4342, 0.0
  %v4597 = vmax.f32 %v4345, 0.0
  %v4598 = vmax.f32 %v4350, 0.0
  %v4599 = vmax.f32 %v4353, 0.0
  %v4600 = vmax.f32 %v4358, 0.0
  %v4601 = vmax.f32 %v4361, 0.0
  %v4602 = vmax.f32 %v4366, 0.0
  %v4603 = vmax.f32 %v4369, 0.0
  %v4604 = vmax.f32 %v4374, 0.0
  %v4605 = vmax.f32 %v4377, 0.0
  %v4606 = vmax.f32 %v4382, 0.0
  %v4607 = vmax.f32 %v4385, 0.0
  %v4608 = vmax.f32 %v4390, 0.0
  %v4609 = vmax.f32 %v4393, 0.0
  %v4610 = vmax.f32 %v4398, 0.0
  %v4611 = vmax.f32 %v4401, 0.0
  %v4612 = vmax.f32 %v4406, 0.0
  %v4613 = vmax.f32 %v4409, 0.0
  %v4614 = vmax.f32 %v4414, 0.0
  %v4615 = vmax.f32 %v4417, 0.0
  %v4616 = vmax.f32 %v4422, 0.0
  %v4617 = vmax.f32 %v4425, 0.0
  %v4618 = vmax.f32 %v4430, 0.0
  %v4619 = vmax.f32 %v4433, 0.0
  %v4620 = vmax.f32 %v4438, 0.0
  %v4621 = vmax.f32 %v4441, 0.0
  %v4622 = vmax.f32 %v4446, 0.0
  %v4623 = vmax.f32 %v4449, 0.0
  %v4624 = vmax.f32 %v4454, 0.0
  %v4625 = vmax.f32 %v4457, 0.0
  %v4626 = vmax.f32 %v4462, 0.0
  %v4627 = vmax.f32 %v4465, 0.0
  %v4628 = vmax.f32 %v4470, 0.0
  %v4629 = vmax.f32 %v4473, 0.0
  %v4630 = vmax.f32 %v4478, 0.0
  %v4631 = vmax.f32 %v4481, 0.0
  %v4632 = vmax.f32 %v4486, 0.0
  %v4633 = vmax.f32 %v4489, 0.0
  %v4634 = vmax.f32 %v4494, 0.0
  %v4635 = vmax.f32 %v4497, 0.0
  %v4636 = vmax.f32 %v4502, 0.0
  %v4637 = vmax.f32 %v4505, 0.0
  %v4638 = vmax.f32 %v4510, 0.0
  %v4639 = vmax.f32 %v4513, 0.0
  %v4640 = vmax.f32 %v4518, 0.0
  %v4641 = vmax.f32 %v4521, 0.0
  %v4642 = vmax.f32 %v4526, 0.0
  %v4643 = vmax.f32 %v4529, 0.0
  %v4644 = vmax.f32 %v4534, 0.0
  %v4645 = vmax.f32 %v4537, 0.0
  %v4646 = vmax.f32 %v4542, 0.0
  %v4647 = vmax.f32 %v4545, 0.0
  %v4648 = vmax.f32 %v4550, 0.0
  %v4649 = vmax.f32 %v4553, 0.0
  %v4650 = vmax.f32 %v4558, 0.0
  %v4651 = vmax.f32 %v4561, 0.0
  %v4652 = vmax.f32 %v4566, 0.0
  %v4653 = vmax.f32 %v4569, 0.0
  %v4654 = vmax.f32 %v4574, 0.0
  %v4655 = vmax.f32 %v4577, 0.0
  %v4656 = vmax.f32 %v4582, 0.0
  %v4657 = vmax.f32 %v4585, 0.0
  %v4658 = vmax.f32 %v4590, 0.0
  %v4659 = vmax.f32 %v4593, 0.0
  %v4660 = vld [vmem:[%s7] sm:$0xff]
  %v4661 = vld [vmem:[%s7 + $0x8] sm:$0xff]
  %v4662 = vld [vmem:[%s7 + $0x10] sm:$0xff]
  %v4663 = vld [vmem:[%s7 + $0x18] sm:$0xff]
  %v4664 = vld [vmem:[%s7 + $0x20] sm:$0xff]
  %v4665 = vld [vmem:[%s7 + $0x28] sm:$0xff]
  %v4666 = vld [vmem:[%s7 + $0x30] sm:$0xff]
  %v4667 = vld [vmem:[%s7 + $0x38] sm:$0xff]
  %v4668 = vld [vmem:[%s7 + $0x40] sm:$0xff]
  %v4669 = vld [vmem:[%s7 + $0x48] sm:$0xff]
  %v4670 = vld [vmem:[%s7 + $0x50] sm:$0xff]
  %v4671 = vld [vmem:[%s7 + $0x58] sm:$0xff]
  %v4672 = vld [vmem:[%s7 + $0x60] sm:$0xff]
  %v4673 = vld [vmem:[%s7 + $0x68] sm:$0xff]
  %v4674 = vld [vmem:[%s7 + $0x70] sm:$0xff]
  %v4675 = vld [vmem:[%s7 + $0x78] sm:$0xff]
  %v4676 = vld [vmem:[%s7 + $0x80] sm:$0xff]
  %v4677 = vld [vmem:[%s7 + $0x88] sm:$0xff]
  %v4678 = vld [vmem:[%s7 + $0x90] sm:$0xff]
  %v4679 = vld [vmem:[%s7 + $0x98] sm:$0xff]
  %v4680 = vld [vmem:[%s7 + $0xa0] sm:$0xff]
  %v4681 = vld [vmem:[%s7 + $0xa8] sm:$0xff]
  %v4682 = vld [vmem:[%s7 + $0xb0] sm:$0xff]
  %v4683 = vld [vmem:[%s7 + $0xb8] sm:$0xff]
  %v4684 = vld [vmem:[%s7 + $0xc0] sm:$0xff]
  %v4685 = vld [vmem:[%s7 + $0xc8] sm:$0xff]
  %v4686 = vld [vmem:[%s7 + $0xd0] sm:$0xff]
  %v4687 = vld [vmem:[%s7 + $0xd8] sm:$0xff]
  %v4688 = vld [vmem:[%s7 + $0xe0] sm:$0xff]
  %v4689 = vld [vmem:[%s7 + $0xe8] sm:$0xff]
  %v4690 = vld [vmem:[%s7 + $0xf0] sm:$0xff]
  %v4691 = vld [vmem:[%s7 + $0xf8] sm:$0xff]
  %v4692 = vld [vmem:[%s7 + $0x100] sm:$0xff]
  %v4693 = vld [vmem:[%s7 + $0x108] sm:$0xff]
  %v4694 = vld [vmem:[%s7 + $0x110] sm:$0xff]
  %v4695 = vld [vmem:[%s7 + $0x118] sm:$0xff]
  %v4696 = vld [vmem:[%s7 + $0x120] sm:$0xff]
  %v4697 = vld [vmem:[%s7 + $0x128] sm:$0xff]
  %v4698 = vld [vmem:[%s7 + $0x130] sm:$0xff]
  %v4699 = vld [vmem:[%s7 + $0x138] sm:$0xff]
  %v4700 = vld [vmem:[%s7 + $0x140] sm:$0xff]
  %v4701 = vld [vmem:[%s7 + $0x148] sm:$0xff]
  %v4702 = vld [vmem:[%s7 + $0x150] sm:$0xff]
  %v4703 = vld [vmem:[%s7 + $0x158] sm:$0xff]
  %v4704 = vld [vmem:[%s7 + $0x160] sm:$0xff]
  %v4705 = vld [vmem:[%s7 + $0x168] sm:$0xff]
  %v4706 = vld [vmem:[%s7 + $0x170] sm:$0xff]
  %v4707 = vld [vmem:[%s7 + $0x178] sm:$0xff]
  %v4708 = vld [vmem:[%s7 + $0x180] sm:$0xff]
  %v4709 = vld [vmem:[%s7 + $0x188] sm:$0xff]
  %v4710 = vld [vmem:[%s7 + $0x190] sm:$0xff]
  %v4711 = vld [vmem:[%s7 + $0x198] sm:$0xff]
  %v4712 = vld [vmem:[%s7 + $0x1a0] sm:$0xff]
  %v4713 = vld [vmem:[%s7 + $0x1a8] sm:$0xff]
  %v4714 = vld [vmem:[%s7 + $0x1b0] sm:$0xff]
  %v4715 = vld [vmem:[%s7 + $0x1b8] sm:$0xff]
  %v4716 = vld [vmem:[%s7 + $0x1c0] sm:$0xff]
  %v4717 = vld [vmem:[%s7 + $0x1c8] sm:$0xff]
  %v4718 = vld [vmem:[%s7 + $0x1d0] sm:$0xff]
  %v4719 = vld [vmem:[%s7 + $0x1d8] sm:$0xff]
  %v4720 = vld [vmem:[%s7 + $0x1e0] sm:$0xff]
  %v4721 = vld [vmem:[%s7 + $0x1e8] sm:$0xff]
  %v4722 = vld [vmem:[%s7 + $0x1f0] sm:$0xff]
  %v4723 = vld [vmem:[%s7 + $0x1f8] sm:$0xff]
  %v4724 = vld [vmem:[%s7 + $0x200] sm:$0xff]
  %v4725 = vld [vmem:[%s7 + $0x208] sm:$0xff]
  %v4726 = vld [vmem:[%s7 + $0x210] sm:$0xff]
  %v4727 = vld [vmem:[%s7 + $0x218] sm:$0xff]
  %v4728 = vld [vmem:[%s7 + $0x220] sm:$0xff]
  %v4729 = vld [vmem:[%s7 + $0x228] sm:$0xff]
  %v4730 = vld [vmem:[%s7 + $0x230] sm:$0xff]
  %v4731 = vld [vmem:[%s7 + $0x238] sm:$0xff]
  %v4732 = vld [vmem:[%s7 + $0x240] sm:$0xff]
  %v4733 = vld [vmem:[%s7 + $0x248] sm:$0xff]
  %v4734 = vld [vmem:[%s7 + $0x250] sm:$0xff]
  %v4735 = vld [vmem:[%s7 + $0x258] sm:$0xff]
  %v4736 = vld [vmem:[%s7 + $0x260] sm:$0xff]
  %v4737 = vld [vmem:[%s7 + $0x268] sm:$0xff]
  %v4738 = vld [vmem:[%s7 + $0x270] sm:$0xff]
  %v4739 = vld [vmem:[%s7 + $0x278] sm:$0xff]
  %v4740 = vld [vmem:[%s7 + $0x280] sm:$0xff]
  %v4741 = vld [vmem:[%s7 + $0x288] sm:$0xff]
  %v4742 = vld [vmem:[%s7 + $0x290] sm:$0xff]
  %v4743 = vld [vmem:[%s7 + $0x298] sm:$0xff]
  %v4744 = vld [vmem:[%s7 + $0x2a0] sm:$0xff]
  %v4745 = vld [vmem:[%s7 + $0x2a8] sm:$0xff]
  %v4746 = vld [vmem:[%s7 + $0x2b0] sm:$0xff]
  %v4747 = vld [vmem:[%s7 + $0x2b8] sm:$0xff]
  %v4748 = vld [vmem:[%s7 + $0x2c0] sm:$0xff]
  %v4749 = vld [vmem:[%s7 + $0x2c8] sm:$0xff]
  %v4750 = vld [vmem:[%s7 + $0x2d0] sm:$0xff]
  %v4751 = vld [vmem:[%s7 + $0x2d8] sm:$0xff]
  %v4752 = vld [vmem:[%s7 + $0x2e0] sm:$0xff]
  %v4753 = vld [vmem:[%s7 + $0x2e8] sm:$0xff]
  %v4754 = vld [vmem:[%s7 + $0x2f0] sm:$0xff]
  %v4755 = vld [vmem:[%s7 + $0x2f8] sm:$0xff]
  %v4756 = vld [vmem:[%s7 + $0x300] sm:$0xff]
  %v4757 = vld [vmem:[%s7 + $0x308] sm:$0xff]
  %v4758 = vld [vmem:[%s7 + $0x310] sm:$0xff]
  %v4759 = vld [vmem:[%s7 + $0x318] sm:$0xff]
  %v4760 = vld [vmem:[%s7 + $0x320] sm:$0xff]
  %v4761 = vld [vmem:[%s7 + $0x328] sm:$0xff]
  %v4762 = vld [vmem:[%s7 + $0x330] sm:$0xff]
  %v4763 = vld [vmem:[%s7 + $0x338] sm:$0xff]
  %v4764 = vld [vmem:[%s7 + $0x340] sm:$0xff]
  %v4765 = vld [vmem:[%s7 + $0x348] sm:$0xff]
  %v4766 = vld [vmem:[%s7 + $0x350] sm:$0xff]
  %v4767 = vld [vmem:[%s7 + $0x358] sm:$0xff]
  %v4768 = vld [vmem:[%s7 + $0x360] sm:$0xff]
  %v4769 = vld [vmem:[%s7 + $0x368] sm:$0xff]
  %v4770 = vld [vmem:[%s7 + $0x370] sm:$0xff]
  %v4771 = vld [vmem:[%s7 + $0x378] sm:$0xff]
  %v4772 = vld [vmem:[%s7 + $0x380] sm:$0xff]
  %v4773 = vld [vmem:[%s7 + $0x388] sm:$0xff]
  %v4774 = vld [vmem:[%s7 + $0x390] sm:$0xff]
  %v4775 = vld [vmem:[%s7 + $0x398] sm:$0xff]
  %v4776 = vld [vmem:[%s7 + $0x3a0] sm:$0xff]
  %v4777 = vld [vmem:[%s7 + $0x3a8] sm:$0xff]
  %v4778 = vld [vmem:[%s7 + $0x3b0] sm:$0xff]
  %v4779 = vld [vmem:[%s7 + $0x3b8] sm:$0xff]
  %v4780 = vld [vmem:[%s7 + $0x3c0] sm:$0xff]
  %v4781 = vld [vmem:[%s7 + $0x3c8] sm:$0xff]
  %v4782 = vld [vmem:[%s7 + $0x3d0] sm:$0xff]
  %v4783 = vld [vmem:[%s7 + $0x3d8] sm:$0xff]
  %v4784 = vld [vmem:[%s7 + $0x3e0] sm:$0xff]
  %v4785 = vld [vmem:[%s7 + $0x3e8] sm:$0xff]
  %v4786 = vld [vmem:[%s7 + $0x3f0] sm:$0xff]
  %v4787 = vld [vmem:[%s7 + $0x3f8] sm:$0xff]
  %v4788 = vpack.c.bf16 %v4597, %v4596
  %v4789 = vpack.c.bf16 %v4599, %v4598
  %v4790 = vpack.c.bf16 %v4601, %v4600
  %v4791 = vpack.c.bf16 %v4603, %v4602
  %v4792 = vpack.c.bf16 %v4605, %v4604
  %v4793 = vpack.c.bf16 %v4607, %v4606
  %v4794 = vpack.c.bf16 %v4609, %v4608
  %v4795 = vpack.c.bf16 %v4611, %v4610
  %v4796 = vpack.c.bf16 %v4613, %v4612
  %v4797 = vpack.c.bf16 %v4615, %v4614
  %v4798 = vpack.c.bf16 %v4617, %v4616
  %v4799 = vpack.c.bf16 %v4619, %v4618
  %v4800 = vpack.c.bf16 %v4621, %v4620
  %v4801 = vpack.c.bf16 %v4623, %v4622
  %v4802 = vpack.c.bf16 %v4625, %v4624
  %v4803 = vpack.c.bf16 %v4627, %v4626
  %v4804 = vpack.c.bf16 %v4629, %v4628
  %v4805 = vpack.c.bf16 %v4631, %v4630
  %v4806 = vpack.c.bf16 %v4633, %v4632
  %v4807 = vpack.c.bf16 %v4635, %v4634
  %v4808 = vpack.c.bf16 %v4637, %v4636
  %v4809 = vpack.c.bf16 %v4639, %v4638
  %v4810 = vpack.c.bf16 %v4641, %v4640
  %v4811 = vpack.c.bf16 %v4643, %v4642
  %v4812 = vpack.c.bf16 %v4645, %v4644
  %v4813 = vpack.c.bf16 %v4647, %v4646
  %v4814 = vpack.c.bf16 %v4649, %v4648
  %v4815 = vpack.c.bf16 %v4651, %v4650
  %v4816 = vpack.c.bf16 %v4653, %v4652
  %v4817 = vpack.c.bf16 %v4655, %v4654
  %v4818 = vpack.c.bf16 %v4657, %v4656
  %v4819 = vpack.c.bf16 %v4659, %v4658
  %v4820 = vld [vmem:[%s8] sm:$0xff]
  %v4821 = vld [vmem:[%s8 + $0x8] sm:$0xff]
  %v4822 = vld [vmem:[%s8 + $0x10] sm:$0xff]
  %v4823 = vld [vmem:[%s8 + $0x18] sm:$0xff]
  %v4824 = vld [vmem:[%s8 + $0x20] sm:$0xff]
  %v4825 = vld [vmem:[%s8 + $0x28] sm:$0xff]
  %v4826 = vld [vmem:[%s8 + $0x30] sm:$0xff]
  %v4827 = vld [vmem:[%s8 + $0x38] sm:$0xff]
  %v4828 = vld [vmem:[%s8 + $0x40] sm:$0xff]
  %v4829 = vld [vmem:[%s8 + $0x48] sm:$0xff]
  %v4830 = vld [vmem:[%s8 + $0x50] sm:$0xff]
  %v4831 = vld [vmem:[%s8 + $0x58] sm:$0xff]
  %v4832 = vld [vmem:[%s8 + $0x60] sm:$0xff]
  %v4833 = vld [vmem:[%s8 + $0x68] sm:$0xff]
  %v4834 = vld [vmem:[%s8 + $0x70] sm:$0xff]
  %v4835 = vld [vmem:[%s8 + $0x78] sm:$0xff]
  %v4836 = vld [vmem:[%s8 + $0x80] sm:$0xff]
  %v4837 = vld [vmem:[%s8 + $0x88] sm:$0xff]
  %v4838 = vld [vmem:[%s8 + $0x90] sm:$0xff]
  %v4839 = vld [vmem:[%s8 + $0x98] sm:$0xff]
  %v4840 = vld [vmem:[%s8 + $0xa0] sm:$0xff]
  %v4841 = vld [vmem:[%s8 + $0xa8] sm:$0xff]
  %v4842 = vld [vmem:[%s8 + $0xb0] sm:$0xff]
  %v4843 = vld [vmem:[%s8 + $0xb8] sm:$0xff]
  %v4844 = vld [vmem:[%s8 + $0xc0] sm:$0xff]
  %v4845 = vld [vmem:[%s8 + $0xc8] sm:$0xff]
  %v4846 = vld [vmem:[%s8 + $0xd0] sm:$0xff]
  %v4847 = vld [vmem:[%s8 + $0xd8] sm:$0xff]
  %v4848 = vld [vmem:[%s8 + $0xe0] sm:$0xff]
  %v4849 = vld [vmem:[%s8 + $0xe8] sm:$0xff]
  %v4850 = vld [vmem:[%s8 + $0xf0] sm:$0xff]
  %v4851 = vld [vmem:[%s8 + $0xf8] sm:$0xff]
  %v4852 = vld [vmem:[%s8 + $0x100] sm:$0xff]
  %v4853 = vld [vmem:[%s8 + $0x108] sm:$0xff]
  %v4854 = vld [vmem:[%s8 + $0x110] sm:$0xff]
  %v4855 = vld [vmem:[%s8 + $0x118] sm:$0xff]
  %v4856 = vld [vmem:[%s8 + $0x120] sm:$0xff]
  %v4857 = vld [vmem:[%s8 + $0x128] sm:$0xff]
  %v4858 = vld [vmem:[%s8 + $0x130] sm:$0xff]
  %v4859 = vld [vmem:[%s8 + $0x138] sm:$0xff]
  %v4860 = vld [vmem:[%s8 + $0x140] sm:$0xff]
  %v4861 = vld [vmem:[%s8 + $0x148] sm:$0xff]
  %v4862 = vld [vmem:[%s8 + $0x150] sm:$0xff]
  %v4863 = vld [vmem:[%s8 + $0x158] sm:$0xff]
  %v4864 = vld [vmem:[%s8 + $0x160] sm:$0xff]
  %v4865 = vld [vmem:[%s8 + $0x168] sm:$0xff]
  %v4866 = vld [vmem:[%s8 + $0x170] sm:$0xff]
  %v4867 = vld [vmem:[%s8 + $0x178] sm:$0xff]
  %v4868 = vld [vmem:[%s8 + $0x180] sm:$0xff]
  %v4869 = vld [vmem:[%s8 + $0x188] sm:$0xff]
  %v4870 = vld [vmem:[%s8 + $0x190] sm:$0xff]
  %v4871 = vld [vmem:[%s8 + $0x198] sm:$0xff]
  %v4872 = vld [vmem:[%s8 + $0x1a0] sm:$0xff]
  %v4873 = vld [vmem:[%s8 + $0x1a8] sm:$0xff]
  %v4874 = vld [vmem:[%s8 + $0x1b0] sm:$0xff]
  %v4875 = vld [vmem:[%s8 + $0x1b8] sm:$0xff]
  %v4876 = vld [vmem:[%s8 + $0x1c0] sm:$0xff]
  %v4877 = vld [vmem:[%s8 + $0x1c8] sm:$0xff]
  %v4878 = vld [vmem:[%s8 + $0x1d0] sm:$0xff]
  %v4879 = vld [vmem:[%s8 + $0x1d8] sm:$0xff]
  %v4880 = vld [vmem:[%s8 + $0x1e0] sm:$0xff]
  %v4881 = vld [vmem:[%s8 + $0x1e8] sm:$0xff]
  %v4882 = vld [vmem:[%s8 + $0x1f0] sm:$0xff]
  %v4883 = vld [vmem:[%s8 + $0x1f8] sm:$0xff]
  %4885 = vset.pattern.permute.xlu0 0
  %4886 = vperm.xlu0 %4885, %v4820
  %v4887 = vpop.permute.xlu0 %4886
  %4890 = vset.pattern.permute.xlu0 0
  %4891 = vperm.xlu0 %4890, %v4821
  %v4892 = vpop.permute.xlu0 %4891
  %4895 = vset.pattern.permute.xlu0 0
  %4896 = vperm.xlu0 %4895, %v4822
  %v4897 = vpop.permute.xlu0 %4896
  %4900 = vset.pattern.permute.xlu0 0
  %4901 = vperm.xlu0 %4900, %v4823
  %v4902 = vpop.permute.xlu0 %4901
  %4905 = vset.pattern.permute.xlu0 0
  %4906 = vperm.xlu0 %4905, %v4824
  %v4907 = vpop.permute.xlu0 %4906
  %4910 = vset.pattern.permute.xlu0 0
  %4911 = vperm.xlu0 %4910, %v4825
  %v4912 = vpop.permute.xlu0 %4911
  %4915 = vset.pattern.permute.xlu0 0
  %4916 = vperm.xlu0 %4915, %v4826
  %v4917 = vpop.permute.xlu0 %4916
  %4920 = vset.pattern.permute.xlu0 0
  %4921 = vperm.xlu0 %4920, %v4827
  %v4922 = vpop.permute.xlu0 %4921
  %4925 = vset.pattern.permute.xlu0 0
  %4926 = vperm.xlu0 %4925, %v4828
  %v4927 = vpop.permute.xlu0 %4926
  %4930 = vset.pattern.permute.xlu0 0
  %4931 = vperm.xlu0 %4930, %v4829
  %v4932 = vpop.permute.xlu0 %4931
  %4935 = vset.pattern.permute.xlu0 0
  %4936 = vperm.xlu0 %4935, %v4830
  %v4937 = vpop.permute.xlu0 %4936
  %4940 = vset.pattern.permute.xlu0 0
  %4941 = vperm.xlu0 %4940, %v4831
  %v4942 = vpop.permute.xlu0 %4941
  %4945 = vset.pattern.permute.xlu0 0
  %4946 = vperm.xlu0 %4945, %v4832
  %v4947 = vpop.permute.xlu0 %4946
  %4950 = vset.pattern.permute.xlu0 0
  %4951 = vperm.xlu0 %4950, %v4833
  %v4952 = vpop.permute.xlu0 %4951
  %4955 = vset.pattern.permute.xlu0 0
  %4956 = vperm.xlu0 %4955, %v4834
  %v4957 = vpop.permute.xlu0 %4956
  %4960 = vset.pattern.permute.xlu0 0
  %4961 = vperm.xlu0 %4960, %v4835
  %v4962 = vpop.permute.xlu0 %4961
  %4965 = vset.pattern.permute.xlu0 0
  %4966 = vperm.xlu0 %4965, %v4836
  %v4967 = vpop.permute.xlu0 %4966
  %4970 = vset.pattern.permute.xlu0 0
  %4971 = vperm.xlu0 %4970, %v4837
  %v4972 = vpop.permute.xlu0 %4971
  %4975 = vset.pattern.permute.xlu0 0
  %4976 = vperm.xlu0 %4975, %v4838
  %v4977 = vpop.permute.xlu0 %4976
  %4980 = vset.pattern.permute.xlu0 0
  %4981 = vperm.xlu0 %4980, %v4839
  %v4982 = vpop.permute.xlu0 %4981
  %4985 = vset.pattern.permute.xlu0 0
  %4986 = vperm.xlu0 %4985, %v4840
  %v4987 = vpop.permute.xlu0 %4986
  %4990 = vset.pattern.permute.xlu0 0
  %4991 = vperm.xlu0 %4990, %v4841
  %v4992 = vpop.permute.xlu0 %4991
  %4995 = vset.pattern.permute.xlu0 0
  %4996 = vperm.xlu0 %4995, %v4842
  %v4997 = vpop.permute.xlu0 %4996
  %5000 = vset.pattern.permute.xlu0 0
  %5001 = vperm.xlu0 %5000, %v4843
  %v5002 = vpop.permute.xlu0 %5001
  %5005 = vset.pattern.permute.xlu0 0
  %5006 = vperm.xlu0 %5005, %v4844
  %v5007 = vpop.permute.xlu0 %5006
  %5010 = vset.pattern.permute.xlu0 0
  %5011 = vperm.xlu0 %5010, %v4845
  %v5012 = vpop.permute.xlu0 %5011
  %5015 = vset.pattern.permute.xlu0 0
  %5016 = vperm.xlu0 %5015, %v4846
  %v5017 = vpop.permute.xlu0 %5016
  %5020 = vset.pattern.permute.xlu0 0
  %5021 = vperm.xlu0 %5020, %v4847
  %v5022 = vpop.permute.xlu0 %5021
  %5025 = vset.pattern.permute.xlu0 0
  %5026 = vperm.xlu0 %5025, %v4848
  %v5027 = vpop.permute.xlu0 %5026
  %5030 = vset.pattern.permute.xlu0 0
  %5031 = vperm.xlu0 %5030, %v4849
  %v5032 = vpop.permute.xlu0 %5031
  %5035 = vset.pattern.permute.xlu0 0
  %5036 = vperm.xlu0 %5035, %v4850
  %v5037 = vpop.permute.xlu0 %5036
  %5040 = vset.pattern.permute.xlu0 0
  %5041 = vperm.xlu0 %5040, %v4851
  %v5042 = vpop.permute.xlu0 %5041
  %5045 = vset.pattern.permute.xlu0 0
  %5046 = vperm.xlu0 %5045, %v4852
  %v5047 = vpop.permute.xlu0 %5046
  %5050 = vset.pattern.permute.xlu0 0
  %5051 = vperm.xlu0 %5050, %v4853
  %v5052 = vpop.permute.xlu0 %5051
  %5055 = vset.pattern.permute.xlu0 0
  %5056 = vperm.xlu0 %5055, %v4854
  %v5057 = vpop.permute.xlu0 %5056
  %5060 = vset.pattern.permute.xlu0 0
  %5061 = vperm.xlu0 %5060, %v4855
  %v5062 = vpop.permute.xlu0 %5061
  %5065 = vset.pattern.permute.xlu0 0
  %5066 = vperm.xlu0 %5065, %v4856
  %v5067 = vpop.permute.xlu0 %5066
  %5070 = vset.pattern.permute.xlu0 0
  %5071 = vperm.xlu0 %5070, %v4857
  %v5072 = vpop.permute.xlu0 %5071
  %5075 = vset.pattern.permute.xlu0 0
  %5076 = vperm.xlu0 %5075, %v4858
  %v5077 = vpop.permute.xlu0 %5076
  %5080 = vset.pattern.permute.xlu0 0
  %5081 = vperm.xlu0 %5080, %v4859
  %v5082 = vpop.permute.xlu0 %5081
  %5085 = vset.pattern.permute.xlu0 0
  %5086 = vperm.xlu0 %5085, %v4860
  %v5087 = vpop.permute.xlu0 %5086
  %5090 = vset.pattern.permute.xlu0 0
  %5091 = vperm.xlu0 %5090, %v4861
  %v5092 = vpop.permute.xlu0 %5091
  %5095 = vset.pattern.permute.xlu0 0
  %5096 = vperm.xlu0 %5095, %v4862
  %v5097 = vpop.permute.xlu0 %5096
  %5100 = vset.pattern.permute.xlu0 0
  %5101 = vperm.xlu0 %5100, %v4863
  %v5102 = vpop.permute.xlu0 %5101
  %5105 = vset.pattern.permute.xlu0 0
  %5106 = vperm.xlu0 %5105, %v4864
  %v5107 = vpop.permute.xlu0 %5106
  %5110 = vset.pattern.permute.xlu0 0
  %5111 = vperm.xlu0 %5110, %v4865
  %v5112 = vpop.permute.xlu0 %5111
  %5115 = vset.pattern.permute.xlu0 0
  %5116 = vperm.xlu0 %5115, %v4866
  %v5117 = vpop.permute.xlu0 %5116
  %5120 = vset.pattern.permute.xlu0 0
  %5121 = vperm.xlu0 %5120, %v4867
  %v5122 = vpop.permute.xlu0 %5121
  %5125 = vset.pattern.permute.xlu0 0
  %5126 = vperm.xlu0 %5125, %v4868
  %v5127 = vpop.permute.xlu0 %5126
  %5130 = vset.pattern.permute.xlu0 0
  %5131 = vperm.xlu0 %5130, %v4869
  %v5132 = vpop.permute.xlu0 %5131
  %5135 = vset.pattern.permute.xlu0 0
  %5136 = vperm.xlu0 %5135, %v4870
  %v5137 = vpop.permute.xlu0 %5136
  %5140 = vset.pattern.permute.xlu0 0
  %5141 = vperm.xlu0 %5140, %v4871
  %v5142 = vpop.permute.xlu0 %5141
  %5145 = vset.pattern.permute.xlu0 0
  %5146 = vperm.xlu0 %5145, %v4872
  %v5147 = vpop.permute.xlu0 %5146
  %5150 = vset.pattern.permute.xlu0 0
  %5151 = vperm.xlu0 %5150, %v4873
  %v5152 = vpop.permute.xlu0 %5151
  %5155 = vset.pattern.permute.xlu0 0
  %5156 = vperm.xlu0 %5155, %v4874
  %v5157 = vpop.permute.xlu0 %5156
  %5160 = vset.pattern.permute.xlu0 0
  %5161 = vperm.xlu0 %5160, %v4875
  %v5162 = vpop.permute.xlu0 %5161
  %5165 = vset.pattern.permute.xlu0 0
  %5166 = vperm.xlu0 %5165, %v4876
  %v5167 = vpop.permute.xlu0 %5166
  %5170 = vset.pattern.permute.xlu0 0
  %5171 = vperm.xlu0 %5170, %v4877
  %v5172 = vpop.permute.xlu0 %5171
  %5175 = vset.pattern.permute.xlu0 0
  %5176 = vperm.xlu0 %5175, %v4878
  %v5177 = vpop.permute.xlu0 %5176
  %5180 = vset.pattern.permute.xlu0 0
  %5181 = vperm.xlu0 %5180, %v4879
  %v5182 = vpop.permute.xlu0 %5181
  %5185 = vset.pattern.permute.xlu0 0
  %5186 = vperm.xlu0 %5185, %v4880
  %v5187 = vpop.permute.xlu0 %5186
  %5190 = vset.pattern.permute.xlu0 0
  %5191 = vperm.xlu0 %5190, %v4881
  %v5192 = vpop.permute.xlu0 %5191
  %5195 = vset.pattern.permute.xlu0 0
  %5196 = vperm.xlu0 %5195, %v4882
  %v5197 = vpop.permute.xlu0 %5196
  %5200 = vset.pattern.permute.xlu0 0
  %5201 = vperm.xlu0 %5200, %v4883
  %v5202 = vpop.permute.xlu0 %5201
  %v5332 = vunpack.c.l.b16 %v4660
  %v5333 = vunpack.c.h.b16 %v4660
  %v5334 = vunpack.c.l.b16 %v4661
  %v5335 = vunpack.c.h.b16 %v4661
  %v5336 = vunpack.c.l.b16 %v4662
  %v5337 = vunpack.c.h.b16 %v4662
  %v5338 = vunpack.c.l.b16 %v4663
  %v5339 = vunpack.c.h.b16 %v4663
  %v5340 = vunpack.c.l.b16 %v4664
  %v5341 = vunpack.c.h.b16 %v4664
  %v5342 = vunpack.c.l.b16 %v4665
  %v5343 = vunpack.c.h.b16 %v4665
  %v5344 = vunpack.c.l.b16 %v4666
  %v5345 = vunpack.c.h.b16 %v4666
  %v5346 = vunpack.c.l.b16 %v4667
  %v5347 = vunpack.c.h.b16 %v4667
  %v5348 = vunpack.c.l.b16 %v4668
  %v5349 = vunpack.c.h.b16 %v4668
  %v5350 = vunpack.c.l.b16 %v4669
  %v5351 = vunpack.c.h.b16 %v4669
  %v5352 = vunpack.c.l.b16 %v4670
  %v5353 = vunpack.c.h.b16 %v4670
  %v5354 = vunpack.c.l.b16 %v4671
  %v5355 = vunpack.c.h.b16 %v4671
  %v5356 = vunpack.c.l.b16 %v4672
  %v5357 = vunpack.c.h.b16 %v4672
  %v5358 = vunpack.c.l.b16 %v4673
  %v5359 = vunpack.c.h.b16 %v4673
  %v5360 = vunpack.c.l.b16 %v4674
  %v5361 = vunpack.c.h.b16 %v4674
  %v5362 = vunpack.c.l.b16 %v4675
  %v5363 = vunpack.c.h.b16 %v4675
  %v5364 = vunpack.c.l.b16 %v4676
  %v5365 = vunpack.c.h.b16 %v4676
  %v5366 = vunpack.c.l.b16 %v4677
  %v5367 = vunpack.c.h.b16 %v4677
  %v5368 = vunpack.c.l.b16 %v4678
  %v5369 = vunpack.c.h.b16 %v4678
  %v5370 = vunpack.c.l.b16 %v4679
  %v5371 = vunpack.c.h.b16 %v4679
  %v5372 = vunpack.c.l.b16 %v4680
  %v5373 = vunpack.c.h.b16 %v4680
  %v5374 = vunpack.c.l.b16 %v4681
  %v5375 = vunpack.c.h.b16 %v4681
  %v5376 = vunpack.c.l.b16 %v4682
  %v5377 = vunpack.c.h.b16 %v4682
  %v5378 = vunpack.c.l.b16 %v4683
  %v5379 = vunpack.c.h.b16 %v4683
  %v5380 = vunpack.c.l.b16 %v4684
  %v5381 = vunpack.c.h.b16 %v4684
  %v5382 = vunpack.c.l.b16 %v4685
  %v5383 = vunpack.c.h.b16 %v4685
  %v5384 = vunpack.c.l.b16 %v4686
  %v5385 = vunpack.c.h.b16 %v4686
  %v5386 = vunpack.c.l.b16 %v4687
  %v5387 = vunpack.c.h.b16 %v4687
  %v5388 = vunpack.c.l.b16 %v4688
  %v5389 = vunpack.c.h.b16 %v4688
  %v5390 = vunpack.c.l.b16 %v4689
  %v5391 = vunpack.c.h.b16 %v4689
  %v5392 = vunpack.c.l.b16 %v4690
  %v5393 = vunpack.c.h.b16 %v4690
  %v5394 = vunpack.c.l.b16 %v4691
  %v5395 = vunpack.c.h.b16 %v4691
  %v5396 = vunpack.c.l.b16 %v4692
  %v5397 = vunpack.c.h.b16 %v4692
  %v5398 = vunpack.c.l.b16 %v4693
  %v5399 = vunpack.c.h.b16 %v4693
  %v5400 = vunpack.c.l.b16 %v4694
  %v5401 = vunpack.c.h.b16 %v4694
  %v5402 = vunpack.c.l.b16 %v4695
  %v5403 = vunpack.c.h.b16 %v4695
  %v5404 = vunpack.c.l.b16 %v4696
  %v5405 = vunpack.c.h.b16 %v4696
  %v5406 = vunpack.c.l.b16 %v4697
  %v5407 = vunpack.c.h.b16 %v4697
  %v5408 = vunpack.c.l.b16 %v4698
  %v5409 = vunpack.c.h.b16 %v4698
  %v5410 = vunpack.c.l.b16 %v4699
  %v5411 = vunpack.c.h.b16 %v4699
  %v5412 = vunpack.c.l.b16 %v4700
  %v5413 = vunpack.c.h.b16 %v4700
  %v5414 = vunpack.c.l.b16 %v4701
  %v5415 = vunpack.c.h.b16 %v4701
  %v5416 = vunpack.c.l.b16 %v4702
  %v5417 = vunpack.c.h.b16 %v4702
  %v5418 = vunpack.c.l.b16 %v4703
  %v5419 = vunpack.c.h.b16 %v4703
  %v5420 = vunpack.c.l.b16 %v4704
  %v5421 = vunpack.c.h.b16 %v4704
  %v5422 = vunpack.c.l.b16 %v4705
  %v5423 = vunpack.c.h.b16 %v4705
  %v5424 = vunpack.c.l.b16 %v4706
  %v5425 = vunpack.c.h.b16 %v4706
  %v5426 = vunpack.c.l.b16 %v4707
  %v5427 = vunpack.c.h.b16 %v4707
  %v5428 = vunpack.c.l.b16 %v4708
  %v5429 = vunpack.c.h.b16 %v4708
  %v5430 = vunpack.c.l.b16 %v4709
  %v5431 = vunpack.c.h.b16 %v4709
  %v5432 = vunpack.c.l.b16 %v4710
  %v5433 = vunpack.c.h.b16 %v4710
  %v5434 = vunpack.c.l.b16 %v4711
  %v5435 = vunpack.c.h.b16 %v4711
  %v5436 = vunpack.c.l.b16 %v4712
  %v5437 = vunpack.c.h.b16 %v4712
  %v5438 = vunpack.c.l.b16 %v4713
  %v5439 = vunpack.c.h.b16 %v4713
  %v5440 = vunpack.c.l.b16 %v4714
  %v5441 = vunpack.c.h.b16 %v4714
  %v5442 = vunpack.c.l.b16 %v4715
  %v5443 = vunpack.c.h.b16 %v4715
  %v5444 = vunpack.c.l.b16 %v4716
  %v5445 = vunpack.c.h.b16 %v4716
  %v5446 = vunpack.c.l.b16 %v4717
  %v5447 = vunpack.c.h.b16 %v4717
  %v5448 = vunpack.c.l.b16 %v4718
  %v5449 = vunpack.c.h.b16 %v4718
  %v5450 = vunpack.c.l.b16 %v4719
  %v5451 = vunpack.c.h.b16 %v4719
  %v5452 = vunpack.c.l.b16 %v4720
  %v5453 = vunpack.c.h.b16 %v4720
  %v5454 = vunpack.c.l.b16 %v4721
  %v5455 = vunpack.c.h.b16 %v4721
  %v5456 = vunpack.c.l.b16 %v4722
  %v5457 = vunpack.c.h.b16 %v4722
  %v5458 = vunpack.c.l.b16 %v4723
  %v5459 = vunpack.c.h.b16 %v4723
  %v5460 = vunpack.c.l.b16 %v4724
  %v5461 = vunpack.c.h.b16 %v4724
  %v5462 = vunpack.c.l.b16 %v4725
  %v5463 = vunpack.c.h.b16 %v4725
  %v5464 = vunpack.c.l.b16 %v4726
  %v5465 = vunpack.c.h.b16 %v4726
  %v5466 = vunpack.c.l.b16 %v4727
  %v5467 = vunpack.c.h.b16 %v4727
  %v5468 = vunpack.c.l.b16 %v4728
  %v5469 = vunpack.c.h.b16 %v4728
  %v5470 = vunpack.c.l.b16 %v4729
  %v5471 = vunpack.c.h.b16 %v4729
  %v5472 = vunpack.c.l.b16 %v4730
  %v5473 = vunpack.c.h.b16 %v4730
  %v5474 = vunpack.c.l.b16 %v4731
  %v5475 = vunpack.c.h.b16 %v4731
  %v5476 = vunpack.c.l.b16 %v4732
  %v5477 = vunpack.c.h.b16 %v4732
  %v5478 = vunpack.c.l.b16 %v4733
  %v5479 = vunpack.c.h.b16 %v4733
  %v5480 = vunpack.c.l.b16 %v4734
  %v5481 = vunpack.c.h.b16 %v4734
  %v5482 = vunpack.c.l.b16 %v4735
  %v5483 = vunpack.c.h.b16 %v4735
  %v5484 = vunpack.c.l.b16 %v4736
  %v5485 = vunpack.c.h.b16 %v4736
  %v5486 = vunpack.c.l.b16 %v4737
  %v5487 = vunpack.c.h.b16 %v4737
  %v5488 = vunpack.c.l.b16 %v4738
  %v5489 = vunpack.c.h.b16 %v4738
  %v5490 = vunpack.c.l.b16 %v4739
  %v5491 = vunpack.c.h.b16 %v4739
  %v5492 = vunpack.c.l.b16 %v4740
  %v5493 = vunpack.c.h.b16 %v4740
  %v5494 = vunpack.c.l.b16 %v4741
  %v5495 = vunpack.c.h.b16 %v4741
  %v5496 = vunpack.c.l.b16 %v4742
  %v5497 = vunpack.c.h.b16 %v4742
  %v5498 = vunpack.c.l.b16 %v4743
  %v5499 = vunpack.c.h.b16 %v4743
  %v5500 = vunpack.c.l.b16 %v4744
  %v5501 = vunpack.c.h.b16 %v4744
  %v5502 = vunpack.c.l.b16 %v4745
  %v5503 = vunpack.c.h.b16 %v4745
  %v5504 = vunpack.c.l.b16 %v4746
  %v5505 = vunpack.c.h.b16 %v4746
  %v5506 = vunpack.c.l.b16 %v4747
  %v5507 = vunpack.c.h.b16 %v4747
  %v5508 = vunpack.c.l.b16 %v4748
  %v5509 = vunpack.c.h.b16 %v4748
  %v5510 = vunpack.c.l.b16 %v4749
  %v5511 = vunpack.c.h.b16 %v4749
  %v5512 = vunpack.c.l.b16 %v4750
  %v5513 = vunpack.c.h.b16 %v4750
  %v5514 = vunpack.c.l.b16 %v4751
  %v5515 = vunpack.c.h.b16 %v4751
  %v5516 = vunpack.c.l.b16 %v4752
  %v5517 = vunpack.c.h.b16 %v4752
  %v5518 = vunpack.c.l.b16 %v4753
  %v5519 = vunpack.c.h.b16 %v4753
  %v5520 = vunpack.c.l.b16 %v4754
  %v5521 = vunpack.c.h.b16 %v4754
  %v5522 = vunpack.c.l.b16 %v4755
  %v5523 = vunpack.c.h.b16 %v4755
  %v5524 = vunpack.c.l.b16 %v4756
  %v5525 = vunpack.c.h.b16 %v4756
  %v5526 = vunpack.c.l.b16 %v4757
  %v5527 = vunpack.c.h.b16 %v4757
  %v5528 = vunpack.c.l.b16 %v4758
  %v5529 = vunpack.c.h.b16 %v4758
  %v5530 = vunpack.c.l.b16 %v4759
  %v5531 = vunpack.c.h.b16 %v4759
  %v5532 = vunpack.c.l.b16 %v4760
  %v5533 = vunpack.c.h.b16 %v4760
  %v5534 = vunpack.c.l.b16 %v4761
  %v5535 = vunpack.c.h.b16 %v4761
  %v5536 = vunpack.c.l.b16 %v4762
  %v5537 = vunpack.c.h.b16 %v4762
  %v5538 = vunpack.c.l.b16 %v4763
  %v5539 = vunpack.c.h.b16 %v4763
  %v5540 = vunpack.c.l.b16 %v4764
  %v5541 = vunpack.c.h.b16 %v4764
  %v5542 = vunpack.c.l.b16 %v4765
  %v5543 = vunpack.c.h.b16 %v4765
  %v5544 = vunpack.c.l.b16 %v4766
  %v5545 = vunpack.c.h.b16 %v4766
  %v5546 = vunpack.c.l.b16 %v4767
  %v5547 = vunpack.c.h.b16 %v4767
  %v5548 = vunpack.c.l.b16 %v4768
  %v5549 = vunpack.c.h.b16 %v4768
  %v5550 = vunpack.c.l.b16 %v4769
  %v5551 = vunpack.c.h.b16 %v4769
  %v5552 = vunpack.c.l.b16 %v4770
  %v5553 = vunpack.c.h.b16 %v4770
  %v5554 = vunpack.c.l.b16 %v4771
  %v5555 = vunpack.c.h.b16 %v4771
  %v5556 = vunpack.c.l.b16 %v4772
  %v5557 = vunpack.c.h.b16 %v4772
  %v5558 = vunpack.c.l.b16 %v4773
  %v5559 = vunpack.c.h.b16 %v4773
  %v5560 = vunpack.c.l.b16 %v4774
  %v5561 = vunpack.c.h.b16 %v4774
  %v5562 = vunpack.c.l.b16 %v4775
  %v5563 = vunpack.c.h.b16 %v4775
  %v5564 = vunpack.c.l.b16 %v4776
  %v5565 = vunpack.c.h.b16 %v4776
  %v5566 = vunpack.c.l.b16 %v4777
  %v5567 = vunpack.c.h.b16 %v4777
  %v5568 = vunpack.c.l.b16 %v4778
  %v5569 = vunpack.c.h.b16 %v4778
  %v5570 = vunpack.c.l.b16 %v4779
  %v5571 = vunpack.c.h.b16 %v4779
  %v5572 = vunpack.c.l.b16 %v4780
  %v5573 = vunpack.c.h.b16 %v4780
  %v5574 = vunpack.c.l.b16 %v4781
  %v5575 = vunpack.c.h.b16 %v4781
  %v5576 = vunpack.c.l.b16 %v4782
  %v5577 = vunpack.c.h.b16 %v4782
  %v5578 = vunpack.c.l.b16 %v4783
  %v5579 = vunpack.c.h.b16 %v4783
  %v5580 = vunpack.c.l.b16 %v4784
  %v5581 = vunpack.c.h.b16 %v4784
  %v5582 = vunpack.c.l.b16 %v4785
  %v5583 = vunpack.c.h.b16 %v4785
  %v5584 = vunpack.c.l.b16 %v4786
  %v5585 = vunpack.c.h.b16 %v4786
  %v5586 = vunpack.c.l.b16 %v4787
  %v5587 = vunpack.c.h.b16 %v4787
  %v5588 = vpack.c.b16 %v5336, %v5332
  %v5589 = vpack.c.b16 %v5337, %v5333
  %v5590 = vpack.c.b16 %v5338, %v5334
  %v5591 = vpack.c.b16 %v5339, %v5335
  %v5592 = vpack.c.b16 %v5344, %v5340
  %v5593 = vpack.c.b16 %v5345, %v5341
  %v5594 = vpack.c.b16 %v5346, %v5342
  %v5595 = vpack.c.b16 %v5347, %v5343
  %v5596 = vpack.c.b16 %v5352, %v5348
  %v5597 = vpack.c.b16 %v5353, %v5349
  %v5598 = vpack.c.b16 %v5354, %v5350
  %v5599 = vpack.c.b16 %v5355, %v5351
  %v5600 = vpack.c.b16 %v5360, %v5356
  %v5601 = vpack.c.b16 %v5361, %v5357
  %v5602 = vpack.c.b16 %v5362, %v5358
  %v5603 = vpack.c.b16 %v5363, %v5359
  %v5604 = vpack.c.b16 %v5368, %v5364
  %v5605 = vpack.c.b16 %v5369, %v5365
  %v5606 = vpack.c.b16 %v5370, %v5366
  %v5607 = vpack.c.b16 %v5371, %v5367
  %v5608 = vpack.c.b16 %v5376, %v5372
  %v5609 = vpack.c.b16 %v5377, %v5373
  %v5610 = vpack.c.b16 %v5378, %v5374
  %v5611 = vpack.c.b16 %v5379, %v5375
  %v5612 = vpack.c.b16 %v5384, %v5380
  %v5613 = vpack.c.b16 %v5385, %v5381
  %v5614 = vpack.c.b16 %v5386, %v5382
  %v5615 = vpack.c.b16 %v5387, %v5383
  %v5616 = vpack.c.b16 %v5392, %v5388
  %v5617 = vpack.c.b16 %v5393, %v5389
  %v5618 = vpack.c.b16 %v5394, %v5390
  %v5619 = vpack.c.b16 %v5395, %v5391
  %v5620 = vpack.c.b16 %v5400, %v5396
  %v5621 = vpack.c.b16 %v5401, %v5397
  %v5622 = vpack.c.b16 %v5402, %v5398
  %v5623 = vpack.c.b16 %v5403, %v5399
  %v5624 = vpack.c.b16 %v5408, %v5404
  %v5625 = vpack.c.b16 %v5409, %v5405
  %v5626 = vpack.c.b16 %v5410, %v5406
  %v5627 = vpack.c.b16 %v5411, %v5407
  %v5628 = vpack.c.b16 %v5416, %v5412
  %v5629 = vpack.c.b16 %v5417, %v5413
  %v5630 = vpack.c.b16 %v5418, %v5414
  %v5631 = vpack.c.b16 %v5419, %v5415
  %v5632 = vpack.c.b16 %v5424, %v5420
  %v5633 = vpack.c.b16 %v5425, %v5421
  %v5634 = vpack.c.b16 %v5426, %v5422
  %v5635 = vpack.c.b16 %v5427, %v5423
  %v5636 = vpack.c.b16 %v5432, %v5428
  %v5637 = vpack.c.b16 %v5433, %v5429
  %v5638 = vpack.c.b16 %v5434, %v5430
  %v5639 = vpack.c.b16 %v5435, %v5431
  %v5640 = vpack.c.b16 %v5440, %v5436
  %v5641 = vpack.c.b16 %v5441, %v5437
  %v5642 = vpack.c.b16 %v5442, %v5438
  %v5643 = vpack.c.b16 %v5443, %v5439
  %v5644 = vpack.c.b16 %v5448, %v5444
  %v5645 = vpack.c.b16 %v5449, %v5445
  %v5646 = vpack.c.b16 %v5450, %v5446
  %v5647 = vpack.c.b16 %v5451, %v5447
  %v5648 = vpack.c.b16 %v5456, %v5452
  %v5649 = vpack.c.b16 %v5457, %v5453
  %v5650 = vpack.c.b16 %v5458, %v5454
  %v5651 = vpack.c.b16 %v5459, %v5455
  %v5652 = vpack.c.b16 %v5464, %v5460
  %v5653 = vpack.c.b16 %v5465, %v5461
  %v5654 = vpack.c.b16 %v5466, %v5462
  %v5655 = vpack.c.b16 %v5467, %v5463
  %v5656 = vpack.c.b16 %v5472, %v5468
  %v5657 = vpack.c.b16 %v5473, %v5469
  %v5658 = vpack.c.b16 %v5474, %v5470
  %v5659 = vpack.c.b16 %v5475, %v5471
  %v5660 = vpack.c.b16 %v5480, %v5476
  %v5661 = vpack.c.b16 %v5481, %v5477
  %v5662 = vpack.c.b16 %v5482, %v5478
  %v5663 = vpack.c.b16 %v5483, %v5479
  %v5664 = vpack.c.b16 %v5488, %v5484
  %v5665 = vpack.c.b16 %v5489, %v5485
  %v5666 = vpack.c.b16 %v5490, %v5486
  %v5667 = vpack.c.b16 %v5491, %v5487
  %v5668 = vpack.c.b16 %v5496, %v5492
  %v5669 = vpack.c.b16 %v5497, %v5493
  %v5670 = vpack.c.b16 %v5498, %v5494
  %v5671 = vpack.c.b16 %v5499, %v5495
  %v5672 = vpack.c.b16 %v5504, %v5500
  %v5673 = vpack.c.b16 %v5505, %v5501
  %v5674 = vpack.c.b16 %v5506, %v5502
  %v5675 = vpack.c.b16 %v5507, %v5503
  %v5676 = vpack.c.b16 %v5512, %v5508
  %v5677 = vpack.c.b16 %v5513, %v5509
  %v5678 = vpack.c.b16 %v5514, %v5510
  %v5679 = vpack.c.b16 %v5515, %v5511
  %v5680 = vpack.c.b16 %v5520, %v5516
  %v5681 = vpack.c.b16 %v5521, %v5517
  %v5682 = vpack.c.b16 %v5522, %v5518
  %v5683 = vpack.c.b16 %v5523, %v5519
  %v5684 = vpack.c.b16 %v5528, %v5524
  %v5685 = vpack.c.b16 %v5529, %v5525
  %v5686 = vpack.c.b16 %v5530, %v5526
  %v5687 = vpack.c.b16 %v5531, %v5527
  %v5688 = vpack.c.b16 %v5536, %v5532
  %v5689 = vpack.c.b16 %v5537, %v5533
  %v5690 = vpack.c.b16 %v5538, %v5534
  %v5691 = vpack.c.b16 %v5539, %v5535
  %v5692 = vpack.c.b16 %v5544, %v5540
  %v5693 = vpack.c.b16 %v5545, %v5541
  %v5694 = vpack.c.b16 %v5546, %v5542
  %v5695 = vpack.c.b16 %v5547, %v5543
  %v5696 = vpack.c.b16 %v5552, %v5548
  %v5697 = vpack.c.b16 %v5553, %v5549
  %v5698 = vpack.c.b16 %v5554, %v5550
  %v5699 = vpack.c.b16 %v5555, %v5551
  %v5700 = vpack.c.b16 %v5560, %v5556
  %v5701 = vpack.c.b16 %v5561, %v5557
  %v5702 = vpack.c.b16 %v5562, %v5558
  %v5703 = vpack.c.b16 %v5563, %v5559
  %v5704 = vpack.c.b16 %v5568, %v5564
  %v5705 = vpack.c.b16 %v5569, %v5565
  %v5706 = vpack.c.b16 %v5570, %v5566
  %v5707 = vpack.c.b16 %v5571, %v5567
  %v5708 = vpack.c.b16 %v5576, %v5572
  %v5709 = vpack.c.b16 %v5577, %v5573
  %v5710 = vpack.c.b16 %v5578, %v5574
  %v5711 = vpack.c.b16 %v5579, %v5575
  %v5712 = vpack.c.b16 %v5584, %v5580
  %v5713 = vpack.c.b16 %v5585, %v5581
  %v5714 = vpack.c.b16 %v5586, %v5582
  %v5715 = vpack.c.b16 %v5587, %v5583
  %5844 = vmatprep.subr.bf16.mxu0 0
  %5845 = vmatpush1.bf16.msra.mxu0 %v4795
  %5846 = vmatprep.subr.bf16.mxu0 0
  %5847 = vmatpush1.bf16.msra.mxu0 %v4794
  %5848 = vmatprep.subr.bf16.mxu0 0
  %5849 = vmatpush1.bf16.msra.mxu0 %v4793
  %5850 = vmatprep.subr.bf16.mxu0 0
  %5851 = vmatpush1.bf16.msra.mxu0 %v4792
  %5852 = vmatprep.subr.bf16.mxu0 0
  %5853 = vmatpush1.bf16.msra.mxu0 %v4791
  %5854 = vmatprep.subr.bf16.mxu0 0
  %5855 = vmatpush1.bf16.msra.mxu0 %v4790
  %5856 = vmatprep.subr.bf16.mxu0 0
  %5857 = vmatpush1.bf16.msra.mxu0 %v4789
  %5858 = vmatprep.subr.bf16.mxu0 0
  %5859 = vmatpush1.bf16.msra.mxu0 %v4788
  %5860 = vmatprep.subr.bf16.mxu0 0
  %5861 = vmatpush2.bf16.msra.mxu0 %v4803
  %5862 = vmatprep.subr.bf16.mxu0 0
  %5863 = vmatpush2.bf16.msra.mxu0 %v4802
  %5864 = vmatprep.subr.bf16.mxu0 0
  %5865 = vmatpush2.bf16.msra.mxu0 %v4801
  %5866 = vmatprep.subr.bf16.mxu0 0
  %5867 = vmatpush2.bf16.msra.mxu0 %v4800
  %5868 = vmatprep.subr.bf16.mxu0 0
  %5869 = vmatpush2.bf16.msra.mxu0 %v4799
  %5870 = vmatprep.subr.bf16.mxu0 0
  %5871 = vmatpush2.bf16.msra.mxu0 %v4798
  %5872 = vmatprep.subr.bf16.mxu0 0
  %5873 = vmatpush2.bf16.msra.mxu0 %v4797
  %5874 = vmatprep.subr.bf16.mxu0 0
  %5875 = vmatpush2.bf16.msra.mxu0 %v4796
  %5876 = vmatprep.mubr.bf16.mxu0 %v5589
  %5877 = vmatmul.mubr.bf16.gmra.mxu0 %v5588
  %v5878 = vpop.f32.mrf.mxu0
  %v5879 = vadd.f32 %v4887, %v5878
  %v5880 = vpop.f32.mrf.mxu0
  %v5881 = vpop.f32.mrf.mxu0
  %v5882 = vadd.f32 %v4892, %v5881
  %v5883 = vpop.f32.mrf.mxu0
  %5884 = vmatprep.mubr.bf16.mxu0 %v5593
  %5885 = vmatmul.mubr.bf16.gmra.mxu0 %v5592
  %v5886 = vpop.f32.mrf.mxu0
  %v5887 = vadd.f32 %v4897, %v5886
  %v5888 = vpop.f32.mrf.mxu0
  %v5889 = vpop.f32.mrf.mxu0
  %v5890 = vadd.f32 %v4902, %v5889
  %v5891 = vpop.f32.mrf.mxu0
  %5892 = vmatprep.mubr.bf16.mxu0 %v5597
  %5893 = vmatmul.mubr.bf16.gmra.mxu0 %v5596
  %v5894 = vpop.f32.mrf.mxu0
  %v5895 = vadd.f32 %v4907, %v5894
  %v5896 = vpop.f32.mrf.mxu0
  %v5897 = vpop.f32.mrf.mxu0
  %v5898 = vadd.f32 %v4912, %v5897
  %v5899 = vpop.f32.mrf.mxu0
  %5900 = vmatprep.mubr.bf16.mxu0 %v5601
  %5901 = vmatmul.mubr.bf16.gmra.mxu0 %v5600
  %v5902 = vpop.f32.mrf.mxu0
  %v5903 = vadd.f32 %v4917, %v5902
  %v5904 = vpop.f32.mrf.mxu0
  %v5905 = vpop.f32.mrf.mxu0
  %v5906 = vadd.f32 %v4922, %v5905
  %v5907 = vpop.f32.mrf.mxu0
  %5908 = vmatprep.mubr.bf16.mxu0 %v5605
  %5909 = vmatmul.mubr.bf16.gmra.mxu0 %v5604
  %v5910 = vpop.f32.mrf.mxu0
  %v5911 = vadd.f32 %v4927, %v5910
  %v5912 = vpop.f32.mrf.mxu0
  %v5913 = vpop.f32.mrf.mxu0
  %v5914 = vadd.f32 %v4932, %v5913
  %v5915 = vpop.f32.mrf.mxu0
  %5916 = vmatprep.mubr.bf16.mxu0 %v5609
  %5917 = vmatmul.mubr.bf16.gmra.mxu0 %v5608
  %v5918 = vpop.f32.mrf.mxu0
  %v5919 = vadd.f32 %v4937, %v5918
  %v5920 = vpop.f32.mrf.mxu0
  %v5921 = vpop.f32.mrf.mxu0
  %v5922 = vadd.f32 %v4942, %v5921
  %v5923 = vpop.f32.mrf.mxu0
  %5924 = vmatprep.mubr.bf16.mxu0 %v5613
  %5925 = vmatmul.mubr.bf16.gmra.mxu0 %v5612
  %v5926 = vpop.f32.mrf.mxu0
  %v5927 = vadd.f32 %v4947, %v5926
  %v5928 = vpop.f32.mrf.mxu0
  %v5929 = vpop.f32.mrf.mxu0
  %v5930 = vadd.f32 %v4952, %v5929
  %v5931 = vpop.f32.mrf.mxu0
  %5932 = vmatprep.mubr.bf16.mxu0 %v5617
  %5933 = vmatmul.mubr.bf16.gmra.mxu0 %v5616
  %v5934 = vpop.f32.mrf.mxu0
  %v5935 = vadd.f32 %v4957, %v5934
  %v5936 = vpop.f32.mrf.mxu0
  %v5937 = vpop.f32.mrf.mxu0
  %v5938 = vadd.f32 %v4962, %v5937
  %v5939 = vpop.f32.mrf.mxu0
  %5940 = vmatprep.mubr.bf16.mxu0 %v5621
  %5941 = vmatmul.mubr.bf16.gmra.mxu0 %v5620
  %v5942 = vpop.f32.mrf.mxu0
  %v5943 = vadd.f32 %v4967, %v5942
  %v5944 = vpop.f32.mrf.mxu0
  %v5945 = vpop.f32.mrf.mxu0
  %v5946 = vadd.f32 %v4972, %v5945
  %v5947 = vpop.f32.mrf.mxu0
  %5948 = vmatprep.mubr.bf16.mxu0 %v5625
  %5949 = vmatmul.mubr.bf16.gmra.mxu0 %v5624
  %v5950 = vpop.f32.mrf.mxu0
  %v5951 = vadd.f32 %v4977, %v5950
  %v5952 = vpop.f32.mrf.mxu0
  %v5953 = vpop.f32.mrf.mxu0
  %v5954 = vadd.f32 %v4982, %v5953
  %v5955 = vpop.f32.mrf.mxu0
  %5956 = vmatprep.mubr.bf16.mxu0 %v5629
  %5957 = vmatmul.mubr.bf16.gmra.mxu0 %v5628
  %v5958 = vpop.f32.mrf.mxu0
  %v5959 = vadd.f32 %v4987, %v5958
  %v5960 = vpop.f32.mrf.mxu0
  %v5961 = vpop.f32.mrf.mxu0
  %v5962 = vadd.f32 %v4992, %v5961
  %v5963 = vpop.f32.mrf.mxu0
  %5964 = vmatprep.mubr.bf16.mxu0 %v5633
  %5965 = vmatmul.mubr.bf16.gmra.mxu0 %v5632
  %v5966 = vpop.f32.mrf.mxu0
  %v5967 = vadd.f32 %v4997, %v5966
  %v5968 = vpop.f32.mrf.mxu0
  %v5969 = vpop.f32.mrf.mxu0
  %v5970 = vadd.f32 %v5002, %v5969
  %v5971 = vpop.f32.mrf.mxu0
  %5972 = vmatprep.mubr.bf16.mxu0 %v5637
  %5973 = vmatmul.mubr.bf16.gmra.mxu0 %v5636
  %v5974 = vpop.f32.mrf.mxu0
  %v5975 = vadd.f32 %v5007, %v5974
  %v5976 = vpop.f32.mrf.mxu0
  %v5977 = vpop.f32.mrf.mxu0
  %v5978 = vadd.f32 %v5012, %v5977
  %v5979 = vpop.f32.mrf.mxu0
  %5980 = vmatprep.mubr.bf16.mxu0 %v5641
  %5981 = vmatmul.mubr.bf16.gmra.mxu0 %v5640
  %v5982 = vpop.f32.mrf.mxu0
  %v5983 = vadd.f32 %v5017, %v5982
  %v5984 = vpop.f32.mrf.mxu0
  %v5985 = vpop.f32.mrf.mxu0
  %v5986 = vadd.f32 %v5022, %v5985
  %v5987 = vpop.f32.mrf.mxu0
  %5988 = vmatprep.mubr.bf16.mxu0 %v5645
  %5989 = vmatmul.mubr.bf16.gmra.mxu0 %v5644
  %v5990 = vpop.f32.mrf.mxu0
  %v5991 = vadd.f32 %v5027, %v5990
  %v5992 = vpop.f32.mrf.mxu0
  %v5993 = vpop.f32.mrf.mxu0
  %v5994 = vadd.f32 %v5032, %v5993
  %v5995 = vpop.f32.mrf.mxu0
  %5996 = vmatprep.mubr.bf16.mxu0 %v5649
  %5997 = vmatmul.mubr.bf16.gmra.mxu0 %v5648
  %v5998 = vpop.f32.mrf.mxu0
  %v5999 = vadd.f32 %v5037, %v5998
  %v6000 = vpop.f32.mrf.mxu0
  %v6001 = vpop.f32.mrf.mxu0
  %v6002 = vadd.f32 %v5042, %v6001
  %v6003 = vpop.f32.mrf.mxu0
  %6004 = vmatprep.mubr.bf16.mxu0 %v5653
  %6005 = vmatmul.mubr.bf16.gmra.mxu0 %v5652
  %v6006 = vpop.f32.mrf.mxu0
  %v6007 = vadd.f32 %v5047, %v6006
  %v6008 = vpop.f32.mrf.mxu0
  %v6009 = vpop.f32.mrf.mxu0
  %v6010 = vadd.f32 %v5052, %v6009
  %v6011 = vpop.f32.mrf.mxu0
  %6012 = vmatprep.mubr.bf16.mxu0 %v5657
  %6013 = vmatmul.mubr.bf16.gmra.mxu0 %v5656
  %v6014 = vpop.f32.mrf.mxu0
  %v6015 = vadd.f32 %v5057, %v6014
  %v6016 = vpop.f32.mrf.mxu0
  %v6017 = vpop.f32.mrf.mxu0
  %v6018 = vadd.f32 %v5062, %v6017
  %v6019 = vpop.f32.mrf.mxu0
  %6020 = vmatprep.mubr.bf16.mxu0 %v5661
  %6021 = vmatmul.mubr.bf16.gmra.mxu0 %v5660
  %v6022 = vpop.f32.mrf.mxu0
  %v6023 = vadd.f32 %v5067, %v6022
  %v6024 = vpop.f32.mrf.mxu0
  %v6025 = vpop.f32.mrf.mxu0
  %v6026 = vadd.f32 %v5072, %v6025
  %v6027 = vpop.f32.mrf.mxu0
  %6028 = vmatprep.mubr.bf16.mxu0 %v5665
  %6029 = vmatmul.mubr.bf16.gmra.mxu0 %v5664
  %v6030 = vpop.f32.mrf.mxu0
  %v6031 = vadd.f32 %v5077, %v6030
  %v6032 = vpop.f32.mrf.mxu0
  %v6033 = vpop.f32.mrf.mxu0
  %v6034 = vadd.f32 %v5082, %v6033
  %v6035 = vpop.f32.mrf.mxu0
  %6036 = vmatprep.mubr.bf16.mxu0 %v5669
  %6037 = vmatmul.mubr.bf16.gmra.mxu0 %v5668
  %v6038 = vpop.f32.mrf.mxu0
  %v6039 = vadd.f32 %v5087, %v6038
  %v6040 = vpop.f32.mrf.mxu0
  %v6041 = vpop.f32.mrf.mxu0
  %v6042 = vadd.f32 %v5092, %v6041
  %v6043 = vpop.f32.mrf.mxu0
  %6044 = vmatprep.mubr.bf16.mxu0 %v5673
  %6045 = vmatmul.mubr.bf16.gmra.mxu0 %v5672
  %v6046 = vpop.f32.mrf.mxu0
  %v6047 = vadd.f32 %v5097, %v6046
  %v6048 = vpop.f32.mrf.mxu0
  %v6049 = vpop.f32.mrf.mxu0
  %v6050 = vadd.f32 %v5102, %v6049
  %v6051 = vpop.f32.mrf.mxu0
  %6052 = vmatprep.mubr.bf16.mxu0 %v5677
  %6053 = vmatmul.mubr.bf16.gmra.mxu0 %v5676
  %v6054 = vpop.f32.mrf.mxu0
  %v6055 = vadd.f32 %v5107, %v6054
  %v6056 = vpop.f32.mrf.mxu0
  %v6057 = vpop.f32.mrf.mxu0
  %v6058 = vadd.f32 %v5112, %v6057
  %v6059 = vpop.f32.mrf.mxu0
  %6060 = vmatprep.mubr.bf16.mxu0 %v5681
  %6061 = vmatmul.mubr.bf16.gmra.mxu0 %v5680
  %v6062 = vpop.f32.mrf.mxu0
  %v6063 = vadd.f32 %v5117, %v6062
  %v6064 = vpop.f32.mrf.mxu0
  %v6065 = vpop.f32.mrf.mxu0
  %v6066 = vadd.f32 %v5122, %v6065
  %v6067 = vpop.f32.mrf.mxu0
  %6068 = vmatprep.mubr.bf16.mxu0 %v5685
  %6069 = vmatmul.mubr.bf16.gmra.mxu0 %v5684
  %v6070 = vpop.f32.mrf.mxu0
  %v6071 = vadd.f32 %v5127, %v6070
  %v6072 = vpop.f32.mrf.mxu0
  %v6073 = vpop.f32.mrf.mxu0
  %v6074 = vadd.f32 %v5132, %v6073
  %v6075 = vpop.f32.mrf.mxu0
  %6076 = vmatprep.mubr.bf16.mxu0 %v5689
  %6077 = vmatmul.mubr.bf16.gmra.mxu0 %v5688
  %v6078 = vpop.f32.mrf.mxu0
  %v6079 = vadd.f32 %v5137, %v6078
  %v6080 = vpop.f32.mrf.mxu0
  %v6081 = vpop.f32.mrf.mxu0
  %v6082 = vadd.f32 %v5142, %v6081
  %v6083 = vpop.f32.mrf.mxu0
  %6084 = vmatprep.mubr.bf16.mxu0 %v5693
  %6085 = vmatmul.mubr.bf16.gmra.mxu0 %v5692
  %v6086 = vpop.f32.mrf.mxu0
  %v6087 = vadd.f32 %v5147, %v6086
  %v6088 = vpop.f32.mrf.mxu0
  %v6089 = vpop.f32.mrf.mxu0
  %v6090 = vadd.f32 %v5152, %v6089
  %v6091 = vpop.f32.mrf.mxu0
  %6092 = vmatprep.mubr.bf16.mxu0 %v5697
  %6093 = vmatmul.mubr.bf16.gmra.mxu0 %v5696
  %v6094 = vpop.f32.mrf.mxu0
  %v6095 = vadd.f32 %v5157, %v6094
  %v6096 = vpop.f32.mrf.mxu0
  %v6097 = vpop.f32.mrf.mxu0
  %v6098 = vadd.f32 %v5162, %v6097
  %v6099 = vpop.f32.mrf.mxu0
  %6100 = vmatprep.mubr.bf16.mxu0 %v5701
  %6101 = vmatmul.mubr.bf16.gmra.mxu0 %v5700
  %v6102 = vpop.f32.mrf.mxu0
  %v6103 = vadd.f32 %v5167, %v6102
  %v6104 = vpop.f32.mrf.mxu0
  %v6105 = vpop.f32.mrf.mxu0
  %v6106 = vadd.f32 %v5172, %v6105
  %v6107 = vpop.f32.mrf.mxu0
  %6108 = vmatprep.mubr.bf16.mxu0 %v5705
  %6109 = vmatmul.mubr.bf16.gmra.mxu0 %v5704
  %v6110 = vpop.f32.mrf.mxu0
  %v6111 = vadd.f32 %v5177, %v6110
  %v6112 = vpop.f32.mrf.mxu0
  %v6113 = vpop.f32.mrf.mxu0
  %v6114 = vadd.f32 %v5182, %v6113
  %v6115 = vpop.f32.mrf.mxu0
  %6116 = vmatprep.mubr.bf16.mxu0 %v5709
  %6117 = vmatmul.mubr.bf16.gmra.mxu0 %v5708
  %v6118 = vpop.f32.mrf.mxu0
  %v6119 = vadd.f32 %v5187, %v6118
  %v6120 = vpop.f32.mrf.mxu0
  %v6121 = vpop.f32.mrf.mxu0
  %v6122 = vadd.f32 %v5192, %v6121
  %v6123 = vpop.f32.mrf.mxu0
  %6124 = vmatprep.mubr.bf16.mxu0 %v5713
  %6125 = vmatmul.mubr.bf16.gmra.mxu0 %v5712
  %v6126 = vpop.f32.mrf.mxu0
  %v6127 = vadd.f32 %v5197, %v6126
  %v6128 = vpop.f32.mrf.mxu0
  %v6129 = vpop.f32.mrf.mxu0
  %v6130 = vadd.f32 %v5202, %v6129
  %v6131 = vpop.f32.mrf.mxu0
  %6132 = vdwg.mxu0
  %6133 = vmatprep.subr.bf16.mxu0 0
  %6134 = vmatpush1.bf16.msra.mxu0 %v4811
  %6135 = vmatprep.subr.bf16.mxu0 0
  %6136 = vmatpush1.bf16.msra.mxu0 %v4810
  %6137 = vmatprep.subr.bf16.mxu0 0
  %6138 = vmatpush1.bf16.msra.mxu0 %v4809
  %6139 = vmatprep.subr.bf16.mxu0 0
  %6140 = vmatpush1.bf16.msra.mxu0 %v4808
  %6141 = vmatprep.subr.bf16.mxu0 0
  %6142 = vmatpush1.bf16.msra.mxu0 %v4807
  %6143 = vmatprep.subr.bf16.mxu0 0
  %6144 = vmatpush1.bf16.msra.mxu0 %v4806
  %6145 = vmatprep.subr.bf16.mxu0 0
  %6146 = vmatpush1.bf16.msra.mxu0 %v4805
  %6147 = vmatprep.subr.bf16.mxu0 0
  %6148 = vmatpush1.bf16.msra.mxu0 %v4804
  %6149 = vmatprep.subr.bf16.mxu0 0
  %6150 = vmatpush2.bf16.msra.mxu0 %v4819
  %6151 = vmatprep.subr.bf16.mxu0 0
  %6152 = vmatpush2.bf16.msra.mxu0 %v4818
  %6153 = vmatprep.subr.bf16.mxu0 0
  %6154 = vmatpush2.bf16.msra.mxu0 %v4817
  %6155 = vmatprep.subr.bf16.mxu0 0
  %6156 = vmatpush2.bf16.msra.mxu0 %v4816
  %6157 = vmatprep.subr.bf16.mxu0 0
  %6158 = vmatpush2.bf16.msra.mxu0 %v4815
  %6159 = vmatprep.subr.bf16.mxu0 0
  %6160 = vmatpush2.bf16.msra.mxu0 %v4814
  %6161 = vmatprep.subr.bf16.mxu0 0
  %6162 = vmatpush2.bf16.msra.mxu0 %v4813
  %6163 = vmatprep.subr.bf16.mxu0 0
  %6164 = vmatpush2.bf16.msra.mxu0 %v4812
  %6165 = vmatprep.mubr.bf16.mxu0 %v5591
  %6166 = vmatmul.mubr.bf16.gmra.mxu0 %v5590
  %v6167 = vpop.f32.mrf.mxu0
  %v6168 = vadd.f32 %v5879, %v6167
  %v6169 = vpop.f32.mrf.mxu0
  %v6170 = vpop.f32.mrf.mxu0
  %v6171 = vadd.f32 %v5882, %v6170
  %v6172 = vpop.f32.mrf.mxu0
  %6173 = vmatprep.mubr.bf16.mxu0 %v5595
  %6174 = vmatmul.mubr.bf16.gmra.mxu0 %v5594
  %v6175 = vpop.f32.mrf.mxu0
  %v6176 = vadd.f32 %v5887, %v6175
  %v6177 = vpop.f32.mrf.mxu0
  %v6178 = vpop.f32.mrf.mxu0
  %v6179 = vadd.f32 %v5890, %v6178
  %v6180 = vpop.f32.mrf.mxu0
  %6181 = vmatprep.mubr.bf16.mxu0 %v5599
  %6182 = vmatmul.mubr.bf16.gmra.mxu0 %v5598
  %v6183 = vpop.f32.mrf.mxu0
  %v6184 = vadd.f32 %v5895, %v6183
  %v6185 = vpop.f32.mrf.mxu0
  %v6186 = vpop.f32.mrf.mxu0
  %v6187 = vadd.f32 %v5898, %v6186
  %v6188 = vpop.f32.mrf.mxu0
  %6189 = vmatprep.mubr.bf16.mxu0 %v5603
  %6190 = vmatmul.mubr.bf16.gmra.mxu0 %v5602
  %v6191 = vpop.f32.mrf.mxu0
  %v6192 = vadd.f32 %v5903, %v6191
  %v6193 = vpop.f32.mrf.mxu0
  %v6194 = vpop.f32.mrf.mxu0
  %v6195 = vadd.f32 %v5906, %v6194
  %v6196 = vpop.f32.mrf.mxu0
  %6197 = vmatprep.mubr.bf16.mxu0 %v5607
  %6198 = vmatmul.mubr.bf16.gmra.mxu0 %v5606
  %v6199 = vpop.f32.mrf.mxu0
  %v6200 = vadd.f32 %v5911, %v6199
  %v6201 = vpop.f32.mrf.mxu0
  %v6202 = vpop.f32.mrf.mxu0
  %v6203 = vadd.f32 %v5914, %v6202
  %v6204 = vpop.f32.mrf.mxu0
  %6205 = vmatprep.mubr.bf16.mxu0 %v5611
  %6206 = vmatmul.mubr.bf16.gmra.mxu0 %v5610
  %v6207 = vpop.f32.mrf.mxu0
  %v6208 = vadd.f32 %v5919, %v6207
  %v6209 = vpop.f32.mrf.mxu0
  %v6210 = vpop.f32.mrf.mxu0
  %v6211 = vadd.f32 %v5922, %v6210
  %v6212 = vpop.f32.mrf.mxu0
  %6213 = vmatprep.mubr.bf16.mxu0 %v5615
  %6214 = vmatmul.mubr.bf16.gmra.mxu0 %v5614
  %v6215 = vpop.f32.mrf.mxu0
  %v6216 = vadd.f32 %v5927, %v6215
  %v6217 = vpop.f32.mrf.mxu0
  %v6218 = vpop.f32.mrf.mxu0
  %v6219 = vadd.f32 %v5930, %v6218
  %v6220 = vpop.f32.mrf.mxu0
  %6221 = vmatprep.mubr.bf16.mxu0 %v5619
  %6222 = vmatmul.mubr.bf16.gmra.mxu0 %v5618
  %v6223 = vpop.f32.mrf.mxu0
  %v6224 = vadd.f32 %v5935, %v6223
  %v6225 = vpop.f32.mrf.mxu0
  %v6226 = vpop.f32.mrf.mxu0
  %v6227 = vadd.f32 %v5938, %v6226
  %v6228 = vpop.f32.mrf.mxu0
  %6229 = vmatprep.mubr.bf16.mxu0 %v5623
  %6230 = vmatmul.mubr.bf16.gmra.mxu0 %v5622
  %v6231 = vpop.f32.mrf.mxu0
  %v6232 = vadd.f32 %v5943, %v6231
  %v6233 = vpop.f32.mrf.mxu0
  %v6234 = vpop.f32.mrf.mxu0
  %v6235 = vadd.f32 %v5946, %v6234
  %v6236 = vpop.f32.mrf.mxu0
  %6237 = vmatprep.mubr.bf16.mxu0 %v5627
  %6238 = vmatmul.mubr.bf16.gmra.mxu0 %v5626
  %v6239 = vpop.f32.mrf.mxu0
  %v6240 = vadd.f32 %v5951, %v6239
  %v6241 = vpop.f32.mrf.mxu0
  %v6242 = vpop.f32.mrf.mxu0
  %v6243 = vadd.f32 %v5954, %v6242
  %v6244 = vpop.f32.mrf.mxu0
  %6245 = vmatprep.mubr.bf16.mxu0 %v5631
  %6246 = vmatmul.mubr.bf16.gmra.mxu0 %v5630
  %v6247 = vpop.f32.mrf.mxu0
  %v6248 = vadd.f32 %v5959, %v6247
  %v6249 = vpop.f32.mrf.mxu0
  %v6250 = vpop.f32.mrf.mxu0
  %v6251 = vadd.f32 %v5962, %v6250
  %v6252 = vpop.f32.mrf.mxu0
  %6253 = vmatprep.mubr.bf16.mxu0 %v5635
  %6254 = vmatmul.mubr.bf16.gmra.mxu0 %v5634
  %v6255 = vpop.f32.mrf.mxu0
  %v6256 = vadd.f32 %v5967, %v6255
  %v6257 = vpop.f32.mrf.mxu0
  %v6258 = vpop.f32.mrf.mxu0
  %v6259 = vadd.f32 %v5970, %v6258
  %v6260 = vpop.f32.mrf.mxu0
  %6261 = vmatprep.mubr.bf16.mxu0 %v5639
  %6262 = vmatmul.mubr.bf16.gmra.mxu0 %v5638
  %v6263 = vpop.f32.mrf.mxu0
  %v6264 = vadd.f32 %v5975, %v6263
  %v6265 = vpop.f32.mrf.mxu0
  %v6266 = vpop.f32.mrf.mxu0
  %v6267 = vadd.f32 %v5978, %v6266
  %v6268 = vpop.f32.mrf.mxu0
  %6269 = vmatprep.mubr.bf16.mxu0 %v5643
  %6270 = vmatmul.mubr.bf16.gmra.mxu0 %v5642
  %v6271 = vpop.f32.mrf.mxu0
  %v6272 = vadd.f32 %v5983, %v6271
  %v6273 = vpop.f32.mrf.mxu0
  %v6274 = vpop.f32.mrf.mxu0
  %v6275 = vadd.f32 %v5986, %v6274
  %v6276 = vpop.f32.mrf.mxu0
  %6277 = vmatprep.mubr.bf16.mxu0 %v5647
  %6278 = vmatmul.mubr.bf16.gmra.mxu0 %v5646
  %v6279 = vpop.f32.mrf.mxu0
  %v6280 = vadd.f32 %v5991, %v6279
  %v6281 = vpop.f32.mrf.mxu0
  %v6282 = vpop.f32.mrf.mxu0
  %v6283 = vadd.f32 %v5994, %v6282
  %v6284 = vpop.f32.mrf.mxu0
  %6285 = vmatprep.mubr.bf16.mxu0 %v5651
  %6286 = vmatmul.mubr.bf16.gmra.mxu0 %v5650
  %v6287 = vpop.f32.mrf.mxu0
  %v6288 = vadd.f32 %v5999, %v6287
  %v6289 = vpop.f32.mrf.mxu0
  %v6290 = vpop.f32.mrf.mxu0
  %v6291 = vadd.f32 %v6002, %v6290
  %v6292 = vpop.f32.mrf.mxu0
  %6293 = vmatprep.mubr.bf16.mxu0 %v5655
  %6294 = vmatmul.mubr.bf16.gmra.mxu0 %v5654
  %v6295 = vpop.f32.mrf.mxu0
  %v6296 = vadd.f32 %v6007, %v6295
  %v6297 = vpop.f32.mrf.mxu0
  %v6298 = vpop.f32.mrf.mxu0
  %v6299 = vadd.f32 %v6010, %v6298
  %v6300 = vpop.f32.mrf.mxu0
  %6301 = vmatprep.mubr.bf16.mxu0 %v5659
  %6302 = vmatmul.mubr.bf16.gmra.mxu0 %v5658
  %v6303 = vpop.f32.mrf.mxu0
  %v6304 = vadd.f32 %v6015, %v6303
  %v6305 = vpop.f32.mrf.mxu0
  %v6306 = vpop.f32.mrf.mxu0
  %v6307 = vadd.f32 %v6018, %v6306
  %v6308 = vpop.f32.mrf.mxu0
  %6309 = vmatprep.mubr.bf16.mxu0 %v5663
  %6310 = vmatmul.mubr.bf16.gmra.mxu0 %v5662
  %v6311 = vpop.f32.mrf.mxu0
  %v6312 = vadd.f32 %v6023, %v6311
  %v6313 = vpop.f32.mrf.mxu0
  %v6314 = vpop.f32.mrf.mxu0
  %v6315 = vadd.f32 %v6026, %v6314
  %v6316 = vpop.f32.mrf.mxu0
  %6317 = vmatprep.mubr.bf16.mxu0 %v5667
  %6318 = vmatmul.mubr.bf16.gmra.mxu0 %v5666
  %v6319 = vpop.f32.mrf.mxu0
  %v6320 = vadd.f32 %v6031, %v6319
  %v6321 = vpop.f32.mrf.mxu0
  %v6322 = vpop.f32.mrf.mxu0
  %v6323 = vadd.f32 %v6034, %v6322
  %v6324 = vpop.f32.mrf.mxu0
  %6325 = vmatprep.mubr.bf16.mxu0 %v5671
  %6326 = vmatmul.mubr.bf16.gmra.mxu0 %v5670
  %v6327 = vpop.f32.mrf.mxu0
  %v6328 = vadd.f32 %v6039, %v6327
  %v6329 = vpop.f32.mrf.mxu0
  %v6330 = vpop.f32.mrf.mxu0
  %v6331 = vadd.f32 %v6042, %v6330
  %v6332 = vpop.f32.mrf.mxu0
  %6333 = vmatprep.mubr.bf16.mxu0 %v5675
  %6334 = vmatmul.mubr.bf16.gmra.mxu0 %v5674
  %v6335 = vpop.f32.mrf.mxu0
  %v6336 = vadd.f32 %v6047, %v6335
  %v6337 = vpop.f32.mrf.mxu0
  %v6338 = vpop.f32.mrf.mxu0
  %v6339 = vadd.f32 %v6050, %v6338
  %v6340 = vpop.f32.mrf.mxu0
  %6341 = vmatprep.mubr.bf16.mxu0 %v5679
  %6342 = vmatmul.mubr.bf16.gmra.mxu0 %v5678
  %v6343 = vpop.f32.mrf.mxu0
  %v6344 = vadd.f32 %v6055, %v6343
  %v6345 = vpop.f32.mrf.mxu0
  %v6346 = vpop.f32.mrf.mxu0
  %v6347 = vadd.f32 %v6058, %v6346
  %v6348 = vpop.f32.mrf.mxu0
  %6349 = vmatprep.mubr.bf16.mxu0 %v5683
  %6350 = vmatmul.mubr.bf16.gmra.mxu0 %v5682
  %v6351 = vpop.f32.mrf.mxu0
  %v6352 = vadd.f32 %v6063, %v6351
  %v6353 = vpop.f32.mrf.mxu0
  %v6354 = vpop.f32.mrf.mxu0
  %v6355 = vadd.f32 %v6066, %v6354
  %v6356 = vpop.f32.mrf.mxu0
  %6357 = vmatprep.mubr.bf16.mxu0 %v5687
  %6358 = vmatmul.mubr.bf16.gmra.mxu0 %v5686
  %v6359 = vpop.f32.mrf.mxu0
  %v6360 = vadd.f32 %v6071, %v6359
  %v6361 = vpop.f32.mrf.mxu0
  %v6362 = vpop.f32.mrf.mxu0
  %v6363 = vadd.f32 %v6074, %v6362
  %v6364 = vpop.f32.mrf.mxu0
  %6365 = vmatprep.mubr.bf16.mxu0 %v5691
  %6366 = vmatmul.mubr.bf16.gmra.mxu0 %v5690
  %v6367 = vpop.f32.mrf.mxu0
  %v6368 = vadd.f32 %v6079, %v6367
  %v6369 = vpop.f32.mrf.mxu0
  %v6370 = vpop.f32.mrf.mxu0
  %v6371 = vadd.f32 %v6082, %v6370
  %v6372 = vpop.f32.mrf.mxu0
  %6373 = vmatprep.mubr.bf16.mxu0 %v5695
  %6374 = vmatmul.mubr.bf16.gmra.mxu0 %v5694
  %v6375 = vpop.f32.mrf.mxu0
  %v6376 = vadd.f32 %v6087, %v6375
  %v6377 = vpop.f32.mrf.mxu0
  %v6378 = vpop.f32.mrf.mxu0
  %v6379 = vadd.f32 %v6090, %v6378
  %v6380 = vpop.f32.mrf.mxu0
  %6381 = vmatprep.mubr.bf16.mxu0 %v5699
  %6382 = vmatmul.mubr.bf16.gmra.mxu0 %v5698
  %v6383 = vpop.f32.mrf.mxu0
  %v6384 = vadd.f32 %v6095, %v6383
  %v6385 = vpop.f32.mrf.mxu0
  %v6386 = vpop.f32.mrf.mxu0
  %v6387 = vadd.f32 %v6098, %v6386
  %v6388 = vpop.f32.mrf.mxu0
  %6389 = vmatprep.mubr.bf16.mxu0 %v5703
  %6390 = vmatmul.mubr.bf16.gmra.mxu0 %v5702
  %v6391 = vpop.f32.mrf.mxu0
  %v6392 = vadd.f32 %v6103, %v6391
  %v6393 = vpop.f32.mrf.mxu0
  %v6394 = vpop.f32.mrf.mxu0
  %v6395 = vadd.f32 %v6106, %v6394
  %v6396 = vpop.f32.mrf.mxu0
  %6397 = vmatprep.mubr.bf16.mxu0 %v5707
  %6398 = vmatmul.mubr.bf16.gmra.mxu0 %v5706
  %v6399 = vpop.f32.mrf.mxu0
  %v6400 = vadd.f32 %v6111, %v6399
  %v6401 = vpop.f32.mrf.mxu0
  %v6402 = vpop.f32.mrf.mxu0
  %v6403 = vadd.f32 %v6114, %v6402
  %v6404 = vpop.f32.mrf.mxu0
  %6405 = vmatprep.mubr.bf16.mxu0 %v5711
  %6406 = vmatmul.mubr.bf16.gmra.mxu0 %v5710
  %v6407 = vpop.f32.mrf.mxu0
  %v6408 = vadd.f32 %v6119, %v6407
  %v6409 = vpop.f32.mrf.mxu0
  %v6410 = vpop.f32.mrf.mxu0
  %v6411 = vadd.f32 %v6122, %v6410
  %v6412 = vpop.f32.mrf.mxu0
  %6413 = vmatprep.mubr.bf16.mxu0 %v5715
  %6414 = vmatmul.mubr.bf16.gmra.mxu0 %v5714
  %v6415 = vpop.f32.mrf.mxu0
  %v6416 = vadd.f32 %v6127, %v6415
  %v6417 = vpop.f32.mrf.mxu0
  %v6418 = vpop.f32.mrf.mxu0
  %v6419 = vadd.f32 %v6130, %v6418
  %v6420 = vpop.f32.mrf.mxu0
  %6421 = vdwg.mxu0
  %v6422 = vmax.f32 %v6168, 0.0
  %v6423 = vmax.f32 %v6171, 0.0
  %v6424 = vmax.f32 %v6176, 0.0
  %v6425 = vmax.f32 %v6179, 0.0
  %v6426 = vmax.f32 %v6184, 0.0
  %v6427 = vmax.f32 %v6187, 0.0
  %v6428 = vmax.f32 %v6192, 0.0
  %v6429 = vmax.f32 %v6195, 0.0
  %v6430 = vmax.f32 %v6200, 0.0
  %v6431 = vmax.f32 %v6203, 0.0
  %v6432 = vmax.f32 %v6208, 0.0
  %v6433 = vmax.f32 %v6211, 0.0
  %v6434 = vmax.f32 %v6216, 0.0
  %v6435 = vmax.f32 %v6219, 0.0
  %v6436 = vmax.f32 %v6224, 0.0
  %v6437 = vmax.f32 %v6227, 0.0
  %v6438 = vmax.f32 %v6232, 0.0
  %v6439 = vmax.f32 %v6235, 0.0
  %v6440 = vmax.f32 %v6240, 0.0
  %v6441 = vmax.f32 %v6243, 0.0
  %v6442 = vmax.f32 %v6248, 0.0
  %v6443 = vmax.f32 %v6251, 0.0
  %v6444 = vmax.f32 %v6256, 0.0
  %v6445 = vmax.f32 %v6259, 0.0
  %v6446 = vmax.f32 %v6264, 0.0
  %v6447 = vmax.f32 %v6267, 0.0
  %v6448 = vmax.f32 %v6272, 0.0
  %v6449 = vmax.f32 %v6275, 0.0
  %v6450 = vmax.f32 %v6280, 0.0
  %v6451 = vmax.f32 %v6283, 0.0
  %v6452 = vmax.f32 %v6288, 0.0
  %v6453 = vmax.f32 %v6291, 0.0
  %v6454 = vmax.f32 %v6296, 0.0
  %v6455 = vmax.f32 %v6299, 0.0
  %v6456 = vmax.f32 %v6304, 0.0
  %v6457 = vmax.f32 %v6307, 0.0
  %v6458 = vmax.f32 %v6312, 0.0
  %v6459 = vmax.f32 %v6315, 0.0
  %v6460 = vmax.f32 %v6320, 0.0
  %v6461 = vmax.f32 %v6323, 0.0
  %v6462 = vmax.f32 %v6328, 0.0
  %v6463 = vmax.f32 %v6331, 0.0
  %v6464 = vmax.f32 %v6336, 0.0
  %v6465 = vmax.f32 %v6339, 0.0
  %v6466 = vmax.f32 %v6344, 0.0
  %v6467 = vmax.f32 %v6347, 0.0
  %v6468 = vmax.f32 %v6352, 0.0
  %v6469 = vmax.f32 %v6355, 0.0
  %v6470 = vmax.f32 %v6360, 0.0
  %v6471 = vmax.f32 %v6363, 0.0
  %v6472 = vmax.f32 %v6368, 0.0
  %v6473 = vmax.f32 %v6371, 0.0
  %v6474 = vmax.f32 %v6376, 0.0
  %v6475 = vmax.f32 %v6379, 0.0
  %v6476 = vmax.f32 %v6384, 0.0
  %v6477 = vmax.f32 %v6387, 0.0
  %v6478 = vmax.f32 %v6392, 0.0
  %v6479 = vmax.f32 %v6395, 0.0
  %v6480 = vmax.f32 %v6400, 0.0
  %v6481 = vmax.f32 %v6403, 0.0
  %v6482 = vmax.f32 %v6408, 0.0
  %v6483 = vmax.f32 %v6411, 0.0
  %v6484 = vmax.f32 %v6416, 0.0
  %v6485 = vmax.f32 %v6419, 0.0
  %v6486 = vld [vmem:[%s9] sm:$0xff]
  %v6487 = vld [vmem:[%s9 + $0x8] sm:$0xff]
  %v6488 = vld [vmem:[%s9 + $0x10] sm:$0xff]
  %v6489 = vld [vmem:[%s9 + $0x18] sm:$0xff]
  %v6490 = vld [vmem:[%s9 + $0x20] sm:$0xff]
  %v6491 = vld [vmem:[%s9 + $0x28] sm:$0xff]
  %v6492 = vld [vmem:[%s9 + $0x30] sm:$0xff]
  %v6493 = vld [vmem:[%s9 + $0x38] sm:$0xff]
  %v6494 = vld [vmem:[%s9 + $0x40] sm:$0xff]
  %v6495 = vld [vmem:[%s9 + $0x48] sm:$0xff]
  %v6496 = vld [vmem:[%s9 + $0x50] sm:$0xff]
  %v6497 = vld [vmem:[%s9 + $0x58] sm:$0xff]
  %v6498 = vld [vmem:[%s9 + $0x60] sm:$0xff]
  %v6499 = vld [vmem:[%s9 + $0x68] sm:$0xff]
  %v6500 = vld [vmem:[%s9 + $0x70] sm:$0xff]
  %v6501 = vld [vmem:[%s9 + $0x78] sm:$0xff]
  %v6502 = vld [vmem:[%s9 + $0x80] sm:$0xff]
  %v6503 = vld [vmem:[%s9 + $0x88] sm:$0xff]
  %v6504 = vld [vmem:[%s9 + $0x90] sm:$0xff]
  %v6505 = vld [vmem:[%s9 + $0x98] sm:$0xff]
  %v6506 = vld [vmem:[%s9 + $0xa0] sm:$0xff]
  %v6507 = vld [vmem:[%s9 + $0xa8] sm:$0xff]
  %v6508 = vld [vmem:[%s9 + $0xb0] sm:$0xff]
  %v6509 = vld [vmem:[%s9 + $0xb8] sm:$0xff]
  %v6510 = vld [vmem:[%s9 + $0xc0] sm:$0xff]
  %v6511 = vld [vmem:[%s9 + $0xc8] sm:$0xff]
  %v6512 = vld [vmem:[%s9 + $0xd0] sm:$0xff]
  %v6513 = vld [vmem:[%s9 + $0xd8] sm:$0xff]
  %v6514 = vld [vmem:[%s9 + $0xe0] sm:$0xff]
  %v6515 = vld [vmem:[%s9 + $0xe8] sm:$0xff]
  %v6516 = vld [vmem:[%s9 + $0xf0] sm:$0xff]
  %v6517 = vld [vmem:[%s9 + $0xf8] sm:$0xff]
  %v6518 = vld [vmem:[%s9 + $0x100] sm:$0xff]
  %v6519 = vld [vmem:[%s9 + $0x108] sm:$0xff]
  %v6520 = vld [vmem:[%s9 + $0x110] sm:$0xff]
  %v6521 = vld [vmem:[%s9 + $0x118] sm:$0xff]
  %v6522 = vld [vmem:[%s9 + $0x120] sm:$0xff]
  %v6523 = vld [vmem:[%s9 + $0x128] sm:$0xff]
  %v6524 = vld [vmem:[%s9 + $0x130] sm:$0xff]
  %v6525 = vld [vmem:[%s9 + $0x138] sm:$0xff]
  %v6526 = vld [vmem:[%s9 + $0x140] sm:$0xff]
  %v6527 = vld [vmem:[%s9 + $0x148] sm:$0xff]
  %v6528 = vld [vmem:[%s9 + $0x150] sm:$0xff]
  %v6529 = vld [vmem:[%s9 + $0x158] sm:$0xff]
  %v6530 = vld [vmem:[%s9 + $0x160] sm:$0xff]
  %v6531 = vld [vmem:[%s9 + $0x168] sm:$0xff]
  %v6532 = vld [vmem:[%s9 + $0x170] sm:$0xff]
  %v6533 = vld [vmem:[%s9 + $0x178] sm:$0xff]
  %v6534 = vld [vmem:[%s9 + $0x180] sm:$0xff]
  %v6535 = vld [vmem:[%s9 + $0x188] sm:$0xff]
  %v6536 = vld [vmem:[%s9 + $0x190] sm:$0xff]
  %v6537 = vld [vmem:[%s9 + $0x198] sm:$0xff]
  %v6538 = vld [vmem:[%s9 + $0x1a0] sm:$0xff]
  %v6539 = vld [vmem:[%s9 + $0x1a8] sm:$0xff]
  %v6540 = vld [vmem:[%s9 + $0x1b0] sm:$0xff]
  %v6541 = vld [vmem:[%s9 + $0x1b8] sm:$0xff]
  %v6542 = vld [vmem:[%s9 + $0x1c0] sm:$0xff]
  %v6543 = vld [vmem:[%s9 + $0x1c8] sm:$0xff]
  %v6544 = vld [vmem:[%s9 + $0x1d0] sm:$0xff]
  %v6545 = vld [vmem:[%s9 + $0x1d8] sm:$0xff]
  %v6546 = vld [vmem:[%s9 + $0x1e0] sm:$0xff]
  %v6547 = vld [vmem:[%s9 + $0x1e8] sm:$0xff]
  %v6548 = vld [vmem:[%s9 + $0x1f0] sm:$0xff]
  %v6549 = vld [vmem:[%s9 + $0x1f8] sm:$0xff]
  %6551 = vset.pattern.permute.xlu0 0
  %6552 = vperm.xlu0 %6551, %v6486
  %v6553 = vpop.permute.xlu0 %6552
  %6556 = vset.pattern.permute.xlu0 0
  %6557 = vperm.xlu0 %6556, %v6487
  %v6558 = vpop.permute.xlu0 %6557
  %6561 = vset.pattern.permute.xlu0 0
  %6562 = vperm.xlu0 %6561, %v6488
  %v6563 = vpop.permute.xlu0 %6562
  %6566 = vset.pattern.permute.xlu0 0
  %6567 = vperm.xlu0 %6566, %v6489
  %v6568 = vpop.permute.xlu0 %6567
  %6571 = vset.pattern.permute.xlu0 0
  %6572 = vperm.xlu0 %6571, %v6490
  %v6573 = vpop.permute.xlu0 %6572
  %6576 = vset.pattern.permute.xlu0 0
  %6577 = vperm.xlu0 %6576, %v6491
  %v6578 = vpop.permute.xlu0 %6577
  %6581 = vset.pattern.permute.xlu0 0
  %6582 = vperm.xlu0 %6581, %v6492
  %v6583 = vpop.permute.xlu0 %6582
  %6586 = vset.pattern.permute.xlu0 0
  %6587 = vperm.xlu0 %6586, %v6493
  %v6588 = vpop.permute.xlu0 %6587
  %6591 = vset.pattern.permute.xlu0 0
  %6592 = vperm.xlu0 %6591, %v6494
  %v6593 = vpop.permute.xlu0 %6592
  %6596 = vset.pattern.permute.xlu0 0
  %6597 = vperm.xlu0 %6596, %v6495
  %v6598 = vpop.permute.xlu0 %6597
  %6601 = vset.pattern.permute.xlu0 0
  %6602 = vperm.xlu0 %6601, %v6496
  %v6603 = vpop.permute.xlu0 %6602
  %6606 = vset.pattern.permute.xlu0 0
  %6607 = vperm.xlu0 %6606, %v6497
  %v6608 = vpop.permute.xlu0 %6607
  %6611 = vset.pattern.permute.xlu0 0
  %6612 = vperm.xlu0 %6611, %v6498
  %v6613 = vpop.permute.xlu0 %6612
  %6616 = vset.pattern.permute.xlu0 0
  %6617 = vperm.xlu0 %6616, %v6499
  %v6618 = vpop.permute.xlu0 %6617
  %6621 = vset.pattern.permute.xlu0 0
  %6622 = vperm.xlu0 %6621, %v6500
  %v6623 = vpop.permute.xlu0 %6622
  %6626 = vset.pattern.permute.xlu0 0
  %6627 = vperm.xlu0 %6626, %v6501
  %v6628 = vpop.permute.xlu0 %6627
  %6631 = vset.pattern.permute.xlu0 0
  %6632 = vperm.xlu0 %6631, %v6502
  %v6633 = vpop.permute.xlu0 %6632
  %6636 = vset.pattern.permute.xlu0 0
  %6637 = vperm.xlu0 %6636, %v6503
  %v6638 = vpop.permute.xlu0 %6637
  %6641 = vset.pattern.permute.xlu0 0
  %6642 = vperm.xlu0 %6641, %v6504
  %v6643 = vpop.permute.xlu0 %6642
  %6646 = vset.pattern.permute.xlu0 0
  %6647 = vperm.xlu0 %6646, %v6505
  %v6648 = vpop.permute.xlu0 %6647
  %6651 = vset.pattern.permute.xlu0 0
  %6652 = vperm.xlu0 %6651, %v6506
  %v6653 = vpop.permute.xlu0 %6652
  %6656 = vset.pattern.permute.xlu0 0
  %6657 = vperm.xlu0 %6656, %v6507
  %v6658 = vpop.permute.xlu0 %6657
  %6661 = vset.pattern.permute.xlu0 0
  %6662 = vperm.xlu0 %6661, %v6508
  %v6663 = vpop.permute.xlu0 %6662
  %6666 = vset.pattern.permute.xlu0 0
  %6667 = vperm.xlu0 %6666, %v6509
  %v6668 = vpop.permute.xlu0 %6667
  %6671 = vset.pattern.permute.xlu0 0
  %6672 = vperm.xlu0 %6671, %v6510
  %v6673 = vpop.permute.xlu0 %6672
  %6676 = vset.pattern.permute.xlu0 0
  %6677 = vperm.xlu0 %6676, %v6511
  %v6678 = vpop.permute.xlu0 %6677
  %6681 = vset.pattern.permute.xlu0 0
  %6682 = vperm.xlu0 %6681, %v6512
  %v6683 = vpop.permute.xlu0 %6682
  %6686 = vset.pattern.permute.xlu0 0
  %6687 = vperm.xlu0 %6686, %v6513
  %v6688 = vpop.permute.xlu0 %6687
  %6691 = vset.pattern.permute.xlu0 0
  %6692 = vperm.xlu0 %6691, %v6514
  %v6693 = vpop.permute.xlu0 %6692
  %6696 = vset.pattern.permute.xlu0 0
  %6697 = vperm.xlu0 %6696, %v6515
  %v6698 = vpop.permute.xlu0 %6697
  %6701 = vset.pattern.permute.xlu0 0
  %6702 = vperm.xlu0 %6701, %v6516
  %v6703 = vpop.permute.xlu0 %6702
  %6706 = vset.pattern.permute.xlu0 0
  %6707 = vperm.xlu0 %6706, %v6517
  %v6708 = vpop.permute.xlu0 %6707
  %6711 = vset.pattern.permute.xlu0 0
  %6712 = vperm.xlu0 %6711, %v6518
  %v6713 = vpop.permute.xlu0 %6712
  %6716 = vset.pattern.permute.xlu0 0
  %6717 = vperm.xlu0 %6716, %v6519
  %v6718 = vpop.permute.xlu0 %6717
  %6721 = vset.pattern.permute.xlu0 0
  %6722 = vperm.xlu0 %6721, %v6520
  %v6723 = vpop.permute.xlu0 %6722
  %6726 = vset.pattern.permute.xlu0 0
  %6727 = vperm.xlu0 %6726, %v6521
  %v6728 = vpop.permute.xlu0 %6727
  %6731 = vset.pattern.permute.xlu0 0
  %6732 = vperm.xlu0 %6731, %v6522
  %v6733 = vpop.permute.xlu0 %6732
  %6736 = vset.pattern.permute.xlu0 0
  %6737 = vperm.xlu0 %6736, %v6523
  %v6738 = vpop.permute.xlu0 %6737
  %6741 = vset.pattern.permute.xlu0 0
  %6742 = vperm.xlu0 %6741, %v6524
  %v6743 = vpop.permute.xlu0 %6742
  %6746 = vset.pattern.permute.xlu0 0
  %6747 = vperm.xlu0 %6746, %v6525
  %v6748 = vpop.permute.xlu0 %6747
  %6751 = vset.pattern.permute.xlu0 0
  %6752 = vperm.xlu0 %6751, %v6526
  %v6753 = vpop.permute.xlu0 %6752
  %6756 = vset.pattern.permute.xlu0 0
  %6757 = vperm.xlu0 %6756, %v6527
  %v6758 = vpop.permute.xlu0 %6757
  %6761 = vset.pattern.permute.xlu0 0
  %6762 = vperm.xlu0 %6761, %v6528
  %v6763 = vpop.permute.xlu0 %6762
  %6766 = vset.pattern.permute.xlu0 0
  %6767 = vperm.xlu0 %6766, %v6529
  %v6768 = vpop.permute.xlu0 %6767
  %6771 = vset.pattern.permute.xlu0 0
  %6772 = vperm.xlu0 %6771, %v6530
  %v6773 = vpop.permute.xlu0 %6772
  %6776 = vset.pattern.permute.xlu0 0
  %6777 = vperm.xlu0 %6776, %v6531
  %v6778 = vpop.permute.xlu0 %6777
  %6781 = vset.pattern.permute.xlu0 0
  %6782 = vperm.xlu0 %6781, %v6532
  %v6783 = vpop.permute.xlu0 %6782
  %6786 = vset.pattern.permute.xlu0 0
  %6787 = vperm.xlu0 %6786, %v6533
  %v6788 = vpop.permute.xlu0 %6787
  %6791 = vset.pattern.permute.xlu0 0
  %6792 = vperm.xlu0 %6791, %v6534
  %v6793 = vpop.permute.xlu0 %6792
  %6796 = vset.pattern.permute.xlu0 0
  %6797 = vperm.xlu0 %6796, %v6535
  %v6798 = vpop.permute.xlu0 %6797
  %6801 = vset.pattern.permute.xlu0 0
  %6802 = vperm.xlu0 %6801, %v6536
  %v6803 = vpop.permute.xlu0 %6802
  %6806 = vset.pattern.permute.xlu0 0
  %6807 = vperm.xlu0 %6806, %v6537
  %v6808 = vpop.permute.xlu0 %6807
  %6811 = vset.pattern.permute.xlu0 0
  %6812 = vperm.xlu0 %6811, %v6538
  %v6813 = vpop.permute.xlu0 %6812
  %6816 = vset.pattern.permute.xlu0 0
  %6817 = vperm.xlu0 %6816, %v6539
  %v6818 = vpop.permute.xlu0 %6817
  %6821 = vset.pattern.permute.xlu0 0
  %6822 = vperm.xlu0 %6821, %v6540
  %v6823 = vpop.permute.xlu0 %6822
  %6826 = vset.pattern.permute.xlu0 0
  %6827 = vperm.xlu0 %6826, %v6541
  %v6828 = vpop.permute.xlu0 %6827
  %6831 = vset.pattern.permute.xlu0 0
  %6832 = vperm.xlu0 %6831, %v6542
  %v6833 = vpop.permute.xlu0 %6832
  %6836 = vset.pattern.permute.xlu0 0
  %6837 = vperm.xlu0 %6836, %v6543
  %v6838 = vpop.permute.xlu0 %6837
  %6841 = vset.pattern.permute.xlu0 0
  %6842 = vperm.xlu0 %6841, %v6544
  %v6843 = vpop.permute.xlu0 %6842
  %6846 = vset.pattern.permute.xlu0 0
  %6847 = vperm.xlu0 %6846, %v6545
  %v6848 = vpop.permute.xlu0 %6847
  %6851 = vset.pattern.permute.xlu0 0
  %6852 = vperm.xlu0 %6851, %v6546
  %v6853 = vpop.permute.xlu0 %6852
  %6856 = vset.pattern.permute.xlu0 0
  %6857 = vperm.xlu0 %6856, %v6547
  %v6858 = vpop.permute.xlu0 %6857
  %6861 = vset.pattern.permute.xlu0 0
  %6862 = vperm.xlu0 %6861, %v6548
  %v6863 = vpop.permute.xlu0 %6862
  %6866 = vset.pattern.permute.xlu0 0
  %6867 = vperm.xlu0 %6866, %v6549
  %v6868 = vpop.permute.xlu0 %6867
  %v6870 = vmul.f32 %v6422, %v6553
  %v6871 = vmul.f32 %v6423, %v6558
  %v6872 = vmul.f32 %v6424, %v6563
  %v6873 = vmul.f32 %v6425, %v6568
  %v6874 = vmul.f32 %v6426, %v6573
  %v6875 = vmul.f32 %v6427, %v6578
  %v6876 = vmul.f32 %v6428, %v6583
  %v6877 = vmul.f32 %v6429, %v6588
  %v6878 = vmul.f32 %v6430, %v6593
  %v6879 = vmul.f32 %v6431, %v6598
  %v6880 = vmul.f32 %v6432, %v6603
  %v6881 = vmul.f32 %v6433, %v6608
  %v6882 = vmul.f32 %v6434, %v6613
  %v6883 = vmul.f32 %v6435, %v6618
  %v6884 = vmul.f32 %v6436, %v6623
  %v6885 = vmul.f32 %v6437, %v6628
  %v6886 = vmul.f32 %v6438, %v6633
  %v6887 = vmul.f32 %v6439, %v6638
  %v6888 = vmul.f32 %v6440, %v6643
  %v6889 = vmul.f32 %v6441, %v6648
  %v6890 = vmul.f32 %v6442, %v6653
  %v6891 = vmul.f32 %v6443, %v6658
  %v6892 = vmul.f32 %v6444, %v6663
  %v6893 = vmul.f32 %v6445, %v6668
  %v6894 = vmul.f32 %v6446, %v6673
  %v6895 = vmul.f32 %v6447, %v6678
  %v6896 = vmul.f32 %v6448, %v6683
  %v6897 = vmul.f32 %v6449, %v6688
  %v6898 = vmul.f32 %v6450, %v6693
  %v6899 = vmul.f32 %v6451, %v6698
  %v6900 = vmul.f32 %v6452, %v6703
  %v6901 = vmul.f32 %v6453, %v6708
  %v6902 = vmul.f32 %v6454, %v6713
  %v6903 = vmul.f32 %v6455, %v6718
  %v6904 = vmul.f32 %v6456, %v6723
  %v6905 = vmul.f32 %v6457, %v6728
  %v6906 = vmul.f32 %v6458, %v6733
  %v6907 = vmul.f32 %v6459, %v6738
  %v6908 = vmul.f32 %v6460, %v6743
  %v6909 = vmul.f32 %v6461, %v6748
  %v6910 = vmul.f32 %v6462, %v6753
  %v6911 = vmul.f32 %v6463, %v6758
  %v6912 = vmul.f32 %v6464, %v6763
  %v6913 = vmul.f32 %v6465, %v6768
  %v6914 = vmul.f32 %v6466, %v6773
  %v6915 = vmul.f32 %v6467, %v6778
  %v6916 = vmul.f32 %v6468, %v6783
  %v6917 = vmul.f32 %v6469, %v6788
  %v6918 = vmul.f32 %v6470, %v6793
  %v6919 = vmul.f32 %v6471, %v6798
  %v6920 = vmul.f32 %v6472, %v6803
  %v6921 = vmul.f32 %v6473, %v6808
  %v6922 = vmul.f32 %v6474, %v6813
  %v6923 = vmul.f32 %v6475, %v6818
  %v6924 = vmul.f32 %v6476, %v6823
  %v6925 = vmul.f32 %v6477, %v6828
  %v6926 = vmul.f32 %v6478, %v6833
  %v6927 = vmul.f32 %v6479, %v6838
  %v6928 = vmul.f32 %v6480, %v6843
  %v6929 = vmul.f32 %v6481, %v6848
  %v6930 = vmul.f32 %v6482, %v6853
  %v6931 = vmul.f32 %v6483, %v6858
  %v6932 = vmul.f32 %v6484, %v6863
  %v6933 = vmul.f32 %v6485, %v6868
  %v6934 = vadd.f32 %v6870, %v6871
  %v6935 = vadd.f32 %v6934, %v6872
  %v6936 = vadd.f32 %v6935, %v6873
  %v6937 = vadd.f32 %v6936, %v6874
  %v6938 = vadd.f32 %v6937, %v6875
  %v6939 = vadd.f32 %v6938, %v6876
  %v6940 = vadd.f32 %v6939, %v6877
  %v6941 = vadd.f32 %v6940, %v6878
  %v6942 = vadd.f32 %v6941, %v6879
  %v6943 = vadd.f32 %v6942, %v6880
  %v6944 = vadd.f32 %v6943, %v6881
  %v6945 = vadd.f32 %v6944, %v6882
  %v6946 = vadd.f32 %v6945, %v6883
  %v6947 = vadd.f32 %v6946, %v6884
  %v6948 = vadd.f32 %v6947, %v6885
  %v6949 = vadd.f32 %v6948, %v6886
  %v6950 = vadd.f32 %v6949, %v6887
  %v6951 = vadd.f32 %v6950, %v6888
  %v6952 = vadd.f32 %v6951, %v6889
  %v6953 = vadd.f32 %v6952, %v6890
  %v6954 = vadd.f32 %v6953, %v6891
  %v6955 = vadd.f32 %v6954, %v6892
  %v6956 = vadd.f32 %v6955, %v6893
  %v6957 = vadd.f32 %v6956, %v6894
  %v6958 = vadd.f32 %v6957, %v6895
  %v6959 = vadd.f32 %v6958, %v6896
  %v6960 = vadd.f32 %v6959, %v6897
  %v6961 = vadd.f32 %v6960, %v6898
  %v6962 = vadd.f32 %v6961, %v6899
  %v6963 = vadd.f32 %v6962, %v6900
  %v6964 = vadd.f32 %v6963, %v6901
  %v6965 = vadd.f32 %v6964, %v6902
  %v6966 = vadd.f32 %v6965, %v6903
  %v6967 = vadd.f32 %v6966, %v6904
  %v6968 = vadd.f32 %v6967, %v6905
  %v6969 = vadd.f32 %v6968, %v6906
  %v6970 = vadd.f32 %v6969, %v6907
  %v6971 = vadd.f32 %v6970, %v6908
  %v6972 = vadd.f32 %v6971, %v6909
  %v6973 = vadd.f32 %v6972, %v6910
  %v6974 = vadd.f32 %v6973, %v6911
  %v6975 = vadd.f32 %v6974, %v6912
  %v6976 = vadd.f32 %v6975, %v6913
  %v6977 = vadd.f32 %v6976, %v6914
  %v6978 = vadd.f32 %v6977, %v6915
  %v6979 = vadd.f32 %v6978, %v6916
  %v6980 = vadd.f32 %v6979, %v6917
  %v6981 = vadd.f32 %v6980, %v6918
  %v6982 = vadd.f32 %v6981, %v6919
  %v6983 = vadd.f32 %v6982, %v6920
  %v6984 = vadd.f32 %v6983, %v6921
  %v6985 = vadd.f32 %v6984, %v6922
  %v6986 = vadd.f32 %v6985, %v6923
  %v6987 = vadd.f32 %v6986, %v6924
  %v6988 = vadd.f32 %v6987, %v6925
  %v6989 = vadd.f32 %v6988, %v6926
  %v6990 = vadd.f32 %v6989, %v6927
  %v6991 = vadd.f32 %v6990, %v6928
  %v6992 = vadd.f32 %v6991, %v6929
  %v6993 = vadd.f32 %v6992, %v6930
  %v6994 = vadd.f32 %v6993, %v6931
  %v6995 = vadd.f32 %v6994, %v6932
  %v6996 = vadd.f32 %v6995, %v6933
  %v6997 = vrot.slane %v6996, 4
  %v6998 = vadd.f32 %v6996, %v6997
  %v6999 = vrot.slane %v6998, 2
  %v7000 = vadd.f32 %v6998, %v6999
  %v7001 = vrot.slane %v7000, 1
  %v7002 = vadd.f32 %v7000, %v7001
  %v7003 = vld [vmem:[#allocation2] sm:$0x1]
  %7005 = vset.pattern.permute.xlu0 0
  %7006 = vperm.xlu0 %7005, %v7003
  %v7007 = vpop.permute.xlu0 %7006
  %v7009 = vlaneseq
  %v7010 = vshrl.u32 %v7009, 7
  %v7011 = vsub.s32 0, %v7010
  %v7012 = vrot.slane %v7007, %v7011
  %v7013 = vadd.f32 %v7002, %v7012
  %v7014 = vxor.u32 %v7013, 2147483648
  %v7015 = vmul.f32 %v7014, 1.442695
  %v7016 = vpow.pop %v7015
  %v7017 = vadd.f32 %v7016, 1.0
  %v7018 = vrcp.pop %v7017
  %v7019 = vmul.f32 1.0, %v7018
  %7020 = vst [vmem:[%s11] sm:$0x1] %v7019
  // Predicated region
  $region46: #{_discriminator_pallas.3} parent=0 // pred_check
    _
  $region47: #{_discriminator_pallas.3} parent=0 // pred_check_branch
    %7022 = sbr.rel (0) target = $region49
  $region48: #{_discriminator_pallas.3} parent=0 // pred_region
    _
  $region49: #{_discriminator_pallas.3} parent=0 // pred_fallthru
    _
  // Predicated region
  $region50: #{_discriminator_pallas.3} parent=0 // pred_check
    _
  $region51: #{_discriminator_pallas.3} parent=0 // pred_check_branch
    %7024 = sbr.rel (0) target = $region53
  $region52: #{_discriminator_pallas.3} parent=0 // pred_region
    _
  $region53: #{_discriminator_pallas.3} parent=0 // pred_fallthru
    _

</llo_original>
